<compile_context>
chip_gen: v7x
topology: tpu7x:2x2x1
jax: 0.10.0
libtpu: 0.0.40
codegen_flags: <defaults>
</compile_context>

<pallas_src>
import functools

import jax
import jax.numpy as jnp
import numpy as np
from jax.experimental import pallas as pl
from jax.experimental.pallas import tpu as pltpu

# Scoped-VMEM request: big enough for 256+-row tiles on v5e/v6e (whose default
# scoped limits are 16/32 MiB) while leaving headroom under v7x's 64 MiB.
_VMEM_LIMIT = 48 * 1024 * 1024


def _pick_tile(n, target):
    """Largest tile <= target dividing n (multiple of 16 preferred, then 8)."""
    if n <= target:
        return n
    for step in (16, 8):
        t = (min(target, n) // step) * step
        while t >= step:
            if n % t == 0:
                return t
            t -= step
    return n


# ---------------------------------------------------------------------------
# Kernel 1: negated pairwise squared distances, row-tiled, pure VPU.
#   -d = 2 * pi.pj - ||pi||^2 - ||pj||^2   (clamped so -d <= 0)
# ---------------------------------------------------------------------------
def _neg_dist_kernel(pos_t_ref, post_ref, cn_ref, nd_ref):
    pt = pos_t_ref[0]                                   # (TN, 3) row tile
    pT = post_ref[0]                                    # (3, N)  pretransposed
    cn = cn_ref[0]                                      # (1, N)  col norms
    rn = jnp.sum(pt * pt, axis=1, keepdims=True)        # (TN, 1) row norms
    # 3-wide contraction as 3 lane-dense VPU FMAs (no wasted MXU pass).
    cross = (pt[:, 0:1] * pT[0:1, :]
             + pt[:, 1:2] * pT[1:2, :]
             + pt[:, 2:3] * pT[2:3, :])                 # (TN, N)
    # min(.,0) == -max(d,0): clamp catastrophic-cancellation negatives.
    nd_ref[0] = jnp.minimum(2.0 * cross - rn - cn, 0.0)


def neg_square_distance(pos, *, tile=None):
    B, N, _ = pos.shape
    # 256-row default: ~85% of HBM roofline on v6e while still fitting v7x;
    # bump toward 512 on v5e/v6e if N is large.
    tn = _pick_tile(N, 256) if tile is None else tile
    assert N % tn == 0
    pos_T = jnp.transpose(pos, (0, 2, 1))                # (B, 3, N)
    col_norm = jnp.sum(pos * pos, axis=-1)[:, None, :]   # (B, 1, N)
    return pl.pallas_call(
        _neg_dist_kernel,
        out_shape=jax.ShapeDtypeStruct((B, N, N), jnp.float32),
        grid=(B, N // tn),
        in_specs=[
            pl.BlockSpec((1, tn, 3), lambda b, i: (b, i, 0)),
            pl.BlockSpec((1, 3, N), lambda b, i: (b, 0, 0)),
            pl.BlockSpec((1, 1, N), lambda b, i: (b, 0, 0)),
        ],
        out_specs=pl.BlockSpec((1, tn, N), lambda b, i: (b, i, 0)),
        compiler_params=pltpu.CompilerParams(
            dimension_semantics=("parallel", "parallel"),
            vmem_limit_bytes=_VMEM_LIMIT),
    )(pos, pos_T, col_norm)


# ---------------------------------------------------------------------------
# Kernel 2: packed projection.  xp = [x | pos]  ->  q, [k | v | pos@Wd1] (bf16).
# ---------------------------------------------------------------------------
def _proj_kernel(xp_ref, wq_ref, bq_ref, wk_ref, bk_ref, q_ref, kvp_ref):
    xp = xp_ref[0].astype(jnp.bfloat16)                  # (TN, Cin+3)
    q = (jnp.dot(xp, wq_ref[...].astype(jnp.bfloat16),
                 preferred_element_type=jnp.float32) + bq_ref[...])
    kvp = (jnp.dot(xp, wk_ref[...].astype(jnp.bfloat16),
                   preferred_element_type=jnp.float32) + bk_ref[...])
    q_ref[0] = q.astype(jnp.bfloat16)
    kvp_ref[0] = kvp.astype(jnp.bfloat16)


def proj_qkvp(xp, w_q, b_q, w_kvp, b_kvp, *, tile=None):
    B, N, C = xp.shape
    D = w_q.shape[1]
    W = w_kvp.shape[1]
    tn = _pick_tile(N, 256) if tile is None else tile
    assert N % tn == 0
    return pl.pallas_call(
        _proj_kernel,
        out_shape=(jax.ShapeDtypeStruct((B, N, D), jnp.bfloat16),
                   jax.ShapeDtypeStruct((B, N, W), jnp.bfloat16)),
        grid=(B, N // tn),
        in_specs=[
            pl.BlockSpec((1, tn, C), lambda b, i: (b, i, 0)),
            pl.BlockSpec((C, D), lambda b, i: (0, 0)),
            pl.BlockSpec((1, D), lambda b, i: (0, 0)),
            pl.BlockSpec((C, W), lambda b, i: (0, 0)),
            pl.BlockSpec((1, W), lambda b, i: (0, 0)),
        ],
        out_specs=(pl.BlockSpec((1, tn, D), lambda b, i: (b, i, 0)),
                   pl.BlockSpec((1, tn, W), lambda b, i: (b, i, 0))),
        compiler_params=pltpu.CompilerParams(
            dimension_semantics=("parallel", "parallel"),
            vmem_limit_bytes=_VMEM_LIMIT),
    )(xp, w_q, b_q, w_kvp, b_kvp)


# ---------------------------------------------------------------------------
# Kernel 3: chunked neighbor gather + point-transformer attention + fc2 + res.
# ---------------------------------------------------------------------------
def _attn_kernel(q_ref, kvp_ref, pos_t_ref, idx_ref, x_ref,
                 wd1_ref, bd1_ref, wd2_ref, bd2_ref,
                 wg1_ref, bg1_ref, wg2_ref, bg2_ref,
                 wf2_ref, bf2_ref,
                 res_ref, *attn_refs, chunk, attn_dtype):
    f32, bf16 = jnp.float32, jnp.bfloat16
    _, TN, D = q_ref.shape
    N = kvp_ref.shape[1]
    KVW = kvp_ref.shape[2]                               # 3*D: [k | v | pos@Wd1]
    K = idx_ref.shape[2]
    nch = N // chunk

    q = q_ref[0].astype(f32)                             # (TN, D)
    pos_t = pos_t_ref[0]                                 # (TN, 3)
    idx = idx_ref[0]                                     # (TN, K) int32
    x = x_ref[0]                                         # (TN, Cin)

    # fc_delta layer 1, query side: 3-wide contraction as 3 f32 VPU FMAs.
    wd1 = wd1_ref[...]                                   # (3, D)
    pproj_t = (pos_t[:, 0:1] * wd1[0:1, :]
               + pos_t[:, 1:2] * wd1[1:2, :]
               + pos_t[:, 2:3] * wd1[2:3, :])            # (TN, D)

    # Chunked one-hot gather of [k | v | pos@Wd1]: one MXU pass per N-slab, so
    # iota/one-hot intermediates are (TN*K, chunk) -- bounded regardless of N.
    def gather_chunk(c, acc):
        off = c * chunk
        if not isinstance(off, int):
            off = pl.multiple_of(off, chunk)
        slab = kvp_ref[0, pl.ds(off, chunk), :]          # (chunk, 3D) bf16
        iota = jax.lax.broadcasted_iota(jnp.int32, (TN, K, chunk), 2)
        onehot = jnp.where(iota == (idx - off)[:, :, None], 1.0, 0.0)
        onehot = onehot.astype(bf16).reshape(TN * K, chunk)
        # Exactly one 1.0 per row + f32 accumulation => exact gather of the
        # bf16-stored values.
        return acc + jnp.dot(onehot, slab, preferred_element_type=f32)

    acc0 = jnp.zeros((TN * K, KVW), f32)
    if nch == 1:
        nbr = gather_chunk(0, acc0)
    else:
        nbr = jax.lax.fori_loop(0, nch, gather_chunk, acc0, unroll=nch <= 4)

    k_nbr = nbr[:, :D].reshape(TN, K, D)
    v_nbr = nbr[:, D:2 * D].reshape(TN, K, D)
    pp_nbr = nbr[:, 2 * D:3 * D].reshape(TN, K, D)

    # fc_delta: h1 = relu((pos_i - pos_j) @ Wd1 + bd1) computed from the two
    # pre-projected halves; then layer 2 on the MXU.
    h1 = jnp.maximum(pproj_t[:, None, :] - pp_nbr + bd1_ref[...], 0.0)
    pos_enc = (jnp.dot(h1.reshape(TN * K, D).astype(bf16),
                       wd2_ref[...].astype(bf16),
                       preferred_element_type=f32) + bd2_ref[...])   # (TN*K, D)
    pe3 = pos_enc.reshape(TN, K, D)

    # fc_gamma (the 1/sqrt(D) softmax scale is pre-folded into wg2/bg2).
    a = (q[:, None, :] - k_nbr + pe3).reshape(TN * K, D)
    g1 = jnp.maximum(jnp.dot(a.astype(bf16), wg1_ref[...].astype(bf16),
                             preferred_element_type=f32) + bg1_ref[...], 0.0)
    logits = (jnp.dot(g1.astype(bf16), wg2_ref[...].astype(bf16),
                      preferred_element_type=f32)
              + bg2_ref[...]).reshape(TN, K, D)

    # Softmax over neighbors, f32, EUP reciprocal.
    m = jnp.max(logits, axis=1, keepdims=True)
    e = jnp.exp(logits - m)
    s = jnp.sum(e, axis=1, keepdims=True)
    attn = e * pl.reciprocal(s, approx=True)                         # (TN, K, D)

    # res = sum_k attn * (v + pos_enc); fc2 + residual fused.
    res = jnp.sum(attn * (v_nbr + pe3), axis=1)                      # (TN, D)
    out = jnp.dot(res.astype(bf16), wf2_ref[...].astype(bf16),
                  preferred_element_type=f32) + bf2_ref[...]
    res_ref[0] = out + x

    if attn_refs:
        # Optional attention output, written into a lane-dense (TN, K*D) block
        # (K*D is a multiple of 128 here) so the HBM writeback DMA is dense;
        # stored in bf16 to halve the dominant kernel-3 HBM write.
        attn_ref = attn_refs[0]
        for kk in range(K):
            attn_ref[0, :, kk * D:(kk + 1) * D] = attn[:, kk, :].astype(attn_dtype)


def attn_block(q, kvp, pos, knn_idx, x,
               wd1, bd1, wd2, bd2, wg1, bg1, wg2s, bg2s, wf2, bf2,
               *, tile=None, chunk=None, return_attn=True,
               attn_dtype=jnp.bfloat16):
    B, N, D = q.shape
    KVW = kvp.shape[-1]
    K = knn_idx.shape[-1]
    Cin = x.shape[-1]
    tn = _pick_tile(N, 128) if tile is None else tile
    ch = _pick_tile(N, 512) if chunk is None else chunk
    assert N % tn == 0 and N % ch == 0

    kernel = functools.partial(_attn_kernel, chunk=ch, attn_dtype=attn_dtype)
    full2d = lambda shp: pl.BlockSpec(shp, lambda b, i: (0, 0))

    res_shape = jax.ShapeDtypeStruct((B, N, Cin), jnp.float32)
    res_spec = pl.BlockSpec((1, tn, Cin), lambda b, i: (b, i, 0))
    if return_attn:
        out_shape = (res_shape,
                     jax.ShapeDtypeStruct((B, N, K * D), attn_dtype))
        out_specs = (res_spec,
                     pl.BlockSpec((1, tn, K * D), lambda b, i: (b, i, 0)))
    else:
        out_shape = res_shape
        out_specs = res_spec

    return pl.pallas_call(
        kernel,
        out_shape=out_shape,
        grid=(B, N // tn),
        in_specs=[
            pl.BlockSpec((1, tn, D), lambda b, i: (b, i, 0)),     # q tile (bf16)
            pl.BlockSpec((1, N, KVW), lambda b, i: (b, 0, 0)),    # [k|v|pproj] full (bf16)
            pl.BlockSpec((1, tn, 3), lambda b, i: (b, i, 0)),     # pos tile
            pl.BlockSpec((1, tn, K), lambda b, i: (b, i, 0)),     # knn_idx tile
            pl.BlockSpec((1, tn, Cin), lambda b, i: (b, i, 0)),   # x (residual)
            full2d((3, D)), full2d((1, D)),                       # fc_delta L1
            full2d((D, D)), full2d((1, D)),                       # fc_delta L2
            full2d((D, D)), full2d((1, D)),                       # fc_gamma L1
            full2d((D, D)), full2d((1, D)),                       # fc_gamma L2 (scaled)
            full2d((D, Cin)), full2d((1, Cin)),                   # fc2
        ],
        out_specs=out_specs,
        compiler_params=pltpu.CompilerParams(
            dimension_semantics=("parallel", "parallel"),
            vmem_limit_bytes=_VMEM_LIMIT),
    )(q, kvp, pos, knn_idx, x,
      wd1, bd1, wd2, bd2, wg1, bg1, wg2s, bg2s, wf2, bf2)


# ---------------------------------------------------------------------------
# Module wrapper.
# ---------------------------------------------------------------------------
def point_transformer_block(x, pos, params, n_neighbors, *,
                            dist_tile=None, proj_tile=None, attn_tile=None,
                            gather_chunk=None, return_attn=True,
                            attn_dtype=jnp.bfloat16):
    B, N, Cin = x.shape
    D = params["Wq"].shape[1]
    K = n_neighbors

    # Kernel 1 + top_k selection (replaces the full N*N argsort).
    neg_d = neg_square_distance(pos, tile=dist_tile)                  # (B, N, N)
    # TODO(synk): a fused streaming top-K inside kernel 1 would avoid the N^2
    # HBM round trip entirely; the selection stays in XLA for now.
    _, knn_idx = jax.lax.top_k(neg_d, K)
    knn_idx = knn_idx.astype(jnp.int32)

    # Host-side folding: fc1 into q/k/v, fc_delta layer-1 packed next to k/v,
    # 1/sqrt(D) softmax scale into fc_gamma's output layer.
    W1, b1 = params["W1"], params["b1"]
    Wq_f, bq_f = W1 @ params["Wq"], b1 @ params["Wq"]
    Wk_f, bk_f = W1 @ params["Wk"], b1 @ params["Wk"]
    Wv_f, bv_f = W1 @ params["Wv"], b1 @ params["Wv"]
    zc = lambda r, c: jnp.zeros((r, c), jnp.float32)
    W_q_pack = jnp.concatenate([Wq_f, zc(3, D)], axis=0)              # (Cin+3, D)
    W_kvp_top = jnp.concatenate([Wk_f, Wv_f, zc(Cin, D)], axis=1)     # (Cin, 3D)
    W_kvp_bot = jnp.concatenate([zc(3, 2 * D), params["Wd1"]], axis=1)  # (3, 3D)
    W_kvp_pack = jnp.concatenate([W_kvp_top, W_kvp_bot], axis=0)      # (Cin+3, 3D)
    b_kvp_pack = jnp.concatenate([bk_f, bv_f, zc(1, D)], axis=1)      # (1, 3D)
    scale = 1.0 / np.sqrt(D)
    Wg2_s = params["Wg2"] * scale
    bg2_s = params["bg2"] * scale

    xp = jnp.concatenate([x, pos], axis=-1)                           # (B, N, Cin+3)
    q, kvp = proj_qkvp(xp, W_q_pack, bq_f, W_kvp_pack, b_kvp_pack,
                       tile=proj_tile)

    outs = attn_block(
        q, kvp, pos, knn_idx, x,
        params["Wd1"], params["bd1"], params["Wd2"], params["bd2"],
        params["Wg1"], params["bg1"], Wg2_s, bg2_s,
        params["Wf2"], params["bf2"],
        tile=attn_tile, chunk=gather_chunk,
        return_attn=return_attn, attn_dtype=attn_dtype)

    if return_attn:
        res, attn_flat = outs
        attn = attn_flat.reshape(B, N, K, D)
        return res, attn, knn_idx
    return outs, None, knn_idx


# ---------------------------------------------------------------------------
# Pure-JAX f32 reference (same knn_idx) for correctness checking.
# ---------------------------------------------------------------------------
def reference(x, pos, params, knn_idx):
    gather = jax.vmap(lambda pts, idx: pts[idx])
    knn_pos = gather(pos, knn_idx)
    h = x @ params["W1"] + params["b1"]
    q = h @ params["Wq"]
    k_nbr = gather(h @ params["Wk"], knn_idx)
    v_nbr = gather(h @ params["Wv"], knn_idx)
    rel = pos[:, :, None, :] - knn_pos
    pos_enc = (jnp.maximum(rel @ params["Wd1"] + params["bd1"], 0.0)
               @ params["Wd2"] + params["bd2"])
    a = q[:, :, None, :] - k_nbr + pos_enc
    gamma = (jnp.maximum(a @ params["Wg1"] + params["bg1"], 0.0)
             @ params["Wg2"] + params["bg2"])
    D = params["Wq"].shape[1]
    attn = jax.nn.softmax(gamma / np.sqrt(D), axis=-2)
    res = jnp.sum(attn * (v_nbr + pos_enc), axis=2)
    res = res @ params["Wf2"] + params["bf2"] + x
    return res, attn


# ---------------------------------------------------------------------------
# Deterministic parameter init (PyTorch nn.Linear default: U(+-1/sqrt(fan_in))).
# ---------------------------------------------------------------------------
def init_linear(key, fan_in, fan_out, bias=True):
    bound = 1.0 / np.sqrt(fan_in)
    kw, kb = jax.random.split(key)
    W = jax.random.uniform(kw, (fan_in, fan_out), jnp.float32, -bound, bound)
    if bias:
        b = jax.random.uniform(kb, (1, fan_out), jnp.float32, -bound, bound)
        return W, b
    return W, None


if __name__ == "__main__":
    B, N, Cin, D, K = 2, 16, 16, 32, 8   # input_dim=16, transformer_dim=32, K=8

    root = jax.random.PRNGKey(0)
    keys = jax.random.split(root, 12)

    x = jax.random.normal(keys[0], (B, N, Cin), jnp.float32)
    pos = jax.random.normal(keys[1], (B, N, 3), jnp.float32)

    params = {}
    params["W1"], params["b1"] = init_linear(keys[2], Cin, D)          # fc1
    params["Wq"], _ = init_linear(keys[3], D, D, bias=False)           # w_qs
    params["Wk"], _ = init_linear(keys[4], D, D, bias=False)           # w_ks
    params["Wv"], _ = init_linear(keys[5], D, D, bias=False)           # w_vs
    params["Wd1"], params["bd1"] = init_linear(keys[6], 3, D)          # fc_delta[0]
    params["Wd2"], params["bd2"] = init_linear(keys[7], D, D)          # fc_delta[2]
    params["Wg1"], params["bg1"] = init_linear(keys[8], D, D)          # fc_gamma[0]
    params["Wg2"], params["bg2"] = init_linear(keys[9], D, D)          # fc_gamma[2]
    params["Wf2"], params["bf2"] = init_linear(keys[10], D, Cin)       # fc2

    fwd = jax.jit(functools.partial(point_transformer_block, n_neighbors=K))
    res, attn, knn_idx = fwd(x, pos, params)
    res = jax.block_until_ready(res)
    attn = jax.block_until_ready(attn)

    res_ref, attn_ref = reference(x, pos, params, knn_idx)
    # bf16 MXU operands + bf16-stored q/kvp/attn (f32 accumulation everywhere)
    # -> looser tolerances against the pure-f32 reference.
    attn_f32 = np.asarray(attn.astype(jnp.float32))
    np.testing.assert_allclose(attn_f32, np.asarray(attn_ref),
                               rtol=4e-2, atol=2e-2)
    np.testing.assert_allclose(np.asarray(res), np.asarray(res_ref),
                               rtol=4e-2, atol=4e-2)

    assert res.shape == (B, N, Cin)
    assert attn.shape == (B, N, K, D)
    print("KERNEL_OK")
</pallas_src>

<mosaic_0001>
module attributes {stable_mosaic.version = 11 : i64} {
  func.func @_neg_dist_kernel(%arg0: i32, %arg1: i32, %arg2: memref<1x16x3xf32, #tpu.memory_space<vmem>>, %arg3: memref<1x3x16xf32, #tpu.memory_space<vmem>>, %arg4: memref<1x1x16xf32, #tpu.memory_space<vmem>>, %arg5: memref<1x16x16xf32, #tpu.memory_space<vmem>>) attributes {dimension_semantics = [#tpu.dimension_semantics<parallel>, #tpu.dimension_semantics<parallel>], iteration_bounds = array<i64: 2, 1>, scalar_prefetch = 0 : i64, scratch_operands = 0 : i64, tpu.core_type = #tpu.core_type<tc>, window_params = [{transform_indices = @transform_0, window_bounds = array<i64: 1, 16, 3>}, {transform_indices = @transform_1, window_bounds = array<i64: 1, 3, 16>}, {transform_indices = @transform_2, window_bounds = array<i64: 1, 1, 16>}, {transform_indices = @transform_3, window_bounds = array<i64: 1, 16, 16>}]} {
    %c0 = arith.constant 0 : index
    %c0_0 = arith.constant 0 : index
    %c0_1 = arith.constant 0 : index
    %0 = vector.load %arg2[%c0, %c0_0, %c0_1] : memref<1x16x3xf32, #tpu.memory_space<vmem>>, vector<1x16x3xf32>
    %1 = vector.shape_cast %0 : vector<1x16x3xf32> to vector<16x3xf32>
    %c0_2 = arith.constant 0 : index
    %c0_3 = arith.constant 0 : index
    %c0_4 = arith.constant 0 : index
    %2 = vector.load %arg3[%c0_2, %c0_3, %c0_4] : memref<1x3x16xf32, #tpu.memory_space<vmem>>, vector<1x3x16xf32>
    %3 = vector.shape_cast %2 : vector<1x3x16xf32> to vector<3x16xf32>
    %c0_5 = arith.constant 0 : index
    %c0_6 = arith.constant 0 : index
    %c0_7 = arith.constant 0 : index
    %4 = vector.load %arg4[%c0_5, %c0_6, %c0_7] : memref<1x1x16xf32, #tpu.memory_space<vmem>>, vector<1x1x16xf32>
    %5 = vector.shape_cast %4 : vector<1x1x16xf32> to vector<1x16xf32>
    %6 = arith.mulf %1, %1 : vector<16x3xf32>
    %cst = arith.constant dense<0.000000e+00> : vector<16xf32>
    %7 = vector.multi_reduction <add>, %6, %cst [1] : vector<16x3xf32> to vector<16xf32>
    %8 = vector.shape_cast %7 : vector<16xf32> to vector<16x1xf32>
    %9 = vector.extract_strided_slice %1 {offsets = [0, 0], sizes = [16, 1], strides = [1, 1]} : vector<16x3xf32> to vector<16x1xf32>
    %10 = vector.extract_strided_slice %3 {offsets = [0, 0], sizes = [1, 16], strides = [1, 1]} : vector<3x16xf32> to vector<1x16xf32>
    %11 = vector.broadcast %9 : vector<16x1xf32> to vector<16x16xf32>
    %12 = vector.broadcast %10 : vector<1x16xf32> to vector<16x16xf32>
    %13 = arith.mulf %11, %12 : vector<16x16xf32>
    %14 = vector.extract_strided_slice %1 {offsets = [0, 1], sizes = [16, 1], strides = [1, 1]} : vector<16x3xf32> to vector<16x1xf32>
    %15 = vector.extract_strided_slice %3 {offsets = [1, 0], sizes = [1, 16], strides = [1, 1]} : vector<3x16xf32> to vector<1x16xf32>
    %16 = vector.broadcast %14 : vector<16x1xf32> to vector<16x16xf32>
    %17 = vector.broadcast %15 : vector<1x16xf32> to vector<16x16xf32>
    %18 = arith.mulf %16, %17 : vector<16x16xf32>
    %19 = arith.addf %13, %18 : vector<16x16xf32>
    %20 = vector.extract_strided_slice %1 {offsets = [0, 2], sizes = [16, 1], strides = [1, 1]} : vector<16x3xf32> to vector<16x1xf32>
    %21 = vector.extract_strided_slice %3 {offsets = [2, 0], sizes = [1, 16], strides = [1, 1]} : vector<3x16xf32> to vector<1x16xf32>
    %22 = vector.broadcast %20 : vector<16x1xf32> to vector<16x16xf32>
    %23 = vector.broadcast %21 : vector<1x16xf32> to vector<16x16xf32>
    %24 = arith.mulf %22, %23 : vector<16x16xf32>
    %25 = arith.addf %19, %24 : vector<16x16xf32>
    %cst_8 = arith.constant 2.000000e+00 : f32
    %26 = vector.broadcast %cst_8 : f32 to vector<16x16xf32>
    %27 = arith.mulf %26, %25 : vector<16x16xf32>
    %28 = vector.broadcast %8 : vector<16x1xf32> to vector<16x16xf32>
    %29 = arith.subf %27, %28 : vector<16x16xf32>
    %30 = vector.broadcast %5 : vector<1x16xf32> to vector<16x16xf32>
    %31 = arith.subf %29, %30 : vector<16x16xf32>
    %cst_9 = arith.constant 0.000000e+00 : f32
    %32 = vector.broadcast %cst_9 : f32 to vector<16x16xf32>
    %33 = arith.minimumf %31, %32 : vector<16x16xf32>
    %c0_10 = arith.constant 0 : index
    %c0_11 = arith.constant 0 : index
    %c0_12 = arith.constant 0 : index
    %34 = vector.load %arg5[%c0_10, %c0_11, %c0_12] : memref<1x16x16xf32, #tpu.memory_space<vmem>>, vector<1x16x16xf32>
    %35 = vector.shape_cast %34 : vector<1x16x16xf32> to vector<16x16xf32>
    %36 = vector.shape_cast %33 : vector<16x16xf32> to vector<1x16x16xf32>
    tpu.vector_store %arg5[%c0_10, %c0_11, %c0_12], %36 {strides = array<i32>} : memref<1x16x16xf32, #tpu.memory_space<vmem>>, vector<1x16x16xf32>,
    return
  }
  func.func @transform_0(%arg0: i32, %arg1: i32) -> (i32, i32, i32) {
    %c0_i32 = arith.constant 0 : i32
    %c0_i32_0 = arith.constant 0 : i32
    return %arg0, %arg1, %c0_i32 : i32, i32, i32
  }
  func.func @transform_1(%arg0: i32, %arg1: i32) -> (i32, i32, i32) {
    %c0_i32 = arith.constant 0 : i32
    %c0_i32_0 = arith.constant 0 : i32
    %c0_i32_1 = arith.constant 0 : i32
    return %arg0, %c0_i32, %c0_i32_0 : i32, i32, i32
  }
  func.func @transform_2(%arg0: i32, %arg1: i32) -> (i32, i32, i32) {
    %c0_i32 = arith.constant 0 : i32
    %c0_i32_0 = arith.constant 0 : i32
    %c0_i32_1 = arith.constant 0 : i32
    return %arg0, %c0_i32, %c0_i32_0 : i32, i32, i32
  }
  func.func @transform_3(%arg0: i32, %arg1: i32) -> (i32, i32, i32) {
    %c0_i32 = arith.constant 0 : i32
    %c0_i32_0 = arith.constant 0 : i32
    return %arg0, %arg1, %c0_i32 : i32, i32, i32
  }
}

module attributes {stable_mosaic.version = 11 : i64} {
  func.func @_proj_kernel(%arg0: i32, %arg1: i32, %arg2: memref<1x16x19xf32, #tpu.memory_space<vmem>>, %arg3: memref<19x32xf32, #tpu.memory_space<vmem>>, %arg4: memref<1x32xf32, #tpu.memory_space<vmem>>, %arg5: memref<19x96xf32, #tpu.memory_space<vmem>>, %arg6: memref<1x96xf32, #tpu.memory_space<vmem>>, %arg7: memref<1x16x32xbf16, #tpu.memory_space<vmem>>, %arg8: memref<1x16x96xbf16, #tpu.memory_space<vmem>>) attributes {dimension_semantics = [#tpu.dimension_semantics<parallel>, #tpu.dimension_semantics<parallel>], iteration_bounds = array<i64: 2, 1>, scalar_prefetch = 0 : i64, scratch_operands = 0 : i64, tpu.core_type = #tpu.core_type<tc>, window_params = [{transform_indices = @transform_0, window_bounds = array<i64: 1, 16, 19>}, {pipeline_mode = #tpu.pipeline_mode<synchronous>, transform_indices = @transform_1, window_bounds = array<i64: 19, 32>}, {pipeline_mode = #tpu.pipeline_mode<synchronous>, transform_indices = @transform_2, window_bounds = array<i64: 1, 32>}, {pipeline_mode = #tpu.pipeline_mode<synchronous>, transform_indices = @transform_3, window_bounds = array<i64: 19, 96>}, {pipeline_mode = #tpu.pipeline_mode<synchronous>, transform_indices = @transform_4, window_bounds = array<i64: 1, 96>}, {transform_indices = @transform_5, window_bounds = array<i64: 1, 16, 32>}, {transform_indices = @transform_6, window_bounds = array<i64: 1, 16, 96>}]} {
    %c0 = arith.constant 0 : index
    %c0_0 = arith.constant 0 : index
    %c0_1 = arith.constant 0 : index
    %0 = vector.load %arg2[%c0, %c0_0, %c0_1] : memref<1x16x19xf32, #tpu.memory_space<vmem>>, vector<1x16x19xf32>
    %1 = vector.shape_cast %0 : vector<1x16x19xf32> to vector<16x19xf32>
    %2 = arith.truncf %1 : vector<16x19xf32> to vector<16x19xbf16>
    %c0_2 = arith.constant 0 : index
    %c0_3 = arith.constant 0 : index
    %3 = vector.load %arg3[%c0_2, %c0_3] : memref<19x32xf32, #tpu.memory_space<vmem>>, vector<19x32xf32>
    %4 = arith.truncf %3 : vector<19x32xf32> to vector<19x32xbf16>
    %cst = arith.constant dense<0.000000e+00> : vector<16x32xf32>
    %5 = tpu.matmul %2, %4, %cst {dimension_numbers = #tpu.dot_dimension_numbers<[1], [0], [0], [1], [0, 0, 1, 1], [], []>} : vector<16x19xbf16>, vector<19x32xbf16>, vector<16x32xf32> -> vector<16x32xf32>
    %c0_4 = arith.constant 0 : index
    %c0_5 = arith.constant 0 : index
    %6 = vector.load %arg4[%c0_4, %c0_5] : memref<1x32xf32, #tpu.memory_space<vmem>>, vector<1x32xf32>
    %7 = vector.broadcast %6 : vector<1x32xf32> to vector<16x32xf32>
    %8 = arith.addf %5, %7 : vector<16x32xf32>
    %c0_6 = arith.constant 0 : index
    %c0_7 = arith.constant 0 : index
    %9 = vector.load %arg5[%c0_6, %c0_7] : memref<19x96xf32, #tpu.memory_space<vmem>>, vector<19x96xf32>
    %10 = arith.truncf %9 : vector<19x96xf32> to vector<19x96xbf16>
    %cst_8 = arith.constant dense<0.000000e+00> : vector<16x96xf32>
    %11 = tpu.matmul %2, %10, %cst_8 {dimension_numbers = #tpu.dot_dimension_numbers<[1], [0], [0], [1], [0, 0, 1, 1], [], []>} : vector<16x19xbf16>, vector<19x96xbf16>, vector<16x96xf32> -> vector<16x96xf32>
    %c0_9 = arith.constant 0 : index
    %c0_10 = arith.constant 0 : index
    %12 = vector.load %arg6[%c0_9, %c0_10] : memref<1x96xf32, #tpu.memory_space<vmem>>, vector<1x96xf32>
    %13 = vector.broadcast %12 : vector<1x96xf32> to vector<16x96xf32>
    %14 = arith.addf %11, %13 : vector<16x96xf32>
    %15 = arith.truncf %8 : vector<16x32xf32> to vector<16x32xbf16>
    %c0_11 = arith.constant 0 : index
    %c0_12 = arith.constant 0 : index
    %c0_13 = arith.constant 0 : index
    %16 = vector.load %arg7[%c0_11, %c0_12, %c0_13] : memref<1x16x32xbf16, #tpu.memory_space<vmem>>, vector<1x16x32xbf16>
    %17 = vector.shape_cast %16 : vector<1x16x32xbf16> to vector<16x32xbf16>
    %18 = vector.shape_cast %15 : vector<16x32xbf16> to vector<1x16x32xbf16>
    tpu.vector_store %arg7[%c0_11, %c0_12, %c0_13], %18 {strides = array<i32>} : memref<1x16x32xbf16, #tpu.memory_space<vmem>>, vector<1x16x32xbf16>,
    %19 = arith.truncf %14 : vector<16x96xf32> to vector<16x96xbf16>
    %c0_14 = arith.constant 0 : index
    %c0_15 = arith.constant 0 : index
    %c0_16 = arith.constant 0 : index
    %20 = vector.load %arg8[%c0_14, %c0_15, %c0_16] : memref<1x16x96xbf16, #tpu.memory_space<vmem>>, vector<1x16x96xbf16>
    %21 = vector.shape_cast %20 : vector<1x16x96xbf16> to vector<16x96xbf16>
    %22 = vector.shape_cast %19 : vector<16x96xbf16> to vector<1x16x96xbf16>
    tpu.vector_store %arg8[%c0_14, %c0_15, %c0_16], %22 {strides = array<i32>} : memref<1x16x96xbf16, #tpu.memory_space<vmem>>, vector<1x16x96xbf16>,
    return
  }
  func.func @transform_0(%arg0: i32, %arg1: i32) -> (i32, i32, i32) {
    %c0_i32 = arith.constant 0 : i32
    %c0_i32_0 = arith.constant 0 : i32
    return %arg0, %arg1, %c0_i32 : i32, i32, i32
  }
  func.func @transform_1(%arg0: i32, %arg1: i32) -> (i32, i32) {
    %c0_i32 = arith.constant 0 : i32
    %c0_i32_0 = arith.constant 0 : i32
    %c0_i32_1 = arith.constant 0 : i32
    return %c0_i32, %c0_i32_0 : i32, i32
  }
  func.func @transform_2(%arg0: i32, %arg1: i32) -> (i32, i32) {
    %c0_i32 = arith.constant 0 : i32
    %c0_i32_0 = arith.constant 0 : i32
    %c0_i32_1 = arith.constant 0 : i32
    return %c0_i32, %c0_i32_0 : i32, i32
  }
  func.func @transform_3(%arg0: i32, %arg1: i32) -> (i32, i32) {
    %c0_i32 = arith.constant 0 : i32
    %c0_i32_0 = arith.constant 0 : i32
    %c0_i32_1 = arith.constant 0 : i32
    return %c0_i32, %c0_i32_0 : i32, i32
  }
  func.func @transform_4(%arg0: i32, %arg1: i32) -> (i32, i32) {
    %c0_i32 = arith.constant 0 : i32
    %c0_i32_0 = arith.constant 0 : i32
    %c0_i32_1 = arith.constant 0 : i32
    return %c0_i32, %c0_i32_0 : i32, i32
  }
  func.func @transform_5(%arg0: i32, %arg1: i32) -> (i32, i32, i32) {
    %c0_i32 = arith.constant 0 : i32
    %c0_i32_0 = arith.constant 0 : i32
    return %arg0, %arg1, %c0_i32 : i32, i32, i32
  }
  func.func @transform_6(%arg0: i32, %arg1: i32) -> (i32, i32, i32) {
    %c0_i32 = arith.constant 0 : i32
    %c0_i32_0 = arith.constant 0 : i32
    return %arg0, %arg1, %c0_i32 : i32, i32, i32
  }
}

module attributes {stable_mosaic.version = 11 : i64} {
  func.func @_attn_kernel(%arg0: i32, %arg1: i32, %arg2: memref<1x16x32xbf16, #tpu.memory_space<vmem>>, %arg3: memref<1x16x96xbf16, #tpu.memory_space<vmem>>, %arg4: memref<1x16x3xf32, #tpu.memory_space<vmem>>, %arg5: memref<1x16x8xi32, #tpu.memory_space<vmem>>, %arg6: memref<1x16x16xf32, #tpu.memory_space<vmem>>, %arg7: memref<3x32xf32, #tpu.memory_space<vmem>>, %arg8: memref<1x32xf32, #tpu.memory_space<vmem>>, %arg9: memref<32x32xf32, #tpu.memory_space<vmem>>, %arg10: memref<1x32xf32, #tpu.memory_space<vmem>>, %arg11: memref<32x32xf32, #tpu.memory_space<vmem>>, %arg12: memref<1x32xf32, #tpu.memory_space<vmem>>, %arg13: memref<32x32xf32, #tpu.memory_space<vmem>>, %arg14: memref<1x32xf32, #tpu.memory_space<vmem>>, %arg15: memref<32x16xf32, #tpu.memory_space<vmem>>, %arg16: memref<1x16xf32, #tpu.memory_space<vmem>>, %arg17: memref<1x16x16xf32, #tpu.memory_space<vmem>>, %arg18: memref<1x16x256xbf16, #tpu.memory_space<vmem>>) attributes {dimension_semantics = [#tpu.dimension_semantics<parallel>, #tpu.dimension_semantics<parallel>], iteration_bounds = array<i64: 2, 1>, scalar_prefetch = 0 : i64, scratch_operands = 0 : i64, tpu.core_type = #tpu.core_type<tc>, window_params = [{transform_indices = @transform_0, window_bounds = array<i64: 1, 16, 32>}, {transform_indices = @transform_1, window_bounds = array<i64: 1, 16, 96>}, {transform_indices = @transform_2, window_bounds = array<i64: 1, 16, 3>}, {transform_indices = @transform_3, window_bounds = array<i64: 1, 16, 8>}, {transform_indices = @transform_4, window_bounds = array<i64: 1, 16, 16>}, {pipeline_mode = #tpu.pipeline_mode<synchronous>, transform_indices = @transform_5, window_bounds = array<i64: 3, 32>}, {pipeline_mode = #tpu.pipeline_mode<synchronous>, transform_indices = @transform_6, window_bounds = array<i64: 1, 32>}, {pipeline_mode = #tpu.pipeline_mode<synchronous>, transform_indices = @transform_7, window_bounds = array<i64: 32, 32>}, {pipeline_mode = #tpu.pipeline_mode<synchronous>, transform_indices = @transform_8, window_bounds = array<i64: 1, 32>}, {pipeline_mode = #tpu.pipeline_mode<synchronous>, transform_indices = @transform_9, window_bounds = array<i64: 32, 32>}, {pipeline_mode = #tpu.pipeline_mode<synchronous>, transform_indices = @transform_10, window_bounds = array<i64: 1, 32>}, {pipeline_mode = #tpu.pipeline_mode<synchronous>, transform_indices = @transform_11, window_bounds = array<i64: 32, 32>}, {pipeline_mode = #tpu.pipeline_mode<synchronous>, transform_indices = @transform_12, window_bounds = array<i64: 1, 32>}, {pipeline_mode = #tpu.pipeline_mode<synchronous>, transform_indices = @transform_13, window_bounds = array<i64: 32, 16>}, {pipeline_mode = #tpu.pipeline_mode<synchronous>, transform_indices = @transform_14, window_bounds = array<i64: 1, 16>}, {transform_indices = @transform_15, window_bounds = array<i64: 1, 16, 16>}, {transform_indices = @transform_16, window_bounds = array<i64: 1, 16, 256>}]} {
    %c0 = arith.constant 0 : index
    %c0_0 = arith.constant 0 : index
    %c0_1 = arith.constant 0 : index
    %0 = vector.load %arg2[%c0, %c0_0, %c0_1] : memref<1x16x32xbf16, #tpu.memory_space<vmem>>, vector<1x16x32xbf16>
    %1 = vector.shape_cast %0 : vector<1x16x32xbf16> to vector<16x32xbf16>
    %2 = arith.extf %1 : vector<16x32xbf16> to vector<16x32xf32>
    %c0_2 = arith.constant 0 : index
    %c0_3 = arith.constant 0 : index
    %c0_4 = arith.constant 0 : index
    %3 = vector.load %arg4[%c0_2, %c0_3, %c0_4] : memref<1x16x3xf32, #tpu.memory_space<vmem>>, vector<1x16x3xf32>
    %4 = vector.shape_cast %3 : vector<1x16x3xf32> to vector<16x3xf32>
    %c0_5 = arith.constant 0 : index
    %c0_6 = arith.constant 0 : index
    %c0_7 = arith.constant 0 : index
    %5 = vector.load %arg5[%c0_5, %c0_6, %c0_7] : memref<1x16x8xi32, #tpu.memory_space<vmem>>, vector<1x16x8xi32>
    %6 = vector.shape_cast %5 : vector<1x16x8xi32> to vector<16x8xi32>
    %c0_8 = arith.constant 0 : index
    %c0_9 = arith.constant 0 : index
    %c0_10 = arith.constant 0 : index
    %7 = vector.load %arg6[%c0_8, %c0_9, %c0_10] : memref<1x16x16xf32, #tpu.memory_space<vmem>>, vector<1x16x16xf32>
    %8 = vector.shape_cast %7 : vector<1x16x16xf32> to vector<16x16xf32>
    %c0_11 = arith.constant 0 : index
    %c0_12 = arith.constant 0 : index
    %9 = vector.load %arg7[%c0_11, %c0_12] : memref<3x32xf32, #tpu.memory_space<vmem>>, vector<3x32xf32>
    %10 = vector.extract_strided_slice %4 {offsets = [0, 0], sizes = [16, 1], strides = [1, 1]} : vector<16x3xf32> to vector<16x1xf32>
    %11 = vector.extract_strided_slice %9 {offsets = [0, 0], sizes = [1, 32], strides = [1, 1]} : vector<3x32xf32> to vector<1x32xf32>
    %12 = vector.broadcast %10 : vector<16x1xf32> to vector<16x32xf32>
    %13 = vector.broadcast %11 : vector<1x32xf32> to vector<16x32xf32>
    %14 = arith.mulf %12, %13 : vector<16x32xf32>
    %15 = vector.extract_strided_slice %4 {offsets = [0, 1], sizes = [16, 1], strides = [1, 1]} : vector<16x3xf32> to vector<16x1xf32>
    %16 = vector.extract_strided_slice %9 {offsets = [1, 0], sizes = [1, 32], strides = [1, 1]} : vector<3x32xf32> to vector<1x32xf32>
    %17 = vector.broadcast %15 : vector<16x1xf32> to vector<16x32xf32>
    %18 = vector.broadcast %16 : vector<1x32xf32> to vector<16x32xf32>
    %19 = arith.mulf %17, %18 : vector<16x32xf32>
    %20 = arith.addf %14, %19 : vector<16x32xf32>
    %21 = vector.extract_strided_slice %4 {offsets = [0, 2], sizes = [16, 1], strides = [1, 1]} : vector<16x3xf32> to vector<16x1xf32>
    %22 = vector.extract_strided_slice %9 {offsets = [2, 0], sizes = [1, 32], strides = [1, 1]} : vector<3x32xf32> to vector<1x32xf32>
    %23 = vector.broadcast %21 : vector<16x1xf32> to vector<16x32xf32>
    %24 = vector.broadcast %22 : vector<1x32xf32> to vector<16x32xf32>
    %25 = arith.mulf %23, %24 : vector<16x32xf32>
    %26 = arith.addf %20, %25 : vector<16x32xf32>
    %cst = arith.constant 0.000000e+00 : f32
    %27 = vector.broadcast %cst : f32 to vector<128x96xf32>
    %c0_13 = arith.constant 0 : index
    %c0_14 = arith.constant 0 : index
    %c0_15 = arith.constant 0 : index
    %28 = vector.load %arg3[%c0_13, %c0_14, %c0_15] : memref<1x16x96xbf16, #tpu.memory_space<vmem>>, vector<1x16x96xbf16>
    %29 = vector.shape_cast %28 : vector<1x16x96xbf16> to vector<16x96xbf16>
    %30 = tpu.iota {dimensions = array<i32: 2>} : vector<16x8x16xi32>
    %c0_i32 = arith.constant 0 : i32
    %31 = vector.broadcast %c0_i32 : i32 to vector<16x8xi32>
    %32 = arith.subi %6, %31 : vector<16x8xi32>
    %33 = vector.shape_cast %32 : vector<16x8xi32> to vector<16x8x1xi32>
    %34 = vector.broadcast %33 : vector<16x8x1xi32> to vector<16x8x16xi32>
    %35 = arith.cmpi eq, %30, %34 : vector<16x8x16xi32>
    %cst_16 = arith.constant 1.000000e+00 : f32
    %cst_17 = arith.constant 0.000000e+00 : f32
    %36 = vector.broadcast %cst_16 : f32 to vector<16x8x16xf32>
    %37 = vector.broadcast %cst_17 : f32 to vector<16x8x16xf32>
    %38 = arith.select %35, %36, %37 : vector<16x8x16xi1>, vector<16x8x16xf32>
    %39 = arith.truncf %38 : vector<16x8x16xf32> to vector<16x8x16xbf16>
    %40 = vector.shape_cast %39 : vector<16x8x16xbf16> to vector<128x16xbf16>
    %cst_18 = arith.constant dense<0.000000e+00> : vector<128x96xf32>
    %41 = tpu.matmul %40, %29, %cst_18 {dimension_numbers = #tpu.dot_dimension_numbers<[1], [0], [0], [1], [0, 0, 1, 1], [], []>} : vector<128x16xbf16>, vector<16x96xbf16>, vector<128x96xf32> -> vector<128x96xf32>
    %42 = arith.addf %27, %41 : vector<128x96xf32>
    %43 = vector.extract_strided_slice %42 {offsets = [0, 0], sizes = [128, 32], strides = [1, 1]} : vector<128x96xf32> to vector<128x32xf32>
    %44 = vector.shape_cast %43 : vector<128x32xf32> to vector<16x8x32xf32>
    %45 = vector.extract_strided_slice %42 {offsets = [0, 32], sizes = [128, 32], strides = [1, 1]} : vector<128x96xf32> to vector<128x32xf32>
    %46 = vector.shape_cast %45 : vector<128x32xf32> to vector<16x8x32xf32>
    %47 = vector.extract_strided_slice %42 {offsets = [0, 64], sizes = [128, 32], strides = [1, 1]} : vector<128x96xf32> to vector<128x32xf32>
    %48 = vector.shape_cast %47 : vector<128x32xf32> to vector<16x8x32xf32>
    %49 = vector.shape_cast %26 : vector<16x32xf32> to vector<16x1x32xf32>
    %50 = vector.broadcast %49 : vector<16x1x32xf32> to vector<16x8x32xf32>
    %51 = arith.subf %50, %48 : vector<16x8x32xf32>
    %c0_19 = arith.constant 0 : index
    %c0_20 = arith.constant 0 : index
    %52 = vector.load %arg8[%c0_19, %c0_20] : memref<1x32xf32, #tpu.memory_space<vmem>>, vector<1x32xf32>
    %53 = vector.shape_cast %52 : vector<1x32xf32> to vector<1x1x32xf32>
    %54 = vector.broadcast %53 : vector<1x1x32xf32> to vector<16x8x32xf32>
    %55 = arith.addf %51, %54 : vector<16x8x32xf32>
    %cst_21 = arith.constant 0.000000e+00 : f32
    %56 = vector.broadcast %cst_21 : f32 to vector<16x8x32xf32>
    %57 = arith.maximumf %55, %56 : vector<16x8x32xf32>
    %58 = vector.shape_cast %57 : vector<16x8x32xf32> to vector<128x32xf32>
    %59 = arith.truncf %58 : vector<128x32xf32> to vector<128x32xbf16>
    %c0_22 = arith.constant 0 : index
    %c0_23 = arith.constant 0 : index
    %60 = vector.load %arg9[%c0_22, %c0_23] : memref<32x32xf32, #tpu.memory_space<vmem>>, vector<32x32xf32>
    %61 = arith.truncf %60 : vector<32x32xf32> to vector<32x32xbf16>
    %cst_24 = arith.constant dense<0.000000e+00> : vector<128x32xf32>
    %62 = tpu.matmul %59, %61, %cst_24 {dimension_numbers = #tpu.dot_dimension_numbers<[1], [0], [0], [1], [0, 0, 1, 1], [], []>} : vector<128x32xbf16>, vector<32x32xbf16>, vector<128x32xf32> -> vector<128x32xf32>
    %c0_25 = arith.constant 0 : index
    %c0_26 = arith.constant 0 : index
    %63 = vector.load %arg10[%c0_25, %c0_26] : memref<1x32xf32, #tpu.memory_space<vmem>>, vector<1x32xf32>
    %64 = vector.broadcast %63 : vector<1x32xf32> to vector<128x32xf32>
    %65 = arith.addf %62, %64 : vector<128x32xf32>
    %66 = vector.shape_cast %65 : vector<128x32xf32> to vector<16x8x32xf32>
    %67 = vector.shape_cast %2 : vector<16x32xf32> to vector<16x1x32xf32>
    %68 = vector.broadcast %67 : vector<16x1x32xf32> to vector<16x8x32xf32>
    %69 = arith.subf %68, %44 : vector<16x8x32xf32>
    %70 = arith.addf %69, %66 : vector<16x8x32xf32>
    %71 = vector.shape_cast %70 : vector<16x8x32xf32> to vector<128x32xf32>
    %72 = arith.truncf %71 : vector<128x32xf32> to vector<128x32xbf16>
    %c0_27 = arith.constant 0 : index
    %c0_28 = arith.constant 0 : index
    %73 = vector.load %arg11[%c0_27, %c0_28] : memref<32x32xf32, #tpu.memory_space<vmem>>, vector<32x32xf32>
    %74 = arith.truncf %73 : vector<32x32xf32> to vector<32x32xbf16>
    %cst_29 = arith.constant dense<0.000000e+00> : vector<128x32xf32>
    %75 = tpu.matmul %72, %74, %cst_29 {dimension_numbers = #tpu.dot_dimension_numbers<[1], [0], [0], [1], [0, 0, 1, 1], [], []>} : vector<128x32xbf16>, vector<32x32xbf16>, vector<128x32xf32> -> vector<128x32xf32>
    %c0_30 = arith.constant 0 : index
    %c0_31 = arith.constant 0 : index
    %76 = vector.load %arg12[%c0_30, %c0_31] : memref<1x32xf32, #tpu.memory_space<vmem>>, vector<1x32xf32>
    %77 = vector.broadcast %76 : vector<1x32xf32> to vector<128x32xf32>
    %78 = arith.addf %75, %77 : vector<128x32xf32>
    %cst_32 = arith.constant 0.000000e+00 : f32
    %79 = vector.broadcast %cst_32 : f32 to vector<128x32xf32>
    %80 = arith.maximumf %78, %79 : vector<128x32xf32>
    %81 = arith.truncf %80 : vector<128x32xf32> to vector<128x32xbf16>
    %c0_33 = arith.constant 0 : index
    %c0_34 = arith.constant 0 : index
    %82 = vector.load %arg13[%c0_33, %c0_34] : memref<32x32xf32, #tpu.memory_space<vmem>>, vector<32x32xf32>
    %83 = arith.truncf %82 : vector<32x32xf32> to vector<32x32xbf16>
    %cst_35 = arith.constant dense<0.000000e+00> : vector<128x32xf32>
    %84 = tpu.matmul %81, %83, %cst_35 {dimension_numbers = #tpu.dot_dimension_numbers<[1], [0], [0], [1], [0, 0, 1, 1], [], []>} : vector<128x32xbf16>, vector<32x32xbf16>, vector<128x32xf32> -> vector<128x32xf32>
    %c0_36 = arith.constant 0 : index
    %c0_37 = arith.constant 0 : index
    %85 = vector.load %arg14[%c0_36, %c0_37] : memref<1x32xf32, #tpu.memory_space<vmem>>, vector<1x32xf32>
    %86 = vector.broadcast %85 : vector<1x32xf32> to vector<128x32xf32>
    %87 = arith.addf %84, %86 : vector<128x32xf32>
    %88 = vector.shape_cast %87 : vector<128x32xf32> to vector<16x8x32xf32>
    %cst_38 = arith.constant dense<0xFF800000> : vector<16x32xf32>
    %89 = vector.multi_reduction <maximumf>, %88, %cst_38 [1] : vector<16x8x32xf32> to vector<16x32xf32>
    %90 = vector.shape_cast %89 : vector<16x32xf32> to vector<16x1x32xf32>
    %91 = vector.broadcast %90 : vector<16x1x32xf32> to vector<16x8x32xf32>
    %92 = arith.subf %88, %91 : vector<16x8x32xf32>
    %93 = math.exp %92 : vector<16x8x32xf32>
    %cst_39 = arith.constant dense<0.000000e+00> : vector<16x32xf32>
    %94 = vector.multi_reduction <add>, %93, %cst_39 [1] : vector<16x8x32xf32> to vector<16x32xf32>
    %95 = vector.shape_cast %94 : vector<16x32xf32> to vector<16x1x32xf32>
    %96 = tpu.reciprocal %95 {approx = true} : vector<16x1x32xf32> -> vector<16x1x32xf32>
    %97 = vector.broadcast %96 : vector<16x1x32xf32> to vector<16x8x32xf32>
    %98 = arith.mulf %93, %97 : vector<16x8x32xf32>
    %99 = arith.addf %46, %66 : vector<16x8x32xf32>
    %100 = arith.mulf %98, %99 : vector<16x8x32xf32>
    %cst_40 = arith.constant dense<0.000000e+00> : vector<16x32xf32>
    %101 = vector.multi_reduction <add>, %100, %cst_40 [1] : vector<16x8x32xf32> to vector<16x32xf32>
    %102 = arith.truncf %101 : vector<16x32xf32> to vector<16x32xbf16>
    %c0_41 = arith.constant 0 : index
    %c0_42 = arith.constant 0 : index
    %103 = vector.load %arg15[%c0_41, %c0_42] : memref<32x16xf32, #tpu.memory_space<vmem>>, vector<32x16xf32>
    %104 = arith.truncf %103 : vector<32x16xf32> to vector<32x16xbf16>
    %cst_43 = arith.constant dense<0.000000e+00> : vector<16x16xf32>
    %105 = tpu.matmul %102, %104, %cst_43 {dimension_numbers = #tpu.dot_dimension_numbers<[1], [0], [0], [1], [0, 0, 1, 1], [], []>} : vector<16x32xbf16>, vector<32x16xbf16>, vector<16x16xf32> -> vector<16x16xf32>
    %c0_44 = arith.constant 0 : index
    %c0_45 = arith.constant 0 : index
    %106 = vector.load %arg16[%c0_44, %c0_45] : memref<1x16xf32, #tpu.memory_space<vmem>>, vector<1x16xf32>
    %107 = vector.broadcast %106 : vector<1x16xf32> to vector<16x16xf32>
    %108 = arith.addf %105, %107 : vector<16x16xf32>
    %109 = arith.addf %108, %8 : vector<16x16xf32>
    %c0_46 = arith.constant 0 : index
    %c0_47 = arith.constant 0 : index
    %c0_48 = arith.constant 0 : index
    %110 = vector.load %arg17[%c0_46, %c0_47, %c0_48] : memref<1x16x16xf32, #tpu.memory_space<vmem>>, vector<1x16x16xf32>
    %111 = vector.shape_cast %110 : vector<1x16x16xf32> to vector<16x16xf32>
    %112 = vector.shape_cast %109 : vector<16x16xf32> to vector<1x16x16xf32>
    tpu.vector_store %arg17[%c0_46, %c0_47, %c0_48], %112 {strides = array<i32>} : memref<1x16x16xf32, #tpu.memory_space<vmem>>, vector<1x16x16xf32>,
    %113 = vector.extract_strided_slice %98 {offsets = [0, 0, 0], sizes = [16, 1, 32], strides = [1, 1, 1]} : vector<16x8x32xf32> to vector<16x1x32xf32>
    %114 = vector.shape_cast %113 : vector<16x1x32xf32> to vector<16x32xf32>
    %115 = arith.truncf %114 : vector<16x32xf32> to vector<16x32xbf16>
    %c0_49 = arith.constant 0 : index
    %c0_50 = arith.constant 0 : index
    %c0_51 = arith.constant 0 : index
    %116 = vector.load %arg18[%c0_49, %c0_50, %c0_51] : memref<1x16x256xbf16, #tpu.memory_space<vmem>>, vector<1x16x32xbf16>
    %117 = vector.shape_cast %116 : vector<1x16x32xbf16> to vector<16x32xbf16>
    %118 = vector.shape_cast %115 : vector<16x32xbf16> to vector<1x16x32xbf16>
    tpu.vector_store %arg18[%c0_49, %c0_50, %c0_51], %118 {strides = array<i32>} : memref<1x16x256xbf16, #tpu.memory_space<vmem>>, vector<1x16x32xbf16>,
    %119 = vector.extract_strided_slice %98 {offsets = [0, 1, 0], sizes = [16, 1, 32], strides = [1, 1, 1]} : vector<16x8x32xf32> to vector<16x1x32xf32>
    %120 = vector.shape_cast %119 : vector<16x1x32xf32> to vector<16x32xf32>
    %121 = arith.truncf %120 : vector<16x32xf32> to vector<16x32xbf16>
    %c0_52 = arith.constant 0 : index
    %c0_53 = arith.constant 0 : index
    %c32 = arith.constant 32 : index
    %122 = vector.load %arg18[%c0_52, %c0_53, %c32] : memref<1x16x256xbf16, #tpu.memory_space<vmem>>, vector<1x16x32xbf16>
    %123 = vector.shape_cast %122 : vector<1x16x32xbf16> to vector<16x32xbf16>
    %124 = vector.shape_cast %121 : vector<16x32xbf16> to vector<1x16x32xbf16>
    tpu.vector_store %arg18[%c0_52, %c0_53, %c32], %124 {strides = array<i32>} : memref<1x16x256xbf16, #tpu.memory_space<vmem>>, vector<1x16x32xbf16>,
    %125 = vector.extract_strided_slice %98 {offsets = [0, 2, 0], sizes = [16, 1, 32], strides = [1, 1, 1]} : vector<16x8x32xf32> to vector<16x1x32xf32>
    %126 = vector.shape_cast %125 : vector<16x1x32xf32> to vector<16x32xf32>
    %127 = arith.truncf %126 : vector<16x32xf32> to vector<16x32xbf16>
    %c0_54 = arith.constant 0 : index
    %c0_55 = arith.constant 0 : index
    %c64 = arith.constant 64 : index
    %128 = vector.load %arg18[%c0_54, %c0_55, %c64] : memref<1x16x256xbf16, #tpu.memory_space<vmem>>, vector<1x16x32xbf16>
    %129 = vector.shape_cast %128 : vector<1x16x32xbf16> to vector<16x32xbf16>
    %130 = vector.shape_cast %127 : vector<16x32xbf16> to vector<1x16x32xbf16>
    tpu.vector_store %arg18[%c0_54, %c0_55, %c64], %130 {strides = array<i32>} : memref<1x16x256xbf16, #tpu.memory_space<vmem>>, vector<1x16x32xbf16>,
    %131 = vector.extract_strided_slice %98 {offsets = [0, 3, 0], sizes = [16, 1, 32], strides = [1, 1, 1]} : vector<16x8x32xf32> to vector<16x1x32xf32>
    %132 = vector.shape_cast %131 : vector<16x1x32xf32> to vector<16x32xf32>
    %133 = arith.truncf %132 : vector<16x32xf32> to vector<16x32xbf16>
    %c0_56 = arith.constant 0 : index
    %c0_57 = arith.constant 0 : index
    %c96 = arith.constant 96 : index
    %134 = vector.load %arg18[%c0_56, %c0_57, %c96] : memref<1x16x256xbf16, #tpu.memory_space<vmem>>, vector<1x16x32xbf16>
    %135 = vector.shape_cast %134 : vector<1x16x32xbf16> to vector<16x32xbf16>
    %136 = vector.shape_cast %133 : vector<16x32xbf16> to vector<1x16x32xbf16>
    tpu.vector_store %arg18[%c0_56, %c0_57, %c96], %136 {strides = array<i32>} : memref<1x16x256xbf16, #tpu.memory_space<vmem>>, vector<1x16x32xbf16>,
    %137 = vector.extract_strided_slice %98 {offsets = [0, 4, 0], sizes = [16, 1, 32], strides = [1, 1, 1]} : vector<16x8x32xf32> to vector<16x1x32xf32>
    %138 = vector.shape_cast %137 : vector<16x1x32xf32> to vector<16x32xf32>
    %139 = arith.truncf %138 : vector<16x32xf32> to vector<16x32xbf16>
    %c0_58 = arith.constant 0 : index
    %c0_59 = arith.constant 0 : index
    %c128 = arith.constant 128 : index
    %140 = vector.load %arg18[%c0_58, %c0_59, %c128] : memref<1x16x256xbf16, #tpu.memory_space<vmem>>, vector<1x16x32xbf16>
    %141 = vector.shape_cast %140 : vector<1x16x32xbf16> to vector<16x32xbf16>
    %142 = vector.shape_cast %139 : vector<16x32xbf16> to vector<1x16x32xbf16>
    tpu.vector_store %arg18[%c0_58, %c0_59, %c128], %142 {strides = array<i32>} : memref<1x16x256xbf16, #tpu.memory_space<vmem>>, vector<1x16x32xbf16>,
    %143 = vector.extract_strided_slice %98 {offsets = [0, 5, 0], sizes = [16, 1, 32], strides = [1, 1, 1]} : vector<16x8x32xf32> to vector<16x1x32xf32>
    %144 = vector.shape_cast %143 : vector<16x1x32xf32> to vector<16x32xf32>
    %145 = arith.truncf %144 : vector<16x32xf32> to vector<16x32xbf16>
    %c0_60 = arith.constant 0 : index
    %c0_61 = arith.constant 0 : index
    %c160 = arith.constant 160 : index
    %146 = vector.load %arg18[%c0_60, %c0_61, %c160] : memref<1x16x256xbf16, #tpu.memory_space<vmem>>, vector<1x16x32xbf16>
    %147 = vector.shape_cast %146 : vector<1x16x32xbf16> to vector<16x32xbf16>
    %148 = vector.shape_cast %145 : vector<16x32xbf16> to vector<1x16x32xbf16>
    tpu.vector_store %arg18[%c0_60, %c0_61, %c160], %148 {strides = array<i32>} : memref<1x16x256xbf16, #tpu.memory_space<vmem>>, vector<1x16x32xbf16>,
    %149 = vector.extract_strided_slice %98 {offsets = [0, 6, 0], sizes = [16, 1, 32], strides = [1, 1, 1]} : vector<16x8x32xf32> to vector<16x1x32xf32>
    %150 = vector.shape_cast %149 : vector<16x1x32xf32> to vector<16x32xf32>
    %151 = arith.truncf %150 : vector<16x32xf32> to vector<16x32xbf16>
    %c0_62 = arith.constant 0 : index
    %c0_63 = arith.constant 0 : index
    %c192 = arith.constant 192 : index
    %152 = vector.load %arg18[%c0_62, %c0_63, %c192] : memref<1x16x256xbf16, #tpu.memory_space<vmem>>, vector<1x16x32xbf16>
    %153 = vector.shape_cast %152 : vector<1x16x32xbf16> to vector<16x32xbf16>
    %154 = vector.shape_cast %151 : vector<16x32xbf16> to vector<1x16x32xbf16>
    tpu.vector_store %arg18[%c0_62, %c0_63, %c192], %154 {strides = array<i32>} : memref<1x16x256xbf16, #tpu.memory_space<vmem>>, vector<1x16x32xbf16>,
    %155 = vector.extract_strided_slice %98 {offsets = [0, 7, 0], sizes = [16, 1, 32], strides = [1, 1, 1]} : vector<16x8x32xf32> to vector<16x1x32xf32>
    %156 = vector.shape_cast %155 : vector<16x1x32xf32> to vector<16x32xf32>
    %157 = arith.truncf %156 : vector<16x32xf32> to vector<16x32xbf16>
    %c0_64 = arith.constant 0 : index
    %c0_65 = arith.constant 0 : index
    %c224 = arith.constant 224 : index
    %158 = vector.load %arg18[%c0_64, %c0_65, %c224] : memref<1x16x256xbf16, #tpu.memory_space<vmem>>, vector<1x16x32xbf16>
    %159 = vector.shape_cast %158 : vector<1x16x32xbf16> to vector<16x32xbf16>
    %160 = vector.shape_cast %157 : vector<16x32xbf16> to vector<1x16x32xbf16>
    tpu.vector_store %arg18[%c0_64, %c0_65, %c224], %160 {strides = array<i32>} : memref<1x16x256xbf16, #tpu.memory_space<vmem>>, vector<1x16x32xbf16>,
    return
  }
  func.func @transform_0(%arg0: i32, %arg1: i32) -> (i32, i32, i32) {
    %c0_i32 = arith.constant 0 : i32
    %c0_i32_0 = arith.constant 0 : i32
    return %arg0, %arg1, %c0_i32 : i32, i32, i32
  }
  func.func @transform_1(%arg0: i32, %arg1: i32) -> (i32, i32, i32) {
    %c0_i32 = arith.constant 0 : i32
    %c0_i32_0 = arith.constant 0 : i32
    %c0_i32_1 = arith.constant 0 : i32
    return %arg0, %c0_i32, %c0_i32_0 : i32, i32, i32
  }
  func.func @transform_2(%arg0: i32, %arg1: i32) -> (i32, i32, i32) {
    %c0_i32 = arith.constant 0 : i32
    %c0_i32_0 = arith.constant 0 : i32
    return %arg0, %arg1, %c0_i32 : i32, i32, i32
  }
  func.func @transform_3(%arg0: i32, %arg1: i32) -> (i32, i32, i32) {
    %c0_i32 = arith.constant 0 : i32
    %c0_i32_0 = arith.constant 0 : i32
    return %arg0, %arg1, %c0_i32 : i32, i32, i32
  }
  func.func @transform_4(%arg0: i32, %arg1: i32) -> (i32, i32, i32) {
    %c0_i32 = arith.constant 0 : i32
    %c0_i32_0 = arith.constant 0 : i32
    return %arg0, %arg1, %c0_i32 : i32, i32, i32
  }
  func.func @transform_5(%arg0: i32, %arg1: i32) -> (i32, i32) {
    %c0_i32 = arith.constant 0 : i32
    %c0_i32_0 = arith.constant 0 : i32
    %c0_i32_1 = arith.constant 0 : i32
    return %c0_i32, %c0_i32_0 : i32, i32
  }
  func.func @transform_6(%arg0: i32, %arg1: i32) -> (i32, i32) {
    %c0_i32 = arith.constant 0 : i32
    %c0_i32_0 = arith.constant 0 : i32
    %c0_i32_1 = arith.constant 0 : i32
    return %c0_i32, %c0_i32_0 : i32, i32
  }
  func.func @transform_7(%arg0: i32, %arg1: i32) -> (i32, i32) {
    %c0_i32 = arith.constant 0 : i32
    %c0_i32_0 = arith.constant 0 : i32
    %c0_i32_1 = arith.constant 0 : i32
    return %c0_i32, %c0_i32_0 : i32, i32
  }
  func.func @transform_8(%arg0: i32, %arg1: i32) -> (i32, i32) {
    %c0_i32 = arith.constant 0 : i32
    %c0_i32_0 = arith.constant 0 : i32
    %c0_i32_1 = arith.constant 0 : i32
    return %c0_i32, %c0_i32_0 : i32, i32
  }
  func.func @transform_9(%arg0: i32, %arg1: i32) -> (i32, i32) {
    %c0_i32 = arith.constant 0 : i32
    %c0_i32_0 = arith.constant 0 : i32
    %c0_i32_1 = arith.constant 0 : i32
    return %c0_i32, %c0_i32_0 : i32, i32
  }
  func.func @transform_10(%arg0: i32, %arg1: i32) -> (i32, i32) {
    %c0_i32 = arith.constant 0 : i32
    %c0_i32_0 = arith.constant 0 : i32
    %c0_i32_1 = arith.constant 0 : i32
    return %c0_i32, %c0_i32_0 : i32, i32
  }
  func.func @transform_11(%arg0: i32, %arg1: i32) -> (i32, i32) {
    %c0_i32 = arith.constant 0 : i32
    %c0_i32_0 = arith.constant 0 : i32
    %c0_i32_1 = arith.constant 0 : i32
    return %c0_i32, %c0_i32_0 : i32, i32
  }
  func.func @transform_12(%arg0: i32, %arg1: i32) -> (i32, i32) {
    %c0_i32 = arith.constant 0 : i32
    %c0_i32_0 = arith.constant 0 : i32
    %c0_i32_1 = arith.constant 0 : i32
    return %c0_i32, %c0_i32_0 : i32, i32
  }
  func.func @transform_13(%arg0: i32, %arg1: i32) -> (i32, i32) {
    %c0_i32 = arith.constant 0 : i32
    %c0_i32_0 = arith.constant 0 : i32
    %c0_i32_1 = arith.constant 0 : i32
    return %c0_i32, %c0_i32_0 : i32, i32
  }
  func.func @transform_14(%arg0: i32, %arg1: i32) -> (i32, i32) {
    %c0_i32 = arith.constant 0 : i32
    %c0_i32_0 = arith.constant 0 : i32
    %c0_i32_1 = arith.constant 0 : i32
    return %c0_i32, %c0_i32_0 : i32, i32
  }
  func.func @transform_15(%arg0: i32, %arg1: i32) -> (i32, i32, i32) {
    %c0_i32 = arith.constant 0 : i32
    %c0_i32_0 = arith.constant 0 : i32
    return %arg0, %arg1, %c0_i32 : i32, i32, i32
  }
  func.func @transform_16(%arg0: i32, %arg1: i32) -> (i32, i32, i32) {
    %c0_i32 = arith.constant 0 : i32
    %c0_i32_0 = arith.constant 0 : i32
    return %arg0, %arg1, %c0_i32 : i32, i32, i32
  }
}

</mosaic_0001>

<llo_original>
// kernel: point_transformer_block.3
$region0: #{point_transformer_block.3}
  #allocation0 [shape = 'u32[]', space=smem, size = 0x4, offset = 0x4, fixed_abs, tag = 'smem constant byte address 0x4 - core index']
  #allocation1 [shape = 'u32[144,128]{1,0:T(1,128)}', space=vmem, size = 0x12000, scoped, tag = 'internal scratch']
  %s0 = inlined_call_operand.vmem [shape: f32[2,16,3], index: 0, kind: input, shape index: {}]
  %s1 = inlined_call_operand.vmem [shape: f32[2,3,16], index: 1, kind: input, shape index: {}]
  %s2 = inlined_call_operand.vmem [shape: f32[2,1,16], index: 2, kind: input, shape index: {}]
  %s3 = inlined_call_operand.vmem [shape: f32[2,16,16], index: 3, kind: output, shape index: {}]
  %s4 = sld [smem:[#allocation0]]
  $region45: #{point_transformer_block.3} parent=0
    _
  %s6 = ssub.s32 1, %s4
  %s7 = scalar_select 0, %s6, %s4
  loop: start=0, step=1, limit=4
  $region2: #{point_transformer_block.3} parent=0 // loop_pre_header
    _
  $region3: #{point_transformer_block.3} parent=0 // loop_header
    %s9 = sphi 0, %s13
    %p10 = scmp.ge.s32.totalorder %s9, 4
    %s16 = sphi 0, %s28
    %s17 = sphi 0, %s24
    %s18 = sphi 0, %s16
    %s19 = sphi 0, %s17
    %s20 = sphi 0, %s18
    %s21 = sphi 0, %s19
    %s33 = sphi 0, %s35
    %s36 = sphi 0, %s33
    %s37 = sphi 0, %s36
    %s53 = sphi 0, %s37
    %s59 = sphi 0, %s61
    %s62 = sphi 0, %s59
    %s63 = sphi 0, %s62
    %s79 = sphi 0, %s63
    %s85 = sphi 0, %s87
    %s88 = sphi 0, %s85
    %s89 = sphi 0, %s88
    %s105 = sphi 0, %s89
    %s113 = sphi 0, %s115
    %s116 = sphi 0, %s113
    %s117 = sphi 0, %s116
    %s133 = sphi 0, %s117
  $region4: #{point_transformer_block.3} parent=0 // loop_header_branch
    %12 = sbr.rel (%p10) target = $region8
  $region5: #{point_transformer_block.3} parent=0 // loop_body
    %s14 = ssub.s32 %s9, 1
    %s15 = ssub.s32 %s9, 2
    %s22 = sadd.s32 1, %s17
    %p23 = scmp.ge.s32.totalorder %s22, 1
    %s24 = scalar_select %p23, 0, %s22
    %s25 = sadd.s32 1, %s16
    %s26 = scalar_select %p23, %s25, %s16
    %p27 = scmp.ge.s32.totalorder %s26, 2
    %s28 = scalar_select %p27, 0, %s26
    %s29 = ssub.s32 %s16, %s28
    %s30 = ssub.s32 %s17, %s24
    %s31 = sor.u32 %s29, %s30
    %p32 = scmp.eq.s32.totalorder %s31, 0
    %s34 = sadd.s32 %s33, 1
    %s35 = scalar_select %p32, %s33, %s34
    %p38 = pneg %p32
    %p39 = scmp.eq.s32.totalorder %s9, 1
    %p40 = por %p38, %p39
    %p41 = scmp.ne.s32.totalorder %s33, %s36
    %p42 = scmp.eq.s32.totalorder %s9, 0
    %p43 = por %p41, %p42
    %p44 = scmp.ne.s32.totalorder %s33, %s36
    %p45 = scmp.eq.s32.totalorder %s14, 1
    %p46 = por %p44, %p45
    %p47 = scmp.ne.s32.totalorder %s36, %s37
    %p48 = scmp.eq.s32.totalorder %s14, 0
    %p49 = por %p47, %p48
    %p50 = scmp.ne.s32.totalorder %s36, %s37
    %p51 = scmp.eq.s32.totalorder %s15, 1
    %p52 = por %p50, %p51
    %p54 = scmp.ne.s32.totalorder %s37, %s53
    %p55 = scmp.eq.s32.totalorder %s15, 0
    %p56 = por %p54, %p55
    %s57 = ssub.s32 %s16, %s28
    %p58 = scmp.eq.s32.totalorder %s57, 0
    %s60 = sadd.s32 %s59, 1
    %s61 = scalar_select %p58, %s59, %s60
    %p64 = pneg %p58
    %p65 = scmp.eq.s32.totalorder %s9, 1
    %p66 = por %p64, %p65
    %p67 = scmp.ne.s32.totalorder %s59, %s62
    %p68 = scmp.eq.s32.totalorder %s9, 0
    %p69 = por %p67, %p68
    %p70 = scmp.ne.s32.totalorder %s59, %s62
    %p71 = scmp.eq.s32.totalorder %s14, 1
    %p72 = por %p70, %p71
    %p73 = scmp.ne.s32.totalorder %s62, %s63
    %p74 = scmp.eq.s32.totalorder %s14, 0
    %p75 = por %p73, %p74
    %p76 = scmp.ne.s32.totalorder %s62, %s63
    %p77 = scmp.eq.s32.totalorder %s15, 1
    %p78 = por %p76, %p77
    %p80 = scmp.ne.s32.totalorder %s63, %s79
    %p81 = scmp.eq.s32.totalorder %s15, 0
    %p82 = por %p80, %p81
    %s83 = ssub.s32 %s16, %s28
    %p84 = scmp.eq.s32.totalorder %s83, 0
    %s86 = sadd.s32 %s85, 1
    %s87 = scalar_select %p84, %s85, %s86
    %p90 = pneg %p84
    %p91 = scmp.eq.s32.totalorder %s9, 1
    %p92 = por %p90, %p91
    %p93 = scmp.ne.s32.totalorder %s85, %s88
    %p94 = scmp.eq.s32.totalorder %s9, 0
    %p95 = por %p93, %p94
    %p96 = scmp.ne.s32.totalorder %s85, %s88
    %p97 = scmp.eq.s32.totalorder %s14, 1
    %p98 = por %p96, %p97
    %p99 = scmp.ne.s32.totalorder %s88, %s89
    %p100 = scmp.eq.s32.totalorder %s14, 0
    %p101 = por %p99, %p100
    %p102 = scmp.ne.s32.totalorder %s88, %s89
    %p103 = scmp.eq.s32.totalorder %s15, 1
    %p104 = por %p102, %p103
    %p106 = scmp.ne.s32.totalorder %s89, %s105
    %p107 = scmp.eq.s32.totalorder %s15, 0
    %p108 = por %p106, %p107
    %s109 = ssub.s32 %s16, %s28
    %s110 = ssub.s32 %s17, %s24
    %s111 = sor.u32 %s109, %s110
    %p112 = scmp.eq.s32.totalorder %s111, 0
    %s114 = sadd.s32 %s113, 1
    %s115 = scalar_select %p112, %s113, %s114
    %p118 = pneg %p112
    %p119 = scmp.eq.s32.totalorder %s9, 1
    %p120 = por %p118, %p119
    %p121 = scmp.ne.s32.totalorder %s113, %s116
    %p122 = scmp.eq.s32.totalorder %s9, 0
    %p123 = por %p121, %p122
    %p124 = scmp.ne.s32.totalorder %s113, %s116
    %p125 = scmp.eq.s32.totalorder %s14, 1
    %p126 = por %p124, %p125
    %p127 = scmp.ne.s32.totalorder %s116, %s117
    %p128 = scmp.eq.s32.totalorder %s14, 0
    %p129 = por %p127, %p128
    %p130 = scmp.ne.s32.totalorder %s116, %s117
    %p131 = scmp.eq.s32.totalorder %s15, 1
    %p132 = por %p130, %p131
    %p134 = scmp.ne.s32.totalorder %s117, %s133
    %p135 = scmp.eq.s32.totalorder %s15, 0
    %p136 = por %p134, %p135
    %p137 = scmp.le.s32.totalorder 1, %s9
    %p138 = scmp.lt.s32.totalorder %s9, 3
    %p139 = pnand %p137, %p138
    %p140 = pneg %p139
    // Predicated region
    $region9: #{point_transformer_block.3} parent=5 // pred_check
      _
    $region10: #{point_transformer_block.3} parent=5 // pred_check_branch
      %142 = sbr.rel (%p139) target = $region12
    $region11: #{point_transformer_block.3} parent=5 // pred_region
      %s143 = ssub.s32 %s9, 1
    $region12: #{point_transformer_block.3} parent=5 // pred_fallthru
      _
    %p144 = scmp.lt.s32.totalorder %s9, 2
    // Predicated region
    $region13: #{point_transformer_block.3} parent=5 // pred_check
      %p145 = pneg %p144
    $region14: #{point_transformer_block.3} parent=5 // pred_check_branch
      %147 = sbr.rel (%p145) target = $region16
    $region15: #{point_transformer_block.3} parent=5 // pred_region
      // Predicated region
      $region17: #{point_transformer_block.3} parent=15 // pred_check
        %p148 = pneg %p43
      $region18: #{point_transformer_block.3} parent=15 // pred_check_branch
        %150 = sbr.rel (%p148) target = $region20
      $region19: #{point_transformer_block.3} parent=15 // pred_region
        %s151 = smul.u32 2, %s17
        %p152 = scmp.lt.s32.totalorder %s16, 1
        %s153 = scalar_select %p152, %s16, 1
        %p154 = scmp.lt.s32.totalorder %s151, 1
        %s155 = scalar_select %p154, %s151, 1
        %s156 = smul.addr %s153, 2
        %s157 = sadd.s32 %s155, %s156
        %s158 = smul.addr %s157, 8
        %s159 = scalar_lea.vmem %s0, %s158
        %s160 = smul.u32 2, %s17
      $region20: #{point_transformer_block.3} parent=15 // pred_fallthru
        _
      // Predicated region
      $region21: #{point_transformer_block.3} parent=15 // pred_check
        %p161 = pneg %p69
      $region22: #{point_transformer_block.3} parent=15 // pred_check_branch
        %163 = sbr.rel (%p161) target = $region24
      $region23: #{point_transformer_block.3} parent=15 // pred_region
        %p164 = scmp.lt.s32.totalorder %s16, 1
        %s165 = scalar_select %p164, %s16, 1
        %s166 = smul.addr %s165, 4
        %s167 = scalar_lea.vmem %s1, %s166
      $region24: #{point_transformer_block.3} parent=15 // pred_fallthru
        _
      // Predicated region
      $region25: #{point_transformer_block.3} parent=15 // pred_check
        %p168 = pneg %p95
      $region26: #{point_transformer_block.3} parent=15 // pred_check_branch
        %170 = sbr.rel (%p168) target = $region28
      $region27: #{point_transformer_block.3} parent=15 // pred_region
        %p171 = scmp.lt.s32.totalorder %s16, 1
        %s172 = scalar_select %p171, %s16, 1
        %s173 = scalar_lea.vmem %s2, %s172
      $region28: #{point_transformer_block.3} parent=15 // pred_fallthru
        _
    $region16: #{point_transformer_block.3} parent=5 // pred_fallthru
      _
    %p174 = scmp.le.s32.totalorder 1, %s9
    %p175 = scmp.lt.s32.totalorder %s9, 3
    %p176 = pnand %p174, %p175
    %p177 = pneg %p176
    // Predicated region
    $region29: #{point_transformer_block.3} parent=5 // pred_check
      _
    $region30: #{point_transformer_block.3} parent=5 // pred_check_branch
      %179 = sbr.rel (%p176) target = $region32
    $region31: #{point_transformer_block.3} parent=5 // pred_region
      %s180 = ssub.s32 %s9, 1
      %s181 = smul.u32 2, %s19
      %p182 = scmp.lt.s32.totalorder %s18, 1
      %s183 = scalar_select %p182, %s18, 1
      %p184 = scmp.lt.s32.totalorder %s181, 1
      %s185 = scalar_select %p184, %s181, 1
      %s186 = smul.addr %s183, 2
      %s187 = sadd.s32 %s185, %s186
      %s188 = smul.addr %s187, 8
      %s189 = scalar_lea.vmem %s0, %s188
      %p190 = pneg %p49
      %p191 = pneg %p46
      %p192 = scmp.lt.s32.totalorder %s18, 1
      %s193 = scalar_select %p192, %s18, 1
      %s194 = smul.addr %s193, 4
      %s195 = scalar_lea.vmem %s1, %s194
      %p196 = pneg %p75
      %p197 = pneg %p72
      %p198 = scmp.lt.s32.totalorder %s18, 1
      %s199 = scalar_select %p198, %s18, 1
      %s200 = scalar_lea.vmem %s2, %s199
      %p201 = pneg %p101
      %p202 = pneg %p98
      %p203 = pneg %p129
      %p204 = pneg %p126
      %s205 = smul.u32 2, %s19
      %p206 = scmp.lt.s32.totalorder %s18, 1
      %s207 = scalar_select %p206, %s18, 1
      %p208 = scmp.lt.s32.totalorder %s205, 1
      %s209 = scalar_select %p208, %s205, 1
      %s210 = smul.addr %s207, 2
      %s211 = sadd.s32 %s209, %s210
      %s212 = smul.addr %s211, 8
      %s213 = scalar_lea.vmem %s3, %s212
      %s214 = smul.u32 2, %s19
      %p215 = scmp.lt.s32.totalorder %s18, 1
      %s216 = scalar_select %p215, %s18, 1
      %p217 = scmp.lt.s32.totalorder %s214, 1
      %s218 = scalar_select %p217, %s214, 1
      %s219 = smul.addr %s216, 2
      %s220 = sadd.s32 %s218, %s219
      %s221 = smul.addr %s220, 8
      %s222 = scalar_lea.vmem %s0, %s221
      %s223 = smul.u32 2, %s19
      %p224 = scmp.lt.s32.totalorder %s18, 1
      %s225 = scalar_select %p224, %s18, 1
      %s226 = smul.addr %s225, 4
      %s227 = scalar_lea.vmem %s1, %s226
      %p228 = scmp.lt.s32.totalorder %s18, 1
      %s229 = scalar_select %p228, %s18, 1
      %s230 = scalar_lea.vmem %s2, %s229
      %s231 = smul.u32 2, %s19
      %p232 = scmp.lt.s32.totalorder %s18, 1
      %s233 = scalar_select %p232, %s18, 1
      %p234 = scmp.lt.s32.totalorder %s231, 1
      %s235 = scalar_select %p234, %s231, 1
      %s236 = smul.addr %s233, 2
      %s237 = sadd.s32 %s235, %s236
      %s238 = smul.addr %s237, 8
      %s239 = scalar_lea.vmem %s3, %s238
      %s240 = smul.u32 2, %s19
      %v241 = vld [vmem:[%s222] sm:$0xff]
      %v242 = vld [vmem:[%s222 + $0x8] sm:$0xff]
      %v243 = vld [vmem:[%s227] sm:$0x7]
      %v244 = vld [vmem:[%s230] sm:$0x1]
      %v245 = vmul.f32 %v241, %v241
      %v246 = vmul.f32 %v242, %v242
      %vm247 = vcmask 23552
      %v248 = vsel %vm247, %v245, 0.0
      %249 = vadd.xlane.f32.xlu0 %v248
      %v250 = vpop.xlane.xlu0 %249
      %v251 = vsel %vm247, %v246, 0.0
      %252 = vadd.xlane.f32.xlu0 %v251
      %v253 = vpop.xlane.xlu0 %252
      %255 = vset.pattern.permute.xlu0 0
      %256 = vperm.xlu0 %255, %v241
      %v257 = vpop.permute.xlu0 %256
      %260 = vset.pattern.permute.xlu0 0
      %261 = vperm.xlu0 %260, %v242
      %v262 = vpop.permute.xlu0 %261
      %v264 = vlaneseq
      %v265 = vshrl.u32 %v264, 7
      %v266 = vsub.s32 0, %v265
      %v267 = vrot.slane %v243, %v266
      %v268 = vmul.f32 %v257, %v267
      %v269 = vmul.f32 %v262, %v267
      %270 = vset.pattern.permute.xlu0 1
      %271 = vperm.xlu0 %270, %v241
      %v272 = vpop.permute.xlu0 %271
      %274 = vset.pattern.permute.xlu0 1
      %275 = vperm.xlu0 %274, %v242
      %v276 = vpop.permute.xlu0 %275
      %v278 = vlaneseq
      %v279 = vshrl.u32 %v278, 7
      %v280 = vsub.s32 1, %v279
      %v281 = vrot.slane %v243, %v280
      %v282 = vmul.f32 %v272, %v281
      %v283 = vmul.f32 %v276, %v281
      %v284 = vadd.f32 %v268, %v282
      %v285 = vadd.f32 %v269, %v283
      %286 = vset.pattern.permute.xlu0 2
      %287 = vperm.xlu0 %286, %v241
      %v288 = vpop.permute.xlu0 %287
      %290 = vset.pattern.permute.xlu0 2
      %291 = vperm.xlu0 %290, %v242
      %v292 = vpop.permute.xlu0 %291
      %v294 = vlaneseq
      %v295 = vshrl.u32 %v294, 7
      %v296 = vsub.s32 2, %v295
      %v297 = vrot.slane %v243, %v296
      %v298 = vmul.f32 %v288, %v297
      %v299 = vmul.f32 %v292, %v297
      %v300 = vadd.f32 %v284, %v298
      %v301 = vadd.f32 %v285, %v299
      %v302 = vmul.f32 %v300, 2.0
      %v303 = vmul.f32 %v301, 2.0
      %v304 = vsub.f32 %v302, %v250
      %v305 = vsub.f32 %v303, %v253
      %v307 = vlaneseq
      %v308 = vshrl.u32 %v307, 7
      %v309 = vsub.s32 0, %v308
      %v310 = vrot.slane %v244, %v309
      %v312 = vsub.f32 %v304, %v310
      %v313 = vsub.f32 %v305, %v310
      %v314 = vmin.f32 %v312, 0.0
      %v315 = vmin.f32 %v313, 0.0
      %vm316 = vcmask 130048
      %317 = vst.msk [vmem:[%s239] sm:$0xff] %vm316, %v314
      %318 = vst.msk [vmem:[%s239 + $0x8] sm:$0xff] %vm316, %v315
      %s319 = smul.u32 2, %s19
      %p320 = scmp.lt.s32.totalorder %s18, 1
      %s321 = scalar_select %p320, %s18, 1
      %p322 = scmp.lt.s32.totalorder %s319, 1
      %s323 = scalar_select %p322, %s319, 1
      %s324 = smul.addr %s321, 2
      %s325 = sadd.s32 %s323, %s324
      %s326 = smul.addr %s325, 8
      %s327 = scalar_lea.vmem %s3, %s326
      // Predicated region
      $region33: #{point_transformer_block.3} parent=31 // pred_check
        %p328 = pneg %p126
      $region34: #{point_transformer_block.3} parent=31 // pred_check_branch
        %330 = sbr.rel (%p328) target = $region36
      $region35: #{point_transformer_block.3} parent=31 // pred_region
        %s331 = smul.u32 2, %s19
      $region36: #{point_transformer_block.3} parent=31 // pred_fallthru
        _
    $region32: #{point_transformer_block.3} parent=5 // pred_fallthru
      _
    %p332 = scmp.le.s32.totalorder 2, %s9
    // Predicated region
    $region37: #{point_transformer_block.3} parent=5 // pred_check
      %p333 = pneg %p332
    $region38: #{point_transformer_block.3} parent=5 // pred_check_branch
      %335 = sbr.rel (%p333) target = $region40
    $region39: #{point_transformer_block.3} parent=5 // pred_region
      %s336 = ssub.s32 %s9, 2
      // Predicated region
      $region41: #{point_transformer_block.3} parent=39 // pred_check
        %p337 = pneg %p132
      $region42: #{point_transformer_block.3} parent=39 // pred_check_branch
        %339 = sbr.rel (%p337) target = $region44
      $region43: #{point_transformer_block.3} parent=39 // pred_region
        %s340 = smul.u32 2, %s21
        %p341 = scmp.lt.s32.totalorder %s20, 1
        %s342 = scalar_select %p341, %s20, 1
        %p343 = scmp.lt.s32.totalorder %s340, 1
        %s344 = scalar_select %p343, %s340, 1
        %s345 = smul.addr %s342, 2
        %s346 = sadd.s32 %s344, %s345
        %s347 = smul.addr %s346, 8
        %s348 = scalar_lea.vmem %s3, %s347
      $region44: #{point_transformer_block.3} parent=39 // pred_fallthru
        _
    $region40: #{point_transformer_block.3} parent=5 // pred_fallthru
      _
  $region6: #{point_transformer_block.3} parent=0 // loop_footer
    %s13 = sadd.s32 1, %s9
  $region7: #{point_transformer_block.3} parent=0 // loop_footer_branch
    %8 = sbr.rel target = $region3
  $region8: #{point_transformer_block.3} parent=0 // loop_exit
    _

// kernel: point_transformer_block.4
$region0: #{point_transformer_block.4}
  #allocation0 [shape = 'u32[]', space=smem, size = 0x4, offset = 0x4, fixed_abs, tag = 'smem constant byte address 0x4 - core index']
  #allocation1 [shape = 'u32[144,128]{1,0:T(1,128)}', space=vmem, size = 0x12000, scoped, tag = 'internal scratch']
  %s0 = inlined_call_operand.vmem [shape: f32[2,16,19], index: 0, kind: input, shape index: {}]
  %s1 = inlined_call_operand.vmem [shape: f32[19,32], index: 1, kind: input, shape index: {}]
  %s2 = inlined_call_operand.vmem [shape: f32[1,32], index: 2, kind: input, shape index: {}]
  %s3 = inlined_call_operand.vmem [shape: f32[19,96], index: 3, kind: input, shape index: {}]
  %s4 = inlined_call_operand.vmem [shape: f32[1,96], index: 4, kind: input, shape index: {}]
  %s5 = inlined_call_operand.vmem [shape: bf16[2,16,32], index: 5, kind: output, shape index: {0}]
  %s6 = inlined_call_operand.vmem [shape: bf16[2,16,96], index: 6, kind: output, shape index: {1}]
  %7 = xla_tuple %s5, %s6
  %s8 = sld [smem:[#allocation0]]
  $region61: #{point_transformer_block.4} parent=0
    _
  %s10 = ssub.s32 1, %s8
  %s11 = scalar_select 0, %s10, %s8
  loop: start=0, step=1, limit=4
  $region2: #{point_transformer_block.4} parent=0 // loop_pre_header
    _
  $region3: #{point_transformer_block.4} parent=0 // loop_header
    %s13 = sphi 0, %s17
    %p14 = scmp.ge.s32.totalorder %s13, 4
    %s20 = sphi 0, %s32
    %s21 = sphi 0, %s28
    %s22 = sphi 0, %s20
    %s23 = sphi 0, %s21
    %s24 = sphi 0, %s22
    %s25 = sphi 0, %s23
    %s37 = sphi 0, %s39
    %s40 = sphi 0, %s37
    %s41 = sphi 0, %s40
    %s57 = sphi 0, %s41
    %s61 = sphi 0, %s61
    %s63 = sphi 0, %s61
    %s64 = sphi 0, %s63
    %s78 = sphi 0, %s64
    %s82 = sphi 0, %s82
    %s84 = sphi 0, %s82
    %s85 = sphi 0, %s84
    %s99 = sphi 0, %s85
    %s103 = sphi 0, %s103
    %s105 = sphi 0, %s103
    %s106 = sphi 0, %s105
    %s120 = sphi 0, %s106
    %s124 = sphi 0, %s124
    %s126 = sphi 0, %s124
    %s127 = sphi 0, %s126
    %s141 = sphi 0, %s127
    %s149 = sphi 0, %s151
    %s152 = sphi 0, %s149
    %s153 = sphi 0, %s152
    %s169 = sphi 0, %s153
    %s177 = sphi 0, %s179
    %s180 = sphi 0, %s177
    %s181 = sphi 0, %s180
    %s197 = sphi 0, %s181
  $region4: #{point_transformer_block.4} parent=0 // loop_header_branch
    %16 = sbr.rel (%p14) target = $region8
  $region5: #{point_transformer_block.4} parent=0 // loop_body
    %s18 = ssub.s32 %s13, 1
    %s19 = ssub.s32 %s13, 2
    %s26 = sadd.s32 1, %s21
    %p27 = scmp.ge.s32.totalorder %s26, 1
    %s28 = scalar_select %p27, 0, %s26
    %s29 = sadd.s32 1, %s20
    %s30 = scalar_select %p27, %s29, %s20
    %p31 = scmp.ge.s32.totalorder %s30, 2
    %s32 = scalar_select %p31, 0, %s30
    %s33 = ssub.s32 %s20, %s32
    %s34 = ssub.s32 %s21, %s28
    %s35 = sor.u32 %s33, %s34
    %p36 = scmp.eq.s32.totalorder %s35, 0
    %s38 = sadd.s32 %s37, 1
    %s39 = scalar_select %p36, %s37, %s38
    %p42 = pneg %p36
    %p43 = scmp.eq.s32.totalorder %s13, 1
    %p44 = por %p42, %p43
    %p45 = scmp.ne.s32.totalorder %s37, %s40
    %p46 = scmp.eq.s32.totalorder %s13, 0
    %p47 = por %p45, %p46
    %p48 = scmp.ne.s32.totalorder %s37, %s40
    %p49 = scmp.eq.s32.totalorder %s18, 1
    %p50 = por %p48, %p49
    %p51 = scmp.ne.s32.totalorder %s40, %s41
    %p52 = scmp.eq.s32.totalorder %s18, 0
    %p53 = por %p51, %p52
    %p54 = scmp.ne.s32.totalorder %s40, %s41
    %p55 = scmp.eq.s32.totalorder %s19, 1
    %p56 = por %p54, %p55
    %p58 = scmp.ne.s32.totalorder %s41, %s57
    %p59 = scmp.eq.s32.totalorder %s19, 0
    %p60 = por %p58, %p59
    %s62 = sadd.s32 %s61, 1
    %p65 = scmp.eq.s32.totalorder %s13, 1
    %p66 = scmp.ne.s32.totalorder %s61, %s63
    %p67 = scmp.eq.s32.totalorder %s13, 0
    %p68 = por %p66, %p67
    %p69 = scmp.ne.s32.totalorder %s61, %s63
    %p70 = scmp.eq.s32.totalorder %s18, 1
    %p71 = por %p69, %p70
    %p72 = scmp.ne.s32.totalorder %s63, %s64
    %p73 = scmp.eq.s32.totalorder %s18, 0
    %p74 = por %p72, %p73
    %p75 = scmp.ne.s32.totalorder %s63, %s64
    %p76 = scmp.eq.s32.totalorder %s19, 1
    %p77 = por %p75, %p76
    %p79 = scmp.ne.s32.totalorder %s64, %s78
    %p80 = scmp.eq.s32.totalorder %s19, 0
    %p81 = por %p79, %p80
    %s83 = sadd.s32 %s82, 1
    %p86 = scmp.eq.s32.totalorder %s13, 1
    %p87 = scmp.ne.s32.totalorder %s82, %s84
    %p88 = scmp.eq.s32.totalorder %s13, 0
    %p89 = por %p87, %p88
    %p90 = scmp.ne.s32.totalorder %s82, %s84
    %p91 = scmp.eq.s32.totalorder %s18, 1
    %p92 = por %p90, %p91
    %p93 = scmp.ne.s32.totalorder %s84, %s85
    %p94 = scmp.eq.s32.totalorder %s18, 0
    %p95 = por %p93, %p94
    %p96 = scmp.ne.s32.totalorder %s84, %s85
    %p97 = scmp.eq.s32.totalorder %s19, 1
    %p98 = por %p96, %p97
    %p100 = scmp.ne.s32.totalorder %s85, %s99
    %p101 = scmp.eq.s32.totalorder %s19, 0
    %p102 = por %p100, %p101
    %s104 = sadd.s32 %s103, 1
    %p107 = scmp.eq.s32.totalorder %s13, 1
    %p108 = scmp.ne.s32.totalorder %s103, %s105
    %p109 = scmp.eq.s32.totalorder %s13, 0
    %p110 = por %p108, %p109
    %p111 = scmp.ne.s32.totalorder %s103, %s105
    %p112 = scmp.eq.s32.totalorder %s18, 1
    %p113 = por %p111, %p112
    %p114 = scmp.ne.s32.totalorder %s105, %s106
    %p115 = scmp.eq.s32.totalorder %s18, 0
    %p116 = por %p114, %p115
    %p117 = scmp.ne.s32.totalorder %s105, %s106
    %p118 = scmp.eq.s32.totalorder %s19, 1
    %p119 = por %p117, %p118
    %p121 = scmp.ne.s32.totalorder %s106, %s120
    %p122 = scmp.eq.s32.totalorder %s19, 0
    %p123 = por %p121, %p122
    %s125 = sadd.s32 %s124, 1
    %p128 = scmp.eq.s32.totalorder %s13, 1
    %p129 = scmp.ne.s32.totalorder %s124, %s126
    %p130 = scmp.eq.s32.totalorder %s13, 0
    %p131 = por %p129, %p130
    %p132 = scmp.ne.s32.totalorder %s124, %s126
    %p133 = scmp.eq.s32.totalorder %s18, 1
    %p134 = por %p132, %p133
    %p135 = scmp.ne.s32.totalorder %s126, %s127
    %p136 = scmp.eq.s32.totalorder %s18, 0
    %p137 = por %p135, %p136
    %p138 = scmp.ne.s32.totalorder %s126, %s127
    %p139 = scmp.eq.s32.totalorder %s19, 1
    %p140 = por %p138, %p139
    %p142 = scmp.ne.s32.totalorder %s127, %s141
    %p143 = scmp.eq.s32.totalorder %s19, 0
    %p144 = por %p142, %p143
    %s145 = ssub.s32 %s20, %s32
    %s146 = ssub.s32 %s21, %s28
    %s147 = sor.u32 %s145, %s146
    %p148 = scmp.eq.s32.totalorder %s147, 0
    %s150 = sadd.s32 %s149, 1
    %s151 = scalar_select %p148, %s149, %s150
    %p154 = pneg %p148
    %p155 = scmp.eq.s32.totalorder %s13, 1
    %p156 = por %p154, %p155
    %p157 = scmp.ne.s32.totalorder %s149, %s152
    %p158 = scmp.eq.s32.totalorder %s13, 0
    %p159 = por %p157, %p158
    %p160 = scmp.ne.s32.totalorder %s149, %s152
    %p161 = scmp.eq.s32.totalorder %s18, 1
    %p162 = por %p160, %p161
    %p163 = scmp.ne.s32.totalorder %s152, %s153
    %p164 = scmp.eq.s32.totalorder %s18, 0
    %p165 = por %p163, %p164
    %p166 = scmp.ne.s32.totalorder %s152, %s153
    %p167 = scmp.eq.s32.totalorder %s19, 1
    %p168 = por %p166, %p167
    %p170 = scmp.ne.s32.totalorder %s153, %s169
    %p171 = scmp.eq.s32.totalorder %s19, 0
    %p172 = por %p170, %p171
    %s173 = ssub.s32 %s20, %s32
    %s174 = ssub.s32 %s21, %s28
    %s175 = sor.u32 %s173, %s174
    %p176 = scmp.eq.s32.totalorder %s175, 0
    %s178 = sadd.s32 %s177, 1
    %s179 = scalar_select %p176, %s177, %s178
    %p182 = pneg %p176
    %p183 = scmp.eq.s32.totalorder %s13, 1
    %p184 = por %p182, %p183
    %p185 = scmp.ne.s32.totalorder %s177, %s180
    %p186 = scmp.eq.s32.totalorder %s13, 0
    %p187 = por %p185, %p186
    %p188 = scmp.ne.s32.totalorder %s177, %s180
    %p189 = scmp.eq.s32.totalorder %s18, 1
    %p190 = por %p188, %p189
    %p191 = scmp.ne.s32.totalorder %s180, %s181
    %p192 = scmp.eq.s32.totalorder %s18, 0
    %p193 = por %p191, %p192
    %p194 = scmp.ne.s32.totalorder %s180, %s181
    %p195 = scmp.eq.s32.totalorder %s19, 1
    %p196 = por %p194, %p195
    %p198 = scmp.ne.s32.totalorder %s181, %s197
    %p199 = scmp.eq.s32.totalorder %s19, 0
    %p200 = por %p198, %p199
    %p201 = scmp.le.s32.totalorder 1, %s13
    %p202 = scmp.lt.s32.totalorder %s13, 3
    %p203 = pnand %p201, %p202
    %p204 = pneg %p203
    // Predicated region
    $region9: #{point_transformer_block.4} parent=5 // pred_check
      _
    $region10: #{point_transformer_block.4} parent=5 // pred_check_branch
      %206 = sbr.rel (%p203) target = $region12
    $region11: #{point_transformer_block.4} parent=5 // pred_region
      %s207 = ssub.s32 %s13, 1
      // Predicated region
      $region13: #{point_transformer_block.4} parent=11 // pred_check
        %p208 = pneg %p74
      $region14: #{point_transformer_block.4} parent=11 // pred_check_branch
        %210 = sbr.rel (%p208) target = $region16
      $region15: #{point_transformer_block.4} parent=11 // pred_region
        _
      $region16: #{point_transformer_block.4} parent=11 // pred_fallthru
        _
      // Predicated region
      $region17: #{point_transformer_block.4} parent=11 // pred_check
        %p211 = pneg %p95
      $region18: #{point_transformer_block.4} parent=11 // pred_check_branch
        %213 = sbr.rel (%p211) target = $region20
      $region19: #{point_transformer_block.4} parent=11 // pred_region
        _
      $region20: #{point_transformer_block.4} parent=11 // pred_fallthru
        _
      // Predicated region
      $region21: #{point_transformer_block.4} parent=11 // pred_check
        %p214 = pneg %p116
      $region22: #{point_transformer_block.4} parent=11 // pred_check_branch
        %216 = sbr.rel (%p214) target = $region24
      $region23: #{point_transformer_block.4} parent=11 // pred_region
        _
      $region24: #{point_transformer_block.4} parent=11 // pred_fallthru
        _
      // Predicated region
      $region25: #{point_transformer_block.4} parent=11 // pred_check
        %p217 = pneg %p137
      $region26: #{point_transformer_block.4} parent=11 // pred_check_branch
        %219 = sbr.rel (%p217) target = $region28
      $region27: #{point_transformer_block.4} parent=11 // pred_region
        _
      $region28: #{point_transformer_block.4} parent=11 // pred_fallthru
        _
    $region12: #{point_transformer_block.4} parent=5 // pred_fallthru
      _
    %p220 = scmp.lt.s32.totalorder %s13, 2
    // Predicated region
    $region29: #{point_transformer_block.4} parent=5 // pred_check
      %p221 = pneg %p220
    $region30: #{point_transformer_block.4} parent=5 // pred_check_branch
      %223 = sbr.rel (%p221) target = $region32
    $region31: #{point_transformer_block.4} parent=5 // pred_region
      // Predicated region
      $region33: #{point_transformer_block.4} parent=31 // pred_check
        %p224 = pneg %p47
      $region34: #{point_transformer_block.4} parent=31 // pred_check_branch
        %226 = sbr.rel (%p224) target = $region36
      $region35: #{point_transformer_block.4} parent=31 // pred_region
        %s227 = smul.u32 2, %s21
        %p228 = scmp.lt.s32.totalorder %s20, 1
        %s229 = scalar_select %p228, %s20, 1
        %p230 = scmp.lt.s32.totalorder %s227, 1
        %s231 = scalar_select %p230, %s227, 1
        %s232 = smul.addr %s229, 2
        %s233 = sadd.s32 %s231, %s232
        %s234 = smul.addr %s233, 8
        %s235 = scalar_lea.vmem %s0, %s234
        %s236 = smul.u32 2, %s21
      $region36: #{point_transformer_block.4} parent=31 // pred_fallthru
        _
    $region32: #{point_transformer_block.4} parent=5 // pred_fallthru
      _
    %p237 = scmp.le.s32.totalorder 1, %s13
    %p238 = scmp.lt.s32.totalorder %s13, 3
    %p239 = pnand %p237, %p238
    %p240 = pneg %p239
    // Predicated region
    $region37: #{point_transformer_block.4} parent=5 // pred_check
      _
    $region38: #{point_transformer_block.4} parent=5 // pred_check_branch
      %242 = sbr.rel (%p239) target = $region40
    $region39: #{point_transformer_block.4} parent=5 // pred_region
      %s243 = ssub.s32 %s13, 1
      %s244 = smul.u32 2, %s23
      %p245 = scmp.lt.s32.totalorder %s22, 1
      %s246 = scalar_select %p245, %s22, 1
      %p247 = scmp.lt.s32.totalorder %s244, 1
      %s248 = scalar_select %p247, %s244, 1
      %s249 = smul.addr %s246, 2
      %s250 = sadd.s32 %s248, %s249
      %s251 = smul.addr %s250, 8
      %s252 = scalar_lea.vmem %s0, %s251
      %p253 = pneg %p53
      %p254 = pneg %p50
      %p255 = pneg %p74
      %p256 = pneg %p71
      %p257 = pneg %p95
      %p258 = pneg %p92
      %p259 = pneg %p116
      %p260 = pneg %p113
      %p261 = pneg %p137
      %p262 = pneg %p134
      %p263 = pneg %p165
      %p264 = pneg %p162
      %s265 = smul.u32 2, %s23
      %p266 = scmp.lt.s32.totalorder %s22, 1
      %s267 = scalar_select %p266, %s22, 1
      %p268 = scmp.lt.s32.totalorder %s265, 1
      %s269 = scalar_select %p268, %s265, 1
      %s270 = smul.addr %s267, 2
      %s271 = sadd.s32 %s269, %s270
      %s272 = smul.addr %s271, 4
      %s273 = scalar_lea.vmem %s5, %s272
      %p274 = pneg %p193
      %p275 = pneg %p190
      %s276 = smul.u32 2, %s23
      %p277 = scmp.lt.s32.totalorder %s22, 1
      %s278 = scalar_select %p277, %s22, 1
      %p279 = scmp.lt.s32.totalorder %s276, 1
      %s280 = scalar_select %p279, %s276, 1
      %s281 = smul.addr %s278, 2
      %s282 = sadd.s32 %s280, %s281
      %s283 = smul.addr %s282, 4
      %s284 = scalar_lea.vmem %s6, %s283
      %s285 = smul.u32 2, %s23
      %p286 = scmp.lt.s32.totalorder %s22, 1
      %s287 = scalar_select %p286, %s22, 1
      %p288 = scmp.lt.s32.totalorder %s285, 1
      %s289 = scalar_select %p288, %s285, 1
      %s290 = smul.addr %s287, 2
      %s291 = sadd.s32 %s289, %s290
      %s292 = smul.addr %s291, 8
      %s293 = scalar_lea.vmem %s0, %s292
      %s294 = smul.u32 2, %s23
      %s295 = smul.u32 2, %s23
      %p296 = scmp.lt.s32.totalorder %s22, 1
      %s297 = scalar_select %p296, %s22, 1
      %p298 = scmp.lt.s32.totalorder %s295, 1
      %s299 = scalar_select %p298, %s295, 1
      %s300 = smul.addr %s297, 2
      %s301 = sadd.s32 %s299, %s300
      %s302 = smul.addr %s301, 4
      %s303 = scalar_lea.vmem %s5, %s302
      %s304 = smul.u32 2, %s23
      %s305 = smul.u32 2, %s23
      %p306 = scmp.lt.s32.totalorder %s22, 1
      %s307 = scalar_select %p306, %s22, 1
      %p308 = scmp.lt.s32.totalorder %s305, 1
      %s309 = scalar_select %p308, %s305, 1
      %s310 = smul.addr %s307, 2
      %s311 = sadd.s32 %s309, %s310
      %s312 = smul.addr %s311, 4
      %s313 = scalar_lea.vmem %s6, %s312
      %s314 = smul.u32 2, %s23
      %v316 = vld [vmem:[%s293] sm:$0xff]
      %v317 = vld [vmem:[%s293 + $0x8] sm:$0xff]
      %v318 = vpack.c.bf16 %v317, %v316
      %v319 = vld [vmem:[%s1] sm:$0xff]
      %v320 = vld [vmem:[%s1 + $0x8] sm:$0xff]
      %v321 = vld [vmem:[%s1 + $0x10] sm:$0x7]
      %v322 = vpack.c.bf16 %v320, %v319
      %v323 = vpack.c.bf16 %v321, %v321
      %v324 = vld [vmem:[%s2] sm:$0x1]
      %v326 = vlaneseq
      %v327 = vshrl.u32 %v326, 7
      %v328 = vsub.s32 0, %v327
      %v329 = vrot.slane %v324, %v328
      %vm331 = vcmask 154624
      %v333 = vsel %vm331, %v318, 0
      %vm335 = vcmask 1040384
      %vm336 = vcmask 1041408
      %v337 = vsel %vm335, 4294967295, 65535
      %v338 = vsel %vm336, %v337, 0
      %v340 = vand.u32 %v323, %v338
      %342 = vmatprep.subr.bf16.mxu0 0
      %343 = vmatpush1.bf16.msra.mxu0 %v322
      %344 = vmatprep.subr.bf16.mxu0 0
      %345 = vmatpush1.bf16.msra.mxu0 %v340
      %346 = vmatprep.subr.bf16.mxu0 0
      %347 = vmatpush1.bf16.msra.mxu0 0
      %348 = vmatprep.subr.bf16.mxu0 0
      %349 = vmatpush1.bf16.msra.mxu0 0
      %350 = vmatprep.subr.bf16.mxu0 0
      %351 = vmatpush1.bf16.msra.mxu0 0
      %352 = vmatprep.subr.bf16.mxu0 0
      %353 = vmatpush1.bf16.msra.mxu0 0
      %354 = vmatprep.subr.bf16.mxu0 0
      %355 = vmatpush1.bf16.msra.mxu0 0
      %356 = vmatprep.subr.bf16.mxu0 0
      %357 = vmatpush1.bf16.msra.mxu0 0
      %358 = vmatprep.subr.bf16.mxu0 0
      %359 = vmatpush1.bf16.msra.mxu0 0
      %360 = vmatprep.subr.bf16.mxu0 0
      %361 = vmatpush1.bf16.msra.mxu0 0
      %362 = vmatprep.subr.bf16.mxu0 0
      %363 = vmatpush1.bf16.msra.mxu0 0
      %364 = vmatprep.subr.bf16.mxu0 0
      %365 = vmatpush1.bf16.msra.mxu0 0
      %366 = vmatprep.subr.bf16.mxu0 0
      %367 = vmatpush1.bf16.msra.mxu0 0
      %368 = vmatprep.subr.bf16.mxu0 0
      %369 = vmatpush1.bf16.msra.mxu0 0
      %370 = vmatprep.subr.bf16.mxu0 0
      %371 = vmatpush1.bf16.msra.mxu0 0
      %372 = vmatprep.subr.bf16.mxu0 0
      %373 = vmatpush1.bf16.msra.mxu0 0
      %374 = vmatprep.mubr.bf16.mxu0 0
      %375 = vmatmul.mubr.bf16.gmra.mrb[0].mxu0 %v333
      %v376 = vpop.f32.mrb[0].mxu0
      %v377 = vadd.f32 %v329, %v376
      %v378 = vpop.f32.mrb[0].mxu0
      %v379 = vpop.f32.mrb[0].mxu0
      %v380 = vadd.f32 %v329, %v379
      %v381 = vpop.f32.mrb[0].mxu0
      %382 = vdwg.mxu0
      %v383 = vld [vmem:[%s3] sm:$0xff]
      %v384 = vld [vmem:[%s3 + $0x8] sm:$0xff]
      %v385 = vld [vmem:[%s3 + $0x10] sm:$0x7]
      %v386 = vpack.c.bf16 %v384, %v383
      %v387 = vpack.c.bf16 %v385, %v385
      %v388 = vld [vmem:[%s4] sm:$0x1]
      %v390 = vlaneseq
      %v391 = vshrl.u32 %v390, 7
      %v392 = vsub.s32 0, %v391
      %v393 = vrot.slane %v388, %v392
      %v396 = vand.u32 %v387, %v338
      %398 = vmatprep.subr.bf16.mxu0 0
      %399 = vmatpush1.bf16.msra.mxu0 %v386
      %400 = vmatprep.subr.bf16.mxu0 0
      %401 = vmatpush1.bf16.msra.mxu0 %v396
      %402 = vmatprep.subr.bf16.mxu0 0
      %403 = vmatpush1.bf16.msra.mxu0 0
      %404 = vmatprep.subr.bf16.mxu0 0
      %405 = vmatpush1.bf16.msra.mxu0 0
      %406 = vmatprep.subr.bf16.mxu0 0
      %407 = vmatpush1.bf16.msra.mxu0 0
      %408 = vmatprep.subr.bf16.mxu0 0
      %409 = vmatpush1.bf16.msra.mxu0 0
      %410 = vmatprep.subr.bf16.mxu0 0
      %411 = vmatpush1.bf16.msra.mxu0 0
      %412 = vmatprep.subr.bf16.mxu0 0
      %413 = vmatpush1.bf16.msra.mxu0 0
      %414 = vmatprep.subr.bf16.mxu0 0
      %415 = vmatpush1.bf16.msra.mxu0 0
      %416 = vmatprep.subr.bf16.mxu0 0
      %417 = vmatpush1.bf16.msra.mxu0 0
      %418 = vmatprep.subr.bf16.mxu0 0
      %419 = vmatpush1.bf16.msra.mxu0 0
      %420 = vmatprep.subr.bf16.mxu0 0
      %421 = vmatpush1.bf16.msra.mxu0 0
      %422 = vmatprep.subr.bf16.mxu0 0
      %423 = vmatpush1.bf16.msra.mxu0 0
      %424 = vmatprep.subr.bf16.mxu0 0
      %425 = vmatpush1.bf16.msra.mxu0 0
      %426 = vmatprep.subr.bf16.mxu0 0
      %427 = vmatpush1.bf16.msra.mxu0 0
      %428 = vmatprep.subr.bf16.mxu0 0
      %429 = vmatpush1.bf16.msra.mxu0 0
      %430 = vmatprep.mubr.bf16.mxu0 0
      %431 = vmatmul.mubr.bf16.gmra.mrb[0].mxu0 %v333
      %v432 = vpop.f32.mrb[0].mxu0
      %v433 = vadd.f32 %v393, %v432
      %v434 = vpop.f32.mrb[0].mxu0
      %v435 = vpop.f32.mrb[0].mxu0
      %v436 = vadd.f32 %v393, %v435
      %v437 = vpop.f32.mrb[0].mxu0
      %438 = vdwg.mxu0
      %v439 = vpack.c.bf16 %v380, %v377
      %v441 = vunpack.c.l.b16 %v439
      %v442 = vunpack.c.h.b16 %v439
      %v443 = vpack.c.b16 %v441, %v441
      %v444 = vpack.c.b16 %v442, %v442
      %vm447 = vcmask 257024
      %448 = vst.msk [vmem:[%s303] sm:$0xf] %vm447, %v443
      %449 = vst.msk [vmem:[%s303 + $0x4] sm:$0xf] %vm447, %v444
      %v450 = vpack.c.bf16 %v436, %v433
      %v452 = vunpack.c.l.b16 %v450
      %v453 = vunpack.c.h.b16 %v450
      %v454 = vpack.c.b16 %v452, %v452
      %v455 = vpack.c.b16 %v453, %v453
      %vm458 = vcmask 781312
      %459 = vst.msk [vmem:[%s313] sm:$0xf] %vm458, %v454
      %460 = vst.msk [vmem:[%s313 + $0x4] sm:$0xf] %vm458, %v455
      %s461 = smul.u32 2, %s23
      %p462 = scmp.lt.s32.totalorder %s22, 1
      %s463 = scalar_select %p462, %s22, 1
      %p464 = scmp.lt.s32.totalorder %s461, 1
      %s465 = scalar_select %p464, %s461, 1
      %s466 = smul.addr %s463, 2
      %s467 = sadd.s32 %s465, %s466
      %s468 = smul.addr %s467, 4
      %s469 = scalar_lea.vmem %s5, %s468
      %s470 = smul.u32 2, %s23
      %p471 = scmp.lt.s32.totalorder %s22, 1
      %s472 = scalar_select %p471, %s22, 1
      %p473 = scmp.lt.s32.totalorder %s470, 1
      %s474 = scalar_select %p473, %s470, 1
      %s475 = smul.addr %s472, 2
      %s476 = sadd.s32 %s474, %s475
      %s477 = smul.addr %s476, 4
      %s478 = scalar_lea.vmem %s6, %s477
      // Predicated region
      $region41: #{point_transformer_block.4} parent=39 // pred_check
        %p479 = pneg %p162
      $region42: #{point_transformer_block.4} parent=39 // pred_check_branch
        %481 = sbr.rel (%p479) target = $region44
      $region43: #{point_transformer_block.4} parent=39 // pred_region
        %s482 = smul.u32 2, %s23
      $region44: #{point_transformer_block.4} parent=39 // pred_fallthru
        _
      // Predicated region
      $region45: #{point_transformer_block.4} parent=39 // pred_check
        %p483 = pneg %p190
      $region46: #{point_transformer_block.4} parent=39 // pred_check_branch
        %485 = sbr.rel (%p483) target = $region48
      $region47: #{point_transformer_block.4} parent=39 // pred_region
        %s486 = smul.u32 2, %s23
      $region48: #{point_transformer_block.4} parent=39 // pred_fallthru
        _
    $region40: #{point_transformer_block.4} parent=5 // pred_fallthru
      _
    %p487 = scmp.le.s32.totalorder 2, %s13
    // Predicated region
    $region49: #{point_transformer_block.4} parent=5 // pred_check
      %p488 = pneg %p487
    $region50: #{point_transformer_block.4} parent=5 // pred_check_branch
      %490 = sbr.rel (%p488) target = $region52
    $region51: #{point_transformer_block.4} parent=5 // pred_region
      %s491 = ssub.s32 %s13, 2
      // Predicated region
      $region53: #{point_transformer_block.4} parent=51 // pred_check
        %p492 = pneg %p168
      $region54: #{point_transformer_block.4} parent=51 // pred_check_branch
        %494 = sbr.rel (%p492) target = $region56
      $region55: #{point_transformer_block.4} parent=51 // pred_region
        %s495 = smul.u32 2, %s25
        %p496 = scmp.lt.s32.totalorder %s24, 1
        %s497 = scalar_select %p496, %s24, 1
        %p498 = scmp.lt.s32.totalorder %s495, 1
        %s499 = scalar_select %p498, %s495, 1
        %s500 = smul.addr %s497, 2
        %s501 = sadd.s32 %s499, %s500
        %s502 = smul.addr %s501, 4
        %s503 = scalar_lea.vmem %s5, %s502
      $region56: #{point_transformer_block.4} parent=51 // pred_fallthru
        _
      // Predicated region
      $region57: #{point_transformer_block.4} parent=51 // pred_check
        %p504 = pneg %p196
      $region58: #{point_transformer_block.4} parent=51 // pred_check_branch
        %506 = sbr.rel (%p504) target = $region60
      $region59: #{point_transformer_block.4} parent=51 // pred_region
        %s507 = smul.u32 2, %s25
        %p508 = scmp.lt.s32.totalorder %s24, 1
        %s509 = scalar_select %p508, %s24, 1
        %p510 = scmp.lt.s32.totalorder %s507, 1
        %s511 = scalar_select %p510, %s507, 1
        %s512 = smul.addr %s509, 2
        %s513 = sadd.s32 %s511, %s512
        %s514 = smul.addr %s513, 4
        %s515 = scalar_lea.vmem %s6, %s514
      $region60: #{point_transformer_block.4} parent=51 // pred_fallthru
        _
    $region52: #{point_transformer_block.4} parent=5 // pred_fallthru
      _
  $region6: #{point_transformer_block.4} parent=0 // loop_footer
    %s17 = sadd.s32 1, %s13
  $region7: #{point_transformer_block.4} parent=0 // loop_footer_branch
    %12 = sbr.rel target = $region3
  $region8: #{point_transformer_block.4} parent=0 // loop_exit
    _

// kernel: point_transformer_block.5
$region0: #{point_transformer_block.5}
  #allocation0 [shape = 'u32[]', space=smem, size = 0x4, offset = 0x4, fixed_abs, tag = 'smem constant byte address 0x4 - core index']
  #allocation1 [shape = 'u32[144,128]{1,0:T(1,128)}', space=vmem, size = 0x12000, scoped, tag = 'internal scratch']
  %s0 = inlined_call_operand.vmem [shape: bf16[2,16,32], index: 0, kind: input, shape index: {}]
  %s1 = inlined_call_operand.vmem [shape: bf16[2,16,96], index: 1, kind: input, shape index: {}]
  %s2 = inlined_call_operand.vmem [shape: f32[2,16,3], index: 2, kind: input, shape index: {}]
  %s3 = inlined_call_operand.vmem [shape: s32[2,16,8], index: 3, kind: input, shape index: {}]
  %s4 = inlined_call_operand.vmem [shape: f32[2,16,16], index: 4, kind: input, shape index: {}]
  %s5 = inlined_call_operand.vmem [shape: f32[3,32], index: 5, kind: input, shape index: {}]
  %s6 = inlined_call_operand.vmem [shape: f32[1,32], index: 6, kind: input, shape index: {}]
  %s7 = inlined_call_operand.vmem [shape: f32[32,32], index: 7, kind: input, shape index: {}]
  %s8 = inlined_call_operand.vmem [shape: f32[1,32], index: 8, kind: input, shape index: {}]
  %s9 = inlined_call_operand.vmem [shape: f32[32,32], index: 9, kind: input, shape index: {}]
  %s10 = inlined_call_operand.vmem [shape: f32[1,32], index: 10, kind: input, shape index: {}]
  %s11 = inlined_call_operand.vmem [shape: f32[32,32], index: 11, kind: input, shape index: {}]
  %s12 = inlined_call_operand.vmem [shape: f32[1,32], index: 12, kind: input, shape index: {}]
  %s13 = inlined_call_operand.vmem [shape: f32[32,16], index: 13, kind: input, shape index: {}]
  %s14 = inlined_call_operand.vmem [shape: f32[1,16], index: 14, kind: input, shape index: {}]
  %s15 = inlined_call_operand.hbm [shape: f32[2,16,16], index: 15, kind: output, shape index: {0}]
  %s16 = inlined_call_operand.vmem [shape: bf16[2,16,256], index: 16, kind: output, shape index: {1}]
  %17 = xla_tuple %s15, %s16
  %s18 = sld [smem:[#allocation0]]
  $region101: #{point_transformer_block.5} parent=0
    _
  %s20 = ssub.s32 1, %s18
  %s21 = scalar_select 0, %s20, %s18
  $region1: #{point_transformer_block.5} parent=0
    #allocation2 [shape = 'u8[16384]{0}', space=vmem, size = 0x4000, scoped, tag = 'output window, operand 0']
    #allocation3 [shape = 's32[2]{0}', space=sflag, size = 0x8, scoped, tag = 'scoped memory for point_transformer_block.5']
    %22 = vsyncpa [#allocation3], 0
    %s23 = scalar_lea.sflag [#allocation3], 1
    %24 = vsyncpa %s23, 0
    loop: start=0, step=1, limit=4
    $region2: #{point_transformer_block.5} parent=1 // loop_pre_header
      _
    $region3: #{point_transformer_block.5} parent=1 // loop_header
      %s26 = sphi 0, %s30
      %p27 = scmp.ge.s32.totalorder %s26, 4
      %s33 = sphi 0, %s45
      %s34 = sphi 0, %s41
      %s35 = sphi 0, %s33
      %s36 = sphi 0, %s34
      %s37 = sphi 0, %s35
      %s38 = sphi 0, %s36
      %s50 = sphi 0, %s52
      %s53 = sphi 0, %s50
      %s54 = sphi 0, %s53
      %s70 = sphi 0, %s54
      %s76 = sphi 0, %s78
      %s79 = sphi 0, %s76
      %s80 = sphi 0, %s79
      %s96 = sphi 0, %s80
      %s104 = sphi 0, %s106
      %s107 = sphi 0, %s104
      %s108 = sphi 0, %s107
      %s124 = sphi 0, %s108
      %s132 = sphi 0, %s134
      %s135 = sphi 0, %s132
      %s136 = sphi 0, %s135
      %s152 = sphi 0, %s136
      %s160 = sphi 0, %s162
      %s163 = sphi 0, %s160
      %s164 = sphi 0, %s163
      %s180 = sphi 0, %s164
      %s184 = sphi 0, %s184
      %s186 = sphi 0, %s184
      %s187 = sphi 0, %s186
      %s201 = sphi 0, %s187
      %s205 = sphi 0, %s205
      %s207 = sphi 0, %s205
      %s208 = sphi 0, %s207
      %s222 = sphi 0, %s208
      %s226 = sphi 0, %s226
      %s228 = sphi 0, %s226
      %s229 = sphi 0, %s228
      %s243 = sphi 0, %s229
      %s247 = sphi 0, %s247
      %s249 = sphi 0, %s247
      %s250 = sphi 0, %s249
      %s264 = sphi 0, %s250
      %s268 = sphi 0, %s268
      %s270 = sphi 0, %s268
      %s271 = sphi 0, %s270
      %s285 = sphi 0, %s271
      %s289 = sphi 0, %s289
      %s291 = sphi 0, %s289
      %s292 = sphi 0, %s291
      %s306 = sphi 0, %s292
      %s310 = sphi 0, %s310
      %s312 = sphi 0, %s310
      %s313 = sphi 0, %s312
      %s327 = sphi 0, %s313
      %s331 = sphi 0, %s331
      %s333 = sphi 0, %s331
      %s334 = sphi 0, %s333
      %s348 = sphi 0, %s334
      %s352 = sphi 0, %s352
      %s354 = sphi 0, %s352
      %s355 = sphi 0, %s354
      %s369 = sphi 0, %s355
      %s373 = sphi 0, %s373
      %s375 = sphi 0, %s373
      %s376 = sphi 0, %s375
      %s390 = sphi 0, %s376
      %s398 = sphi 0, %s400
      %s401 = sphi 0, %s398
      %s402 = sphi 0, %s401
      %s418 = sphi 0, %s402
      %s426 = sphi 0, %s428
      %s429 = sphi 0, %s426
      %s430 = sphi 0, %s429
      %s446 = sphi 0, %s430
    $region4: #{point_transformer_block.5} parent=1 // loop_header_branch
      %29 = sbr.rel (%p27) target = $region8
    $region5: #{point_transformer_block.5} parent=1 // loop_body
      %s31 = ssub.s32 %s26, 1
      %s32 = ssub.s32 %s26, 2
      %s39 = sadd.s32 1, %s34
      %p40 = scmp.ge.s32.totalorder %s39, 1
      %s41 = scalar_select %p40, 0, %s39
      %s42 = sadd.s32 1, %s33
      %s43 = scalar_select %p40, %s42, %s33
      %p44 = scmp.ge.s32.totalorder %s43, 2
      %s45 = scalar_select %p44, 0, %s43
      %s46 = ssub.s32 %s33, %s45
      %s47 = ssub.s32 %s34, %s41
      %s48 = sor.u32 %s46, %s47
      %p49 = scmp.eq.s32.totalorder %s48, 0
      %s51 = sadd.s32 %s50, 1
      %s52 = scalar_select %p49, %s50, %s51
      %p55 = pneg %p49
      %p56 = scmp.eq.s32.totalorder %s26, 1
      %p57 = por %p55, %p56
      %p58 = scmp.ne.s32.totalorder %s50, %s53
      %p59 = scmp.eq.s32.totalorder %s26, 0
      %p60 = por %p58, %p59
      %p61 = scmp.ne.s32.totalorder %s50, %s53
      %p62 = scmp.eq.s32.totalorder %s31, 1
      %p63 = por %p61, %p62
      %p64 = scmp.ne.s32.totalorder %s53, %s54
      %p65 = scmp.eq.s32.totalorder %s31, 0
      %p66 = por %p64, %p65
      %p67 = scmp.ne.s32.totalorder %s53, %s54
      %p68 = scmp.eq.s32.totalorder %s32, 1
      %p69 = por %p67, %p68
      %p71 = scmp.ne.s32.totalorder %s54, %s70
      %p72 = scmp.eq.s32.totalorder %s32, 0
      %p73 = por %p71, %p72
      %s74 = ssub.s32 %s33, %s45
      %p75 = scmp.eq.s32.totalorder %s74, 0
      %s77 = sadd.s32 %s76, 1
      %s78 = scalar_select %p75, %s76, %s77
      %p81 = pneg %p75
      %p82 = scmp.eq.s32.totalorder %s26, 1
      %p83 = por %p81, %p82
      %p84 = scmp.ne.s32.totalorder %s76, %s79
      %p85 = scmp.eq.s32.totalorder %s26, 0
      %p86 = por %p84, %p85
      %p87 = scmp.ne.s32.totalorder %s76, %s79
      %p88 = scmp.eq.s32.totalorder %s31, 1
      %p89 = por %p87, %p88
      %p90 = scmp.ne.s32.totalorder %s79, %s80
      %p91 = scmp.eq.s32.totalorder %s31, 0
      %p92 = por %p90, %p91
      %p93 = scmp.ne.s32.totalorder %s79, %s80
      %p94 = scmp.eq.s32.totalorder %s32, 1
      %p95 = por %p93, %p94
      %p97 = scmp.ne.s32.totalorder %s80, %s96
      %p98 = scmp.eq.s32.totalorder %s32, 0
      %p99 = por %p97, %p98
      %s100 = ssub.s32 %s33, %s45
      %s101 = ssub.s32 %s34, %s41
      %s102 = sor.u32 %s100, %s101
      %p103 = scmp.eq.s32.totalorder %s102, 0
      %s105 = sadd.s32 %s104, 1
      %s106 = scalar_select %p103, %s104, %s105
      %p109 = pneg %p103
      %p110 = scmp.eq.s32.totalorder %s26, 1
      %p111 = por %p109, %p110
      %p112 = scmp.ne.s32.totalorder %s104, %s107
      %p113 = scmp.eq.s32.totalorder %s26, 0
      %p114 = por %p112, %p113
      %p115 = scmp.ne.s32.totalorder %s104, %s107
      %p116 = scmp.eq.s32.totalorder %s31, 1
      %p117 = por %p115, %p116
      %p118 = scmp.ne.s32.totalorder %s107, %s108
      %p119 = scmp.eq.s32.totalorder %s31, 0
      %p120 = por %p118, %p119
      %p121 = scmp.ne.s32.totalorder %s107, %s108
      %p122 = scmp.eq.s32.totalorder %s32, 1
      %p123 = por %p121, %p122
      %p125 = scmp.ne.s32.totalorder %s108, %s124
      %p126 = scmp.eq.s32.totalorder %s32, 0
      %p127 = por %p125, %p126
      %s128 = ssub.s32 %s33, %s45
      %s129 = ssub.s32 %s34, %s41
      %s130 = sor.u32 %s128, %s129
      %p131 = scmp.eq.s32.totalorder %s130, 0
      %s133 = sadd.s32 %s132, 1
      %s134 = scalar_select %p131, %s132, %s133
      %p137 = pneg %p131
      %p138 = scmp.eq.s32.totalorder %s26, 1
      %p139 = por %p137, %p138
      %p140 = scmp.ne.s32.totalorder %s132, %s135
      %p141 = scmp.eq.s32.totalorder %s26, 0
      %p142 = por %p140, %p141
      %p143 = scmp.ne.s32.totalorder %s132, %s135
      %p144 = scmp.eq.s32.totalorder %s31, 1
      %p145 = por %p143, %p144
      %p146 = scmp.ne.s32.totalorder %s135, %s136
      %p147 = scmp.eq.s32.totalorder %s31, 0
      %p148 = por %p146, %p147
      %p149 = scmp.ne.s32.totalorder %s135, %s136
      %p150 = scmp.eq.s32.totalorder %s32, 1
      %p151 = por %p149, %p150
      %p153 = scmp.ne.s32.totalorder %s136, %s152
      %p154 = scmp.eq.s32.totalorder %s32, 0
      %p155 = por %p153, %p154
      %s156 = ssub.s32 %s33, %s45
      %s157 = ssub.s32 %s34, %s41
      %s158 = sor.u32 %s156, %s157
      %p159 = scmp.eq.s32.totalorder %s158, 0
      %s161 = sadd.s32 %s160, 1
      %s162 = scalar_select %p159, %s160, %s161
      %p165 = pneg %p159
      %p166 = scmp.eq.s32.totalorder %s26, 1
      %p167 = por %p165, %p166
      %p168 = scmp.ne.s32.totalorder %s160, %s163
      %p169 = scmp.eq.s32.totalorder %s26, 0
      %p170 = por %p168, %p169
      %p171 = scmp.ne.s32.totalorder %s160, %s163
      %p172 = scmp.eq.s32.totalorder %s31, 1
      %p173 = por %p171, %p172
      %p174 = scmp.ne.s32.totalorder %s163, %s164
      %p175 = scmp.eq.s32.totalorder %s31, 0
      %p176 = por %p174, %p175
      %p177 = scmp.ne.s32.totalorder %s163, %s164
      %p178 = scmp.eq.s32.totalorder %s32, 1
      %p179 = por %p177, %p178
      %p181 = scmp.ne.s32.totalorder %s164, %s180
      %p182 = scmp.eq.s32.totalorder %s32, 0
      %p183 = por %p181, %p182
      %s185 = sadd.s32 %s184, 1
      %p188 = scmp.eq.s32.totalorder %s26, 1
      %p189 = scmp.ne.s32.totalorder %s184, %s186
      %p190 = scmp.eq.s32.totalorder %s26, 0
      %p191 = por %p189, %p190
      %p192 = scmp.ne.s32.totalorder %s184, %s186
      %p193 = scmp.eq.s32.totalorder %s31, 1
      %p194 = por %p192, %p193
      %p195 = scmp.ne.s32.totalorder %s186, %s187
      %p196 = scmp.eq.s32.totalorder %s31, 0
      %p197 = por %p195, %p196
      %p198 = scmp.ne.s32.totalorder %s186, %s187
      %p199 = scmp.eq.s32.totalorder %s32, 1
      %p200 = por %p198, %p199
      %p202 = scmp.ne.s32.totalorder %s187, %s201
      %p203 = scmp.eq.s32.totalorder %s32, 0
      %p204 = por %p202, %p203
      %s206 = sadd.s32 %s205, 1
      %p209 = scmp.eq.s32.totalorder %s26, 1
      %p210 = scmp.ne.s32.totalorder %s205, %s207
      %p211 = scmp.eq.s32.totalorder %s26, 0
      %p212 = por %p210, %p211
      %p213 = scmp.ne.s32.totalorder %s205, %s207
      %p214 = scmp.eq.s32.totalorder %s31, 1
      %p215 = por %p213, %p214
      %p216 = scmp.ne.s32.totalorder %s207, %s208
      %p217 = scmp.eq.s32.totalorder %s31, 0
      %p218 = por %p216, %p217
      %p219 = scmp.ne.s32.totalorder %s207, %s208
      %p220 = scmp.eq.s32.totalorder %s32, 1
      %p221 = por %p219, %p220
      %p223 = scmp.ne.s32.totalorder %s208, %s222
      %p224 = scmp.eq.s32.totalorder %s32, 0
      %p225 = por %p223, %p224
      %s227 = sadd.s32 %s226, 1
      %p230 = scmp.eq.s32.totalorder %s26, 1
      %p231 = scmp.ne.s32.totalorder %s226, %s228
      %p232 = scmp.eq.s32.totalorder %s26, 0
      %p233 = por %p231, %p232
      %p234 = scmp.ne.s32.totalorder %s226, %s228
      %p235 = scmp.eq.s32.totalorder %s31, 1
      %p236 = por %p234, %p235
      %p237 = scmp.ne.s32.totalorder %s228, %s229
      %p238 = scmp.eq.s32.totalorder %s31, 0
      %p239 = por %p237, %p238
      %p240 = scmp.ne.s32.totalorder %s228, %s229
      %p241 = scmp.eq.s32.totalorder %s32, 1
      %p242 = por %p240, %p241
      %p244 = scmp.ne.s32.totalorder %s229, %s243
      %p245 = scmp.eq.s32.totalorder %s32, 0
      %p246 = por %p244, %p245
      %s248 = sadd.s32 %s247, 1
      %p251 = scmp.eq.s32.totalorder %s26, 1
      %p252 = scmp.ne.s32.totalorder %s247, %s249
      %p253 = scmp.eq.s32.totalorder %s26, 0
      %p254 = por %p252, %p253
      %p255 = scmp.ne.s32.totalorder %s247, %s249
      %p256 = scmp.eq.s32.totalorder %s31, 1
      %p257 = por %p255, %p256
      %p258 = scmp.ne.s32.totalorder %s249, %s250
      %p259 = scmp.eq.s32.totalorder %s31, 0
      %p260 = por %p258, %p259
      %p261 = scmp.ne.s32.totalorder %s249, %s250
      %p262 = scmp.eq.s32.totalorder %s32, 1
      %p263 = por %p261, %p262
      %p265 = scmp.ne.s32.totalorder %s250, %s264
      %p266 = scmp.eq.s32.totalorder %s32, 0
      %p267 = por %p265, %p266
      %s269 = sadd.s32 %s268, 1
      %p272 = scmp.eq.s32.totalorder %s26, 1
      %p273 = scmp.ne.s32.totalorder %s268, %s270
      %p274 = scmp.eq.s32.totalorder %s26, 0
      %p275 = por %p273, %p274
      %p276 = scmp.ne.s32.totalorder %s268, %s270
      %p277 = scmp.eq.s32.totalorder %s31, 1
      %p278 = por %p276, %p277
      %p279 = scmp.ne.s32.totalorder %s270, %s271
      %p280 = scmp.eq.s32.totalorder %s31, 0
      %p281 = por %p279, %p280
      %p282 = scmp.ne.s32.totalorder %s270, %s271
      %p283 = scmp.eq.s32.totalorder %s32, 1
      %p284 = por %p282, %p283
      %p286 = scmp.ne.s32.totalorder %s271, %s285
      %p287 = scmp.eq.s32.totalorder %s32, 0
      %p288 = por %p286, %p287
      %s290 = sadd.s32 %s289, 1
      %p293 = scmp.eq.s32.totalorder %s26, 1
      %p294 = scmp.ne.s32.totalorder %s289, %s291
      %p295 = scmp.eq.s32.totalorder %s26, 0
      %p296 = por %p294, %p295
      %p297 = scmp.ne.s32.totalorder %s289, %s291
      %p298 = scmp.eq.s32.totalorder %s31, 1
      %p299 = por %p297, %p298
      %p300 = scmp.ne.s32.totalorder %s291, %s292
      %p301 = scmp.eq.s32.totalorder %s31, 0
      %p302 = por %p300, %p301
      %p303 = scmp.ne.s32.totalorder %s291, %s292
      %p304 = scmp.eq.s32.totalorder %s32, 1
      %p305 = por %p303, %p304
      %p307 = scmp.ne.s32.totalorder %s292, %s306
      %p308 = scmp.eq.s32.totalorder %s32, 0
      %p309 = por %p307, %p308
      %s311 = sadd.s32 %s310, 1
      %p314 = scmp.eq.s32.totalorder %s26, 1
      %p315 = scmp.ne.s32.totalorder %s310, %s312
      %p316 = scmp.eq.s32.totalorder %s26, 0
      %p317 = por %p315, %p316
      %p318 = scmp.ne.s32.totalorder %s310, %s312
      %p319 = scmp.eq.s32.totalorder %s31, 1
      %p320 = por %p318, %p319
      %p321 = scmp.ne.s32.totalorder %s312, %s313
      %p322 = scmp.eq.s32.totalorder %s31, 0
      %p323 = por %p321, %p322
      %p324 = scmp.ne.s32.totalorder %s312, %s313
      %p325 = scmp.eq.s32.totalorder %s32, 1
      %p326 = por %p324, %p325
      %p328 = scmp.ne.s32.totalorder %s313, %s327
      %p329 = scmp.eq.s32.totalorder %s32, 0
      %p330 = por %p328, %p329
      %s332 = sadd.s32 %s331, 1
      %p335 = scmp.eq.s32.totalorder %s26, 1
      %p336 = scmp.ne.s32.totalorder %s331, %s333
      %p337 = scmp.eq.s32.totalorder %s26, 0
      %p338 = por %p336, %p337
      %p339 = scmp.ne.s32.totalorder %s331, %s333
      %p340 = scmp.eq.s32.totalorder %s31, 1
      %p341 = por %p339, %p340
      %p342 = scmp.ne.s32.totalorder %s333, %s334
      %p343 = scmp.eq.s32.totalorder %s31, 0
      %p344 = por %p342, %p343
      %p345 = scmp.ne.s32.totalorder %s333, %s334
      %p346 = scmp.eq.s32.totalorder %s32, 1
      %p347 = por %p345, %p346
      %p349 = scmp.ne.s32.totalorder %s334, %s348
      %p350 = scmp.eq.s32.totalorder %s32, 0
      %p351 = por %p349, %p350
      %s353 = sadd.s32 %s352, 1
      %p356 = scmp.eq.s32.totalorder %s26, 1
      %p357 = scmp.ne.s32.totalorder %s352, %s354
      %p358 = scmp.eq.s32.totalorder %s26, 0
      %p359 = por %p357, %p358
      %p360 = scmp.ne.s32.totalorder %s352, %s354
      %p361 = scmp.eq.s32.totalorder %s31, 1
      %p362 = por %p360, %p361
      %p363 = scmp.ne.s32.totalorder %s354, %s355
      %p364 = scmp.eq.s32.totalorder %s31, 0
      %p365 = por %p363, %p364
      %p366 = scmp.ne.s32.totalorder %s354, %s355
      %p367 = scmp.eq.s32.totalorder %s32, 1
      %p368 = por %p366, %p367
      %p370 = scmp.ne.s32.totalorder %s355, %s369
      %p371 = scmp.eq.s32.totalorder %s32, 0
      %p372 = por %p370, %p371
      %s374 = sadd.s32 %s373, 1
      %p377 = scmp.eq.s32.totalorder %s26, 1
      %p378 = scmp.ne.s32.totalorder %s373, %s375
      %p379 = scmp.eq.s32.totalorder %s26, 0
      %p380 = por %p378, %p379
      %p381 = scmp.ne.s32.totalorder %s373, %s375
      %p382 = scmp.eq.s32.totalorder %s31, 1
      %p383 = por %p381, %p382
      %p384 = scmp.ne.s32.totalorder %s375, %s376
      %p385 = scmp.eq.s32.totalorder %s31, 0
      %p386 = por %p384, %p385
      %p387 = scmp.ne.s32.totalorder %s375, %s376
      %p388 = scmp.eq.s32.totalorder %s32, 1
      %p389 = por %p387, %p388
      %p391 = scmp.ne.s32.totalorder %s376, %s390
      %p392 = scmp.eq.s32.totalorder %s32, 0
      %p393 = por %p391, %p392
      %s394 = ssub.s32 %s33, %s45
      %s395 = ssub.s32 %s34, %s41
      %s396 = sor.u32 %s394, %s395
      %p397 = scmp.eq.s32.totalorder %s396, 0
      %s399 = sadd.s32 %s398, 1
      %s400 = scalar_select %p397, %s398, %s399
      %p403 = pneg %p397
      %p404 = scmp.eq.s32.totalorder %s26, 1
      %p405 = por %p403, %p404
      %p406 = scmp.ne.s32.totalorder %s398, %s401
      %p407 = scmp.eq.s32.totalorder %s26, 0
      %p408 = por %p406, %p407
      %p409 = scmp.ne.s32.totalorder %s398, %s401
      %p410 = scmp.eq.s32.totalorder %s31, 1
      %p411 = por %p409, %p410
      %p412 = scmp.ne.s32.totalorder %s401, %s402
      %p413 = scmp.eq.s32.totalorder %s31, 0
      %p414 = por %p412, %p413
      %p415 = scmp.ne.s32.totalorder %s401, %s402
      %p416 = scmp.eq.s32.totalorder %s32, 1
      %p417 = por %p415, %p416
      %p419 = scmp.ne.s32.totalorder %s402, %s418
      %p420 = scmp.eq.s32.totalorder %s32, 0
      %p421 = por %p419, %p420
      %s422 = ssub.s32 %s33, %s45
      %s423 = ssub.s32 %s34, %s41
      %s424 = sor.u32 %s422, %s423
      %p425 = scmp.eq.s32.totalorder %s424, 0
      %s427 = sadd.s32 %s426, 1
      %s428 = scalar_select %p425, %s426, %s427
      %p431 = pneg %p425
      %p432 = scmp.eq.s32.totalorder %s26, 1
      %p433 = por %p431, %p432
      %p434 = scmp.ne.s32.totalorder %s426, %s429
      %p435 = scmp.eq.s32.totalorder %s26, 0
      %p436 = por %p434, %p435
      %p437 = scmp.ne.s32.totalorder %s426, %s429
      %p438 = scmp.eq.s32.totalorder %s31, 1
      %p439 = por %p437, %p438
      %p440 = scmp.ne.s32.totalorder %s429, %s430
      %p441 = scmp.eq.s32.totalorder %s31, 0
      %p442 = por %p440, %p441
      %p443 = scmp.ne.s32.totalorder %s429, %s430
      %p444 = scmp.eq.s32.totalorder %s32, 1
      %p445 = por %p443, %p444
      %p447 = scmp.ne.s32.totalorder %s430, %s446
      %p448 = scmp.eq.s32.totalorder %s32, 0
      %p449 = por %p447, %p448
      %p450 = scmp.le.s32.totalorder 1, %s26
      %p451 = scmp.lt.s32.totalorder %s26, 3
      %p452 = pnand %p450, %p451
      %p453 = pneg %p452
      // Predicated region
      $region9: #{point_transformer_block.5} parent=5 // pred_check
        _
      $region10: #{point_transformer_block.5} parent=5 // pred_check_branch
        %455 = sbr.rel (%p452) target = $region12
      $region11: #{point_transformer_block.5} parent=5 // pred_region
        %s456 = ssub.s32 %s26, 1
        // Predicated region
        $region13: #{point_transformer_block.5} parent=11 // pred_check
          %p457 = pneg %p197
        $region14: #{point_transformer_block.5} parent=11 // pred_check_branch
          %459 = sbr.rel (%p457) target = $region16
        $region15: #{point_transformer_block.5} parent=11 // pred_region
          _
        $region16: #{point_transformer_block.5} parent=11 // pred_fallthru
          _
        // Predicated region
        $region17: #{point_transformer_block.5} parent=11 // pred_check
          %p460 = pneg %p218
        $region18: #{point_transformer_block.5} parent=11 // pred_check_branch
          %462 = sbr.rel (%p460) target = $region20
        $region19: #{point_transformer_block.5} parent=11 // pred_region
          _
        $region20: #{point_transformer_block.5} parent=11 // pred_fallthru
          _
        // Predicated region
        $region21: #{point_transformer_block.5} parent=11 // pred_check
          %p463 = pneg %p239
        $region22: #{point_transformer_block.5} parent=11 // pred_check_branch
          %465 = sbr.rel (%p463) target = $region24
        $region23: #{point_transformer_block.5} parent=11 // pred_region
          _
        $region24: #{point_transformer_block.5} parent=11 // pred_fallthru
          _
        // Predicated region
        $region25: #{point_transformer_block.5} parent=11 // pred_check
          %p466 = pneg %p260
        $region26: #{point_transformer_block.5} parent=11 // pred_check_branch
          %468 = sbr.rel (%p466) target = $region28
        $region27: #{point_transformer_block.5} parent=11 // pred_region
          _
        $region28: #{point_transformer_block.5} parent=11 // pred_fallthru
          _
        // Predicated region
        $region29: #{point_transformer_block.5} parent=11 // pred_check
          %p469 = pneg %p281
        $region30: #{point_transformer_block.5} parent=11 // pred_check_branch
          %471 = sbr.rel (%p469) target = $region32
        $region31: #{point_transformer_block.5} parent=11 // pred_region
          _
        $region32: #{point_transformer_block.5} parent=11 // pred_fallthru
          _
        // Predicated region
        $region33: #{point_transformer_block.5} parent=11 // pred_check
          %p472 = pneg %p302
        $region34: #{point_transformer_block.5} parent=11 // pred_check_branch
          %474 = sbr.rel (%p472) target = $region36
        $region35: #{point_transformer_block.5} parent=11 // pred_region
          _
        $region36: #{point_transformer_block.5} parent=11 // pred_fallthru
          _
        // Predicated region
        $region37: #{point_transformer_block.5} parent=11 // pred_check
          %p475 = pneg %p323
        $region38: #{point_transformer_block.5} parent=11 // pred_check_branch
          %477 = sbr.rel (%p475) target = $region40
        $region39: #{point_transformer_block.5} parent=11 // pred_region
          _
        $region40: #{point_transformer_block.5} parent=11 // pred_fallthru
          _
        // Predicated region
        $region41: #{point_transformer_block.5} parent=11 // pred_check
          %p478 = pneg %p344
        $region42: #{point_transformer_block.5} parent=11 // pred_check_branch
          %480 = sbr.rel (%p478) target = $region44
        $region43: #{point_transformer_block.5} parent=11 // pred_region
          _
        $region44: #{point_transformer_block.5} parent=11 // pred_fallthru
          _
        // Predicated region
        $region45: #{point_transformer_block.5} parent=11 // pred_check
          %p481 = pneg %p365
        $region46: #{point_transformer_block.5} parent=11 // pred_check_branch
          %483 = sbr.rel (%p481) target = $region48
        $region47: #{point_transformer_block.5} parent=11 // pred_region
          _
        $region48: #{point_transformer_block.5} parent=11 // pred_fallthru
          _
        // Predicated region
        $region49: #{point_transformer_block.5} parent=11 // pred_check
          %p484 = pneg %p386
        $region50: #{point_transformer_block.5} parent=11 // pred_check_branch
          %486 = sbr.rel (%p484) target = $region52
        $region51: #{point_transformer_block.5} parent=11 // pred_region
          _
        $region52: #{point_transformer_block.5} parent=11 // pred_fallthru
          _
      $region12: #{point_transformer_block.5} parent=5 // pred_fallthru
        _
      %p487 = scmp.lt.s32.totalorder %s26, 2
      // Predicated region
      $region53: #{point_transformer_block.5} parent=5 // pred_check
        %p488 = pneg %p487
      $region54: #{point_transformer_block.5} parent=5 // pred_check_branch
        %490 = sbr.rel (%p488) target = $region56
      $region55: #{point_transformer_block.5} parent=5 // pred_region
        // Predicated region
        $region57: #{point_transformer_block.5} parent=55 // pred_check
          %p491 = pneg %p60
        $region58: #{point_transformer_block.5} parent=55 // pred_check_branch
          %493 = sbr.rel (%p491) target = $region60
        $region59: #{point_transformer_block.5} parent=55 // pred_region
          %s494 = smul.u32 2, %s34
          %p495 = scmp.lt.s32.totalorder %s33, 1
          %s496 = scalar_select %p495, %s33, 1
          %p497 = scmp.lt.s32.totalorder %s494, 1
          %s498 = scalar_select %p497, %s494, 1
          %s499 = smul.addr %s496, 2
          %s500 = sadd.s32 %s498, %s499
          %s501 = smul.addr %s500, 4
          %s502 = scalar_lea.vmem %s0, %s501
          %s503 = smul.u32 2, %s34
        $region60: #{point_transformer_block.5} parent=55 // pred_fallthru
          _
        // Predicated region
        $region61: #{point_transformer_block.5} parent=55 // pred_check
          %p504 = pneg %p86
        $region62: #{point_transformer_block.5} parent=55 // pred_check_branch
          %506 = sbr.rel (%p504) target = $region64
        $region63: #{point_transformer_block.5} parent=55 // pred_region
          %p507 = scmp.lt.s32.totalorder %s33, 1
          %s508 = scalar_select %p507, %s33, 1
          %s509 = smul.addr %s508, 2
          %s510 = smul.addr %s509, 4
          %s511 = scalar_lea.vmem %s1, %s510
        $region64: #{point_transformer_block.5} parent=55 // pred_fallthru
          _
        // Predicated region
        $region65: #{point_transformer_block.5} parent=55 // pred_check
          %p512 = pneg %p114
        $region66: #{point_transformer_block.5} parent=55 // pred_check_branch
          %514 = sbr.rel (%p512) target = $region68
        $region67: #{point_transformer_block.5} parent=55 // pred_region
          %s515 = smul.u32 2, %s34
          %p516 = scmp.lt.s32.totalorder %s33, 1
          %s517 = scalar_select %p516, %s33, 1
          %p518 = scmp.lt.s32.totalorder %s515, 1
          %s519 = scalar_select %p518, %s515, 1
          %s520 = smul.addr %s517, 2
          %s521 = sadd.s32 %s519, %s520
          %s522 = smul.addr %s521, 8
          %s523 = scalar_lea.vmem %s2, %s522
          %s524 = smul.u32 2, %s34
        $region68: #{point_transformer_block.5} parent=55 // pred_fallthru
          _
        // Predicated region
        $region69: #{point_transformer_block.5} parent=55 // pred_check
          %p525 = pneg %p142
        $region70: #{point_transformer_block.5} parent=55 // pred_check_branch
          %527 = sbr.rel (%p525) target = $region72
        $region71: #{point_transformer_block.5} parent=55 // pred_region
          %s528 = smul.u32 2, %s34
          %p529 = scmp.lt.s32.totalorder %s33, 1
          %s530 = scalar_select %p529, %s33, 1
          %p531 = scmp.lt.s32.totalorder %s528, 1
          %s532 = scalar_select %p531, %s528, 1
          %s533 = smul.addr %s530, 2
          %s534 = sadd.s32 %s532, %s533
          %s535 = smul.addr %s534, 8
          %s536 = scalar_lea.vmem %s3, %s535
          %s537 = smul.u32 2, %s34
        $region72: #{point_transformer_block.5} parent=55 // pred_fallthru
          _
        // Predicated region
        $region73: #{point_transformer_block.5} parent=55 // pred_check
          %p538 = pneg %p170
        $region74: #{point_transformer_block.5} parent=55 // pred_check_branch
          %540 = sbr.rel (%p538) target = $region76
        $region75: #{point_transformer_block.5} parent=55 // pred_region
          %s541 = smul.u32 2, %s34
          %p542 = scmp.lt.s32.totalorder %s33, 1
          %s543 = scalar_select %p542, %s33, 1
          %p544 = scmp.lt.s32.totalorder %s541, 1
          %s545 = scalar_select %p544, %s541, 1
          %s546 = smul.addr %s543, 2
          %s547 = sadd.s32 %s545, %s546
          %s548 = smul.addr %s547, 8
          %s549 = scalar_lea.vmem %s4, %s548
          %s550 = smul.u32 2, %s34
        $region76: #{point_transformer_block.5} parent=55 // pred_fallthru
          _
      $region56: #{point_transformer_block.5} parent=5 // pred_fallthru
        _
      %p551 = scmp.le.s32.totalorder 1, %s26
      %p552 = scmp.lt.s32.totalorder %s26, 3
      %p553 = pnand %p551, %p552
      %p554 = pneg %p553
      // Predicated region
      $region77: #{point_transformer_block.5} parent=5 // pred_check
        _
      $region78: #{point_transformer_block.5} parent=5 // pred_check_branch
        %556 = sbr.rel (%p553) target = $region80
      $region79: #{point_transformer_block.5} parent=5 // pred_region
        %s557 = ssub.s32 %s26, 1
        %s558 = smul.u32 2, %s36
        %p559 = scmp.lt.s32.totalorder %s35, 1
        %s560 = scalar_select %p559, %s35, 1
        %p561 = scmp.lt.s32.totalorder %s558, 1
        %s562 = scalar_select %p561, %s558, 1
        %s563 = smul.addr %s560, 2
        %s564 = sadd.s32 %s562, %s563
        %s565 = smul.addr %s564, 4
        %s566 = scalar_lea.vmem %s0, %s565
        %p567 = pneg %p66
        %p568 = pneg %p63
        %p569 = scmp.lt.s32.totalorder %s35, 1
        %s570 = scalar_select %p569, %s35, 1
        %s571 = smul.addr %s570, 2
        %s572 = smul.addr %s571, 4
        %s573 = scalar_lea.vmem %s1, %s572
        %p574 = pneg %p92
        %p575 = pneg %p89
        %s576 = smul.u32 2, %s36
        %p577 = scmp.lt.s32.totalorder %s35, 1
        %s578 = scalar_select %p577, %s35, 1
        %p579 = scmp.lt.s32.totalorder %s576, 1
        %s580 = scalar_select %p579, %s576, 1
        %s581 = smul.addr %s578, 2
        %s582 = sadd.s32 %s580, %s581
        %s583 = smul.addr %s582, 8
        %s584 = scalar_lea.vmem %s2, %s583
        %p585 = pneg %p120
        %p586 = pneg %p117
        %s587 = smul.u32 2, %s36
        %p588 = scmp.lt.s32.totalorder %s35, 1
        %s589 = scalar_select %p588, %s35, 1
        %p590 = scmp.lt.s32.totalorder %s587, 1
        %s591 = scalar_select %p590, %s587, 1
        %s592 = smul.addr %s589, 2
        %s593 = sadd.s32 %s591, %s592
        %s594 = smul.addr %s593, 8
        %s595 = scalar_lea.vmem %s3, %s594
        %p596 = pneg %p148
        %p597 = pneg %p145
        %s598 = smul.u32 2, %s36
        %p599 = scmp.lt.s32.totalorder %s35, 1
        %s600 = scalar_select %p599, %s35, 1
        %p601 = scmp.lt.s32.totalorder %s598, 1
        %s602 = scalar_select %p601, %s598, 1
        %s603 = smul.addr %s600, 2
        %s604 = sadd.s32 %s602, %s603
        %s605 = smul.addr %s604, 8
        %s606 = scalar_lea.vmem %s4, %s605
        %p607 = pneg %p176
        %p608 = pneg %p173
        %p609 = pneg %p197
        %p610 = pneg %p194
        %p611 = pneg %p218
        %p612 = pneg %p215
        %p613 = pneg %p239
        %p614 = pneg %p236
        %p615 = pneg %p260
        %p616 = pneg %p257
        %p617 = pneg %p281
        %p618 = pneg %p278
        %p619 = pneg %p302
        %p620 = pneg %p299
        %p621 = pneg %p323
        %p622 = pneg %p320
        %p623 = pneg %p344
        %p624 = pneg %p341
        %p625 = pneg %p365
        %p626 = pneg %p362
        %p627 = pneg %p386
        %p628 = pneg %p383
        %p629 = pneg %p414
        %p630 = pneg %p411
        %s631 = sand.u32 %s401, 1
        %s632 = scalar_lea.sflag [#allocation3], %s631
        %s633 = sand.u32 %s401, 1
        %s634 = smul.addr %s633, 16
        %s635 = scalar_lea.vmem [#allocation2], %s634
        %p636 = pneg %p442
        %p637 = pneg %p439
        %s638 = smul.u32 2, %s36
        %p639 = scmp.lt.s32.totalorder %s35, 1
        %s640 = scalar_select %p639, %s35, 1
        %p641 = scmp.lt.s32.totalorder %s638, 1
        %s642 = scalar_select %p641, %s638, 1
        %s643 = smul.addr %s642, 2
        %s644 = smul.addr %s640, 4
        %s645 = sadd.s32 %s643, %s644
        %s646 = smul.addr %s645, 4
        %s647 = scalar_lea.vmem %s16, %s646
        %s648 = smul.u32 2, %s36
        %p649 = scmp.lt.s32.totalorder %s35, 1
        %s650 = scalar_select %p649, %s35, 1
        %p651 = scmp.lt.s32.totalorder %s648, 1
        %s652 = scalar_select %p651, %s648, 1
        %s653 = smul.addr %s650, 2
        %s654 = sadd.s32 %s652, %s653
        %s655 = smul.addr %s654, 4
        %s656 = scalar_lea.vmem %s0, %s655
        %s657 = smul.u32 2, %s36
        %p658 = scmp.lt.s32.totalorder %s35, 1
        %s659 = scalar_select %p658, %s35, 1
        %s660 = smul.addr %s659, 2
        %s661 = smul.addr %s660, 4
        %s662 = scalar_lea.vmem %s1, %s661
        %s663 = smul.u32 2, %s36
        %p664 = scmp.lt.s32.totalorder %s35, 1
        %s665 = scalar_select %p664, %s35, 1
        %p666 = scmp.lt.s32.totalorder %s663, 1
        %s667 = scalar_select %p666, %s663, 1
        %s668 = smul.addr %s665, 2
        %s669 = sadd.s32 %s667, %s668
        %s670 = smul.addr %s669, 8
        %s671 = scalar_lea.vmem %s2, %s670
        %s672 = smul.u32 2, %s36
        %s673 = smul.u32 2, %s36
        %p674 = scmp.lt.s32.totalorder %s35, 1
        %s675 = scalar_select %p674, %s35, 1
        %p676 = scmp.lt.s32.totalorder %s673, 1
        %s677 = scalar_select %p676, %s673, 1
        %s678 = smul.addr %s675, 2
        %s679 = sadd.s32 %s677, %s678
        %s680 = smul.addr %s679, 8
        %s681 = scalar_lea.vmem %s3, %s680
        %s682 = smul.u32 2, %s36
        %s683 = smul.u32 2, %s36
        %p684 = scmp.lt.s32.totalorder %s35, 1
        %s685 = scalar_select %p684, %s35, 1
        %p686 = scmp.lt.s32.totalorder %s683, 1
        %s687 = scalar_select %p686, %s683, 1
        %s688 = smul.addr %s685, 2
        %s689 = sadd.s32 %s687, %s688
        %s690 = smul.addr %s689, 8
        %s691 = scalar_lea.vmem %s4, %s690
        %s692 = smul.u32 2, %s36
        %s693 = smul.u32 2, %s36
        %s694 = smul.u32 2, %s36
        %p695 = scmp.lt.s32.totalorder %s35, 1
        %s696 = scalar_select %p695, %s35, 1
        %p697 = scmp.lt.s32.totalorder %s694, 1
        %s698 = scalar_select %p697, %s694, 1
        %s699 = smul.addr %s698, 2
        %s700 = smul.addr %s696, 4
        %s701 = sadd.s32 %s699, %s700
        %s702 = smul.addr %s701, 4
        %s703 = scalar_lea.vmem %s16, %s702
        %s704 = smul.u32 2, %s36
        %v706 = vld [vmem:[%s656] sm:$0xf]
        %v707 = vld [vmem:[%s656 + $0x4] sm:$0xf]
        %v708 = vunpack.c.l.bf16 %v706
        %v709 = vunpack.c.l.bf16 %v707
        %v710 = vld [vmem:[%s671] sm:$0xff]
        %v711 = vld [vmem:[%s671 + $0x8] sm:$0xff]
        %v712 = vld [vmem:[%s681] sm:$0xff]
        %v713 = vld [vmem:[%s681 + $0x8] sm:$0xff]
        %v714 = vld [vmem:[%s691] sm:$0xff]
        %v715 = vld [vmem:[%s691 + $0x8] sm:$0xff]
        %v716 = vld [vmem:[%s5] sm:$0x7]
        %718 = vset.pattern.permute.xlu0 0
        %719 = vperm.xlu0 %718, %v710
        %v720 = vpop.permute.xlu0 %719
        %723 = vset.pattern.permute.xlu0 0
        %724 = vperm.xlu0 %723, %v711
        %v725 = vpop.permute.xlu0 %724
        %v727 = vlaneseq
        %v728 = vshrl.u32 %v727, 7
        %v729 = vsub.s32 0, %v728
        %v730 = vrot.slane %v716, %v729
        %v731 = vmul.f32 %v720, %v730
        %v732 = vmul.f32 %v725, %v730
        %733 = vset.pattern.permute.xlu0 1
        %734 = vperm.xlu0 %733, %v710
        %v735 = vpop.permute.xlu0 %734
        %737 = vset.pattern.permute.xlu0 1
        %738 = vperm.xlu0 %737, %v711
        %v739 = vpop.permute.xlu0 %738
        %v741 = vlaneseq
        %v742 = vshrl.u32 %v741, 7
        %v743 = vsub.s32 1, %v742
        %v744 = vrot.slane %v716, %v743
        %v745 = vmul.f32 %v735, %v744
        %v746 = vmul.f32 %v739, %v744
        %v747 = vadd.f32 %v731, %v745
        %v748 = vadd.f32 %v732, %v746
        %749 = vset.pattern.permute.xlu0 2
        %750 = vperm.xlu0 %749, %v710
        %v751 = vpop.permute.xlu0 %750
        %753 = vset.pattern.permute.xlu0 2
        %754 = vperm.xlu0 %753, %v711
        %v755 = vpop.permute.xlu0 %754
        %v757 = vlaneseq
        %v758 = vshrl.u32 %v757, 7
        %v759 = vsub.s32 2, %v758
        %v760 = vrot.slane %v716, %v759
        %v761 = vmul.f32 %v751, %v760
        %v762 = vmul.f32 %v755, %v760
        %v763 = vadd.f32 %v747, %v761
        %v764 = vadd.f32 %v748, %v762
        %v765 = vld [vmem:[%s662] sm:$0xf]
        %v766 = vld [vmem:[%s662 + $0x4] sm:$0xf]
        %v767 = vlaneseq
        %v768 = vand.u32 %v767, 127
        %v769 = vlaneseq
        %v770 = vshrl.u32 %v769, 7
        %v771 = vsub.s32 0, %v770
        %v772 = vrot.slane %v712, %v771
        %774 = vbcast.lane.b32.xlu0 %v772, 256
        %v775 = vpop.permute.xlu0 %774
        %v776 = vlaneseq
        %v777 = vshrl.u32 %v776, 7
        %v778 = vsub.s32 1, %v777
        %v779 = vrot.slane %v712, %v778
        %781 = vbcast.lane.b32.xlu0 %v779, 256
        %v782 = vpop.permute.xlu0 %781
        %v783 = vlaneseq
        %v784 = vshrl.u32 %v783, 7
        %v785 = vsub.s32 2, %v784
        %v786 = vrot.slane %v712, %v785
        %788 = vbcast.lane.b32.xlu0 %v786, 256
        %v789 = vpop.permute.xlu0 %788
        %v790 = vlaneseq
        %v791 = vshrl.u32 %v790, 7
        %v792 = vsub.s32 3, %v791
        %v793 = vrot.slane %v712, %v792
        %795 = vbcast.lane.b32.xlu0 %v793, 256
        %v796 = vpop.permute.xlu0 %795
        %v797 = vlaneseq
        %v798 = vshrl.u32 %v797, 7
        %v799 = vsub.s32 4, %v798
        %v800 = vrot.slane %v712, %v799
        %802 = vbcast.lane.b32.xlu0 %v800, 256
        %v803 = vpop.permute.xlu0 %802
        %v804 = vlaneseq
        %v805 = vshrl.u32 %v804, 7
        %v806 = vsub.s32 5, %v805
        %v807 = vrot.slane %v712, %v806
        %809 = vbcast.lane.b32.xlu0 %v807, 256
        %v810 = vpop.permute.xlu0 %809
        %v811 = vlaneseq
        %v812 = vshrl.u32 %v811, 7
        %v813 = vsub.s32 6, %v812
        %v814 = vrot.slane %v712, %v813
        %816 = vbcast.lane.b32.xlu0 %v814, 256
        %v817 = vpop.permute.xlu0 %816
        %v818 = vlaneseq
        %v819 = vshrl.u32 %v818, 7
        %v820 = vsub.s32 7, %v819
        %v821 = vrot.slane %v712, %v820
        %823 = vbcast.lane.b32.xlu0 %v821, 256
        %v824 = vpop.permute.xlu0 %823
        %v825 = vlaneseq
        %v826 = vshrl.u32 %v825, 7
        %v827 = vsub.s32 0, %v826
        %v828 = vrot.slane %v713, %v827
        %830 = vbcast.lane.b32.xlu0 %v828, 256
        %v831 = vpop.permute.xlu0 %830
        %v832 = vlaneseq
        %v833 = vshrl.u32 %v832, 7
        %v834 = vsub.s32 1, %v833
        %v835 = vrot.slane %v713, %v834
        %837 = vbcast.lane.b32.xlu0 %v835, 256
        %v838 = vpop.permute.xlu0 %837
        %v839 = vlaneseq
        %v840 = vshrl.u32 %v839, 7
        %v841 = vsub.s32 2, %v840
        %v842 = vrot.slane %v713, %v841
        %844 = vbcast.lane.b32.xlu0 %v842, 256
        %v845 = vpop.permute.xlu0 %844
        %v846 = vlaneseq
        %v847 = vshrl.u32 %v846, 7
        %v848 = vsub.s32 3, %v847
        %v849 = vrot.slane %v713, %v848
        %851 = vbcast.lane.b32.xlu0 %v849, 256
        %v852 = vpop.permute.xlu0 %851
        %v853 = vlaneseq
        %v854 = vshrl.u32 %v853, 7
        %v855 = vsub.s32 4, %v854
        %v856 = vrot.slane %v713, %v855
        %858 = vbcast.lane.b32.xlu0 %v856, 256
        %v859 = vpop.permute.xlu0 %858
        %v860 = vlaneseq
        %v861 = vshrl.u32 %v860, 7
        %v862 = vsub.s32 5, %v861
        %v863 = vrot.slane %v713, %v862
        %865 = vbcast.lane.b32.xlu0 %v863, 256
        %v866 = vpop.permute.xlu0 %865
        %v867 = vlaneseq
        %v868 = vshrl.u32 %v867, 7
        %v869 = vsub.s32 6, %v868
        %v870 = vrot.slane %v713, %v869
        %872 = vbcast.lane.b32.xlu0 %v870, 256
        %v873 = vpop.permute.xlu0 %872
        %v874 = vlaneseq
        %v875 = vshrl.u32 %v874, 7
        %v876 = vsub.s32 7, %v875
        %v877 = vrot.slane %v713, %v876
        %879 = vbcast.lane.b32.xlu0 %v877, 256
        %v880 = vpop.permute.xlu0 %879
        %vm881 = vcmp.eq.s32.totalorder %v768, %v775
        %vm882 = vcmp.eq.s32.totalorder %v768, %v782
        %vm883 = vcmp.eq.s32.totalorder %v768, %v789
        %vm884 = vcmp.eq.s32.totalorder %v768, %v796
        %vm885 = vcmp.eq.s32.totalorder %v768, %v803
        %vm886 = vcmp.eq.s32.totalorder %v768, %v810
        %vm887 = vcmp.eq.s32.totalorder %v768, %v817
        %vm888 = vcmp.eq.s32.totalorder %v768, %v824
        %vm889 = vcmp.eq.s32.totalorder %v768, %v831
        %vm890 = vcmp.eq.s32.totalorder %v768, %v838
        %vm891 = vcmp.eq.s32.totalorder %v768, %v845
        %vm892 = vcmp.eq.s32.totalorder %v768, %v852
        %vm893 = vcmp.eq.s32.totalorder %v768, %v859
        %vm894 = vcmp.eq.s32.totalorder %v768, %v866
        %vm895 = vcmp.eq.s32.totalorder %v768, %v873
        %vm896 = vcmp.eq.s32.totalorder %v768, %v880
        %v897 = vsel %vm881, 1.0, 0.0
        %v898 = vsel %vm882, 1.0, 0.0
        %v899 = vsel %vm883, 1.0, 0.0
        %v900 = vsel %vm884, 1.0, 0.0
        %v901 = vsel %vm885, 1.0, 0.0
        %v902 = vsel %vm886, 1.0, 0.0
        %v903 = vsel %vm887, 1.0, 0.0
        %v904 = vsel %vm888, 1.0, 0.0
        %v905 = vsel %vm889, 1.0, 0.0
        %v906 = vsel %vm890, 1.0, 0.0
        %v907 = vsel %vm891, 1.0, 0.0
        %v908 = vsel %vm892, 1.0, 0.0
        %v909 = vsel %vm893, 1.0, 0.0
        %v910 = vsel %vm894, 1.0, 0.0
        %v911 = vsel %vm895, 1.0, 0.0
        %v912 = vsel %vm896, 1.0, 0.0
        %v913 = vpack.c.bf16 %v897, %v897
        %v914 = vpack.c.bf16 %v898, %v898
        %v915 = vpack.c.bf16 %v899, %v899
        %v916 = vpack.c.bf16 %v900, %v900
        %v917 = vpack.c.bf16 %v901, %v901
        %v918 = vpack.c.bf16 %v902, %v902
        %v919 = vpack.c.bf16 %v903, %v903
        %v920 = vpack.c.bf16 %v904, %v904
        %v921 = vpack.c.bf16 %v905, %v905
        %v922 = vpack.c.bf16 %v906, %v906
        %v923 = vpack.c.bf16 %v907, %v907
        %v924 = vpack.c.bf16 %v908, %v908
        %v925 = vpack.c.bf16 %v909, %v909
        %v926 = vpack.c.bf16 %v910, %v910
        %v927 = vpack.c.bf16 %v911, %v911
        %v928 = vpack.c.bf16 %v912, %v912
        %v945 = vunpack.c.l.b16 %v913
        %v946 = vunpack.c.l.b16 %v914
        %v947 = vunpack.c.l.b16 %v915
        %v948 = vunpack.c.l.b16 %v916
        %v949 = vunpack.c.l.b16 %v917
        %v950 = vunpack.c.l.b16 %v918
        %v951 = vunpack.c.l.b16 %v919
        %v952 = vunpack.c.l.b16 %v920
        %v953 = vunpack.c.l.b16 %v921
        %v954 = vunpack.c.l.b16 %v922
        %v955 = vunpack.c.l.b16 %v923
        %v956 = vunpack.c.l.b16 %v924
        %v957 = vunpack.c.l.b16 %v925
        %v958 = vunpack.c.l.b16 %v926
        %v959 = vunpack.c.l.b16 %v927
        %v960 = vunpack.c.l.b16 %v928
        %v961 = vpack.c.b16 %v946, %v945
        %v962 = vpack.c.b16 %v948, %v947
        %v963 = vpack.c.b16 %v950, %v949
        %v964 = vpack.c.b16 %v952, %v951
        %v965 = vpack.c.b16 %v954, %v953
        %v966 = vpack.c.b16 %v956, %v955
        %v967 = vpack.c.b16 %v958, %v957
        %v968 = vpack.c.b16 %v960, %v959
        %v971 = vunpack.c.l.b16 %v765
        %v972 = vunpack.c.l.b16 %v766
        %v973 = vpack.c.b16 %v972, %v971
        %vm975 = vcmask 130048
        %v977 = vsel %vm975, %v961, 0
        %v980 = vsel %vm975, %v962, 0
        %v983 = vsel %vm975, %v963, 0
        %v986 = vsel %vm975, %v964, 0
        %v989 = vsel %vm975, %v965, 0
        %v992 = vsel %vm975, %v966, 0
        %v995 = vsel %vm975, %v967, 0
        %v998 = vsel %vm975, %v968, 0
        %1000 = vmatprep.subr.bf16.mxu0 0
        %1001 = vmatpush1.bf16.msra.mxu0 %v973
        %1002 = vmatprep.subr.bf16.mxu0 0
        %1003 = vmatpush1.bf16.msra.mxu0 0
        %1004 = vmatprep.subr.bf16.mxu0 0
        %1005 = vmatpush1.bf16.msra.mxu0 0
        %1006 = vmatprep.subr.bf16.mxu0 0
        %1007 = vmatpush1.bf16.msra.mxu0 0
        %1008 = vmatprep.subr.bf16.mxu0 0
        %1009 = vmatpush1.bf16.msra.mxu0 0
        %1010 = vmatprep.subr.bf16.mxu0 0
        %1011 = vmatpush1.bf16.msra.mxu0 0
        %1012 = vmatprep.subr.bf16.mxu0 0
        %1013 = vmatpush1.bf16.msra.mxu0 0
        %1014 = vmatprep.subr.bf16.mxu0 0
        %1015 = vmatpush1.bf16.msra.mxu0 0
        %1016 = vmatprep.subr.bf16.mxu0 0
        %1017 = vmatpush1.bf16.msra.mxu0 0
        %1018 = vmatprep.subr.bf16.mxu0 0
        %1019 = vmatpush1.bf16.msra.mxu0 0
        %1020 = vmatprep.subr.bf16.mxu0 0
        %1021 = vmatpush1.bf16.msra.mxu0 0
        %1022 = vmatprep.subr.bf16.mxu0 0
        %1023 = vmatpush1.bf16.msra.mxu0 0
        %1024 = vmatprep.subr.bf16.mxu0 0
        %1025 = vmatpush1.bf16.msra.mxu0 0
        %1026 = vmatprep.subr.bf16.mxu0 0
        %1027 = vmatpush1.bf16.msra.mxu0 0
        %1028 = vmatprep.subr.bf16.mxu0 0
        %1029 = vmatpush1.bf16.msra.mxu0 0
        %1030 = vmatprep.subr.bf16.mxu0 0
        %1031 = vmatpush1.bf16.msra.mxu0 0
        %1032 = vmatprep.mubr.bf16.mxu0 0
        %1033 = vmatmul.mubr.bf16.gmra.mrb[0].mxu0 %v977
        %v1034 = vpop.f32.mrb[0].mxu0
        %v1035 = vadd.f32 0.0, %v1034
        %v1036 = vpop.f32.mrb[0].mxu0
        %v1037 = vpop.f32.mrb[0].mxu0
        %v1038 = vadd.f32 0.0, %v1037
        %v1039 = vpop.f32.mrb[0].mxu0
        %1040 = vmatprep.mubr.bf16.mxu0 0
        %1041 = vmatmul.mubr.bf16.gmra.mrb[0].mxu0 %v980
        %v1042 = vpop.f32.mrb[0].mxu0
        %v1043 = vadd.f32 0.0, %v1042
        %v1044 = vpop.f32.mrb[0].mxu0
        %v1045 = vpop.f32.mrb[0].mxu0
        %v1046 = vadd.f32 0.0, %v1045
        %v1047 = vpop.f32.mrb[0].mxu0
        %1048 = vmatprep.mubr.bf16.mxu0 0
        %1049 = vmatmul.mubr.bf16.gmra.mrb[0].mxu0 %v983
        %v1050 = vpop.f32.mrb[0].mxu0
        %v1051 = vadd.f32 0.0, %v1050
        %v1052 = vpop.f32.mrb[0].mxu0
        %v1053 = vpop.f32.mrb[0].mxu0
        %v1054 = vadd.f32 0.0, %v1053
        %v1055 = vpop.f32.mrb[0].mxu0
        %1056 = vmatprep.mubr.bf16.mxu0 0
        %1057 = vmatmul.mubr.bf16.gmra.mrb[0].mxu0 %v986
        %v1058 = vpop.f32.mrb[0].mxu0
        %v1059 = vadd.f32 0.0, %v1058
        %v1060 = vpop.f32.mrb[0].mxu0
        %v1061 = vpop.f32.mrb[0].mxu0
        %v1062 = vadd.f32 0.0, %v1061
        %v1063 = vpop.f32.mrb[0].mxu0
        %1064 = vmatprep.mubr.bf16.mxu0 0
        %1065 = vmatmul.mubr.bf16.gmra.mrb[0].mxu0 %v989
        %v1066 = vpop.f32.mrb[0].mxu0
        %v1067 = vadd.f32 0.0, %v1066
        %v1068 = vpop.f32.mrb[0].mxu0
        %v1069 = vpop.f32.mrb[0].mxu0
        %v1070 = vadd.f32 0.0, %v1069
        %v1071 = vpop.f32.mrb[0].mxu0
        %1072 = vmatprep.mubr.bf16.mxu0 0
        %1073 = vmatmul.mubr.bf16.gmra.mrb[0].mxu0 %v992
        %v1074 = vpop.f32.mrb[0].mxu0
        %v1075 = vadd.f32 0.0, %v1074
        %v1076 = vpop.f32.mrb[0].mxu0
        %v1077 = vpop.f32.mrb[0].mxu0
        %v1078 = vadd.f32 0.0, %v1077
        %v1079 = vpop.f32.mrb[0].mxu0
        %1080 = vmatprep.mubr.bf16.mxu0 0
        %1081 = vmatmul.mubr.bf16.gmra.mrb[0].mxu0 %v995
        %v1082 = vpop.f32.mrb[0].mxu0
        %v1083 = vadd.f32 0.0, %v1082
        %v1084 = vpop.f32.mrb[0].mxu0
        %v1085 = vpop.f32.mrb[0].mxu0
        %v1086 = vadd.f32 0.0, %v1085
        %v1087 = vpop.f32.mrb[0].mxu0
        %1088 = vmatprep.mubr.bf16.mxu0 0
        %1089 = vmatmul.mubr.bf16.gmra.mrb[0].mxu0 %v998
        %v1090 = vpop.f32.mrb[0].mxu0
        %v1091 = vadd.f32 0.0, %v1090
        %v1092 = vpop.f32.mrb[0].mxu0
        %v1093 = vpop.f32.mrb[0].mxu0
        %v1094 = vadd.f32 0.0, %v1093
        %v1095 = vpop.f32.mrb[0].mxu0
        %1096 = vdwg.mxu0
        %v1099 = vcombine.high %v763, %v763
        %v1101 = vunpack.c.l.s4 1966171168
        %v1102 = vunpack.c.0.s8 %v1101
        %v1103 = vlaneseq
        %v1104 = vshrl.u32 %v1103, 7
        %v1105 = vsub.s32 %v1102, %v1104
        %v1106 = vrot.slane %v763, %v1105
        %v1108 = vunpack.c.l.s4 1966171168
        %v1109 = vunpack.c.0.s8 %v1108
        %v1110 = vlaneseq
        %v1111 = vshrl.u32 %v1110, 7
        %v1112 = vsub.s32 %v1109, %v1111
        %v1113 = vrot.slane %v1099, %v1112
        %v1114 = vcombine.high %v1106, %v1106
        %v1115 = vcombine.high %v1113, %v1113
        %v1117 = vunpack.c.l.s4 1966171168
        %v1118 = vunpack.c.0.s8 %v1117
        %v1119 = vlaneseq
        %v1120 = vshrl.u32 %v1119, 7
        %v1121 = vsub.s32 %v1118, %v1120
        %v1122 = vrot.slane %v1106, %v1121
        %v1124 = vunpack.c.l.s4 1966171168
        %v1125 = vunpack.c.0.s8 %v1124
        %v1126 = vlaneseq
        %v1127 = vshrl.u32 %v1126, 7
        %v1128 = vsub.s32 %v1125, %v1127
        %v1129 = vrot.slane %v1113, %v1128
        %v1131 = vunpack.c.l.s4 1966171168
        %v1132 = vunpack.c.0.s8 %v1131
        %v1133 = vlaneseq
        %v1134 = vshrl.u32 %v1133, 7
        %v1135 = vsub.s32 %v1132, %v1134
        %v1136 = vrot.slane %v1114, %v1135
        %v1138 = vunpack.c.l.s4 1966171168
        %v1139 = vunpack.c.0.s8 %v1138
        %v1140 = vlaneseq
        %v1141 = vshrl.u32 %v1140, 7
        %v1142 = vsub.s32 %v1139, %v1141
        %v1143 = vrot.slane %v1115, %v1142
        %v1144 = vcombine.high %v1122, %v1122
        %v1145 = vcombine.high %v1129, %v1129
        %v1146 = vcombine.high %v1136, %v1136
        %v1147 = vcombine.high %v1143, %v1143
        %v1148 = vcombine.high %v764, %v764
        %v1150 = vunpack.c.l.s4 1966171168
        %v1151 = vunpack.c.0.s8 %v1150
        %v1152 = vlaneseq
        %v1153 = vshrl.u32 %v1152, 7
        %v1154 = vsub.s32 %v1151, %v1153
        %v1155 = vrot.slane %v764, %v1154
        %v1157 = vunpack.c.l.s4 1966171168
        %v1158 = vunpack.c.0.s8 %v1157
        %v1159 = vlaneseq
        %v1160 = vshrl.u32 %v1159, 7
        %v1161 = vsub.s32 %v1158, %v1160
        %v1162 = vrot.slane %v1148, %v1161
        %v1163 = vcombine.high %v1155, %v1155
        %v1164 = vcombine.high %v1162, %v1162
        %v1166 = vunpack.c.l.s4 1966171168
        %v1167 = vunpack.c.0.s8 %v1166
        %v1168 = vlaneseq
        %v1169 = vshrl.u32 %v1168, 7
        %v1170 = vsub.s32 %v1167, %v1169
        %v1171 = vrot.slane %v1155, %v1170
        %v1173 = vunpack.c.l.s4 1966171168
        %v1174 = vunpack.c.0.s8 %v1173
        %v1175 = vlaneseq
        %v1176 = vshrl.u32 %v1175, 7
        %v1177 = vsub.s32 %v1174, %v1176
        %v1178 = vrot.slane %v1162, %v1177
        %v1180 = vunpack.c.l.s4 1966171168
        %v1181 = vunpack.c.0.s8 %v1180
        %v1182 = vlaneseq
        %v1183 = vshrl.u32 %v1182, 7
        %v1184 = vsub.s32 %v1181, %v1183
        %v1185 = vrot.slane %v1163, %v1184
        %v1187 = vunpack.c.l.s4 1966171168
        %v1188 = vunpack.c.0.s8 %v1187
        %v1189 = vlaneseq
        %v1190 = vshrl.u32 %v1189, 7
        %v1191 = vsub.s32 %v1188, %v1190
        %v1192 = vrot.slane %v1164, %v1191
        %v1193 = vcombine.high %v1171, %v1171
        %v1194 = vcombine.high %v1178, %v1178
        %v1195 = vcombine.high %v1185, %v1185
        %v1196 = vcombine.high %v1192, %v1192
        %v1197 = vlaneseq
        %v1198 = vshrl.u32 %v1197, 7
        %v1199 = vsub.s32 0, %v1198
        %v1200 = vrot.slane %v1122, %v1199
        %v1201 = vlaneseq
        %v1202 = vshrl.u32 %v1201, 7
        %v1203 = vsub.s32 0, %v1202
        %v1204 = vrot.slane %v1136, %v1203
        %v1205 = vlaneseq
        %v1206 = vshrl.u32 %v1205, 7
        %v1207 = vsub.s32 0, %v1206
        %v1208 = vrot.slane %v1144, %v1207
        %v1209 = vlaneseq
        %v1210 = vshrl.u32 %v1209, 7
        %v1211 = vsub.s32 0, %v1210
        %v1212 = vrot.slane %v1146, %v1211
        %v1213 = vlaneseq
        %v1214 = vshrl.u32 %v1213, 7
        %v1215 = vsub.s32 0, %v1214
        %v1216 = vrot.slane %v1129, %v1215
        %v1217 = vlaneseq
        %v1218 = vshrl.u32 %v1217, 7
        %v1219 = vsub.s32 0, %v1218
        %v1220 = vrot.slane %v1143, %v1219
        %v1221 = vlaneseq
        %v1222 = vshrl.u32 %v1221, 7
        %v1223 = vsub.s32 0, %v1222
        %v1224 = vrot.slane %v1145, %v1223
        %v1225 = vlaneseq
        %v1226 = vshrl.u32 %v1225, 7
        %v1227 = vsub.s32 0, %v1226
        %v1228 = vrot.slane %v1147, %v1227
        %v1229 = vlaneseq
        %v1230 = vshrl.u32 %v1229, 7
        %v1231 = vsub.s32 0, %v1230
        %v1232 = vrot.slane %v1171, %v1231
        %v1233 = vlaneseq
        %v1234 = vshrl.u32 %v1233, 7
        %v1235 = vsub.s32 0, %v1234
        %v1236 = vrot.slane %v1185, %v1235
        %v1237 = vlaneseq
        %v1238 = vshrl.u32 %v1237, 7
        %v1239 = vsub.s32 0, %v1238
        %v1240 = vrot.slane %v1193, %v1239
        %v1241 = vlaneseq
        %v1242 = vshrl.u32 %v1241, 7
        %v1243 = vsub.s32 0, %v1242
        %v1244 = vrot.slane %v1195, %v1243
        %v1245 = vlaneseq
        %v1246 = vshrl.u32 %v1245, 7
        %v1247 = vsub.s32 0, %v1246
        %v1248 = vrot.slane %v1178, %v1247
        %v1249 = vlaneseq
        %v1250 = vshrl.u32 %v1249, 7
        %v1251 = vsub.s32 0, %v1250
        %v1252 = vrot.slane %v1192, %v1251
        %v1253 = vlaneseq
        %v1254 = vshrl.u32 %v1253, 7
        %v1255 = vsub.s32 0, %v1254
        %v1256 = vrot.slane %v1194, %v1255
        %v1257 = vlaneseq
        %v1258 = vshrl.u32 %v1257, 7
        %v1259 = vsub.s32 0, %v1258
        %v1260 = vrot.slane %v1196, %v1259
        %1293 = vrot.lane.b32.xlu0 %v1035, 64
        %v1294 = vpop.permute.xlu0 %1293
        %1295 = vrot.lane.b32.xlu0 %v1038, 64
        %v1296 = vpop.permute.xlu0 %1295
        %1297 = vrot.lane.b32.xlu0 %v1043, 64
        %v1298 = vpop.permute.xlu0 %1297
        %1299 = vrot.lane.b32.xlu0 %v1046, 64
        %v1300 = vpop.permute.xlu0 %1299
        %1301 = vrot.lane.b32.xlu0 %v1051, 64
        %v1302 = vpop.permute.xlu0 %1301
        %1303 = vrot.lane.b32.xlu0 %v1054, 64
        %v1304 = vpop.permute.xlu0 %1303
        %1305 = vrot.lane.b32.xlu0 %v1059, 64
        %v1306 = vpop.permute.xlu0 %1305
        %1307 = vrot.lane.b32.xlu0 %v1062, 64
        %v1308 = vpop.permute.xlu0 %1307
        %1309 = vrot.lane.b32.xlu0 %v1067, 64
        %v1310 = vpop.permute.xlu0 %1309
        %1311 = vrot.lane.b32.xlu0 %v1070, 64
        %v1312 = vpop.permute.xlu0 %1311
        %1313 = vrot.lane.b32.xlu0 %v1075, 64
        %v1314 = vpop.permute.xlu0 %1313
        %1315 = vrot.lane.b32.xlu0 %v1078, 64
        %v1316 = vpop.permute.xlu0 %1315
        %1317 = vrot.lane.b32.xlu0 %v1083, 64
        %v1318 = vpop.permute.xlu0 %1317
        %1319 = vrot.lane.b32.xlu0 %v1086, 64
        %v1320 = vpop.permute.xlu0 %1319
        %1321 = vrot.lane.b32.xlu0 %v1091, 64
        %v1322 = vpop.permute.xlu0 %1321
        %1323 = vrot.lane.b32.xlu0 %v1094, 64
        %v1324 = vpop.permute.xlu0 %1323
        %v1341 = vsub.f32 %v1200, %v1294
        %v1342 = vsub.f32 %v1204, %v1296
        %v1343 = vsub.f32 %v1208, %v1298
        %v1344 = vsub.f32 %v1212, %v1300
        %v1345 = vsub.f32 %v1216, %v1302
        %v1346 = vsub.f32 %v1220, %v1304
        %v1347 = vsub.f32 %v1224, %v1306
        %v1348 = vsub.f32 %v1228, %v1308
        %v1349 = vsub.f32 %v1232, %v1310
        %v1350 = vsub.f32 %v1236, %v1312
        %v1351 = vsub.f32 %v1240, %v1314
        %v1352 = vsub.f32 %v1244, %v1316
        %v1353 = vsub.f32 %v1248, %v1318
        %v1354 = vsub.f32 %v1252, %v1320
        %v1355 = vsub.f32 %v1256, %v1322
        %v1356 = vsub.f32 %v1260, %v1324
        %v1357 = vld [vmem:[%s6] sm:$0x1]
        %v1359 = vlaneseq
        %v1360 = vshrl.u32 %v1359, 7
        %v1361 = vsub.s32 0, %v1360
        %v1362 = vrot.slane %v1357, %v1361
        %v1364 = vadd.f32 %v1341, %v1362
        %v1365 = vadd.f32 %v1342, %v1362
        %v1366 = vadd.f32 %v1343, %v1362
        %v1367 = vadd.f32 %v1344, %v1362
        %v1368 = vadd.f32 %v1345, %v1362
        %v1369 = vadd.f32 %v1346, %v1362
        %v1370 = vadd.f32 %v1347, %v1362
        %v1371 = vadd.f32 %v1348, %v1362
        %v1372 = vadd.f32 %v1349, %v1362
        %v1373 = vadd.f32 %v1350, %v1362
        %v1374 = vadd.f32 %v1351, %v1362
        %v1375 = vadd.f32 %v1352, %v1362
        %v1376 = vadd.f32 %v1353, %v1362
        %v1377 = vadd.f32 %v1354, %v1362
        %v1378 = vadd.f32 %v1355, %v1362
        %v1379 = vadd.f32 %v1356, %v1362
        %v1380 = vmax.f32 %v1364, 0.0
        %v1381 = vmax.f32 %v1365, 0.0
        %v1382 = vmax.f32 %v1366, 0.0
        %v1383 = vmax.f32 %v1367, 0.0
        %v1384 = vmax.f32 %v1368, 0.0
        %v1385 = vmax.f32 %v1369, 0.0
        %v1386 = vmax.f32 %v1370, 0.0
        %v1387 = vmax.f32 %v1371, 0.0
        %v1388 = vmax.f32 %v1372, 0.0
        %v1389 = vmax.f32 %v1373, 0.0
        %v1390 = vmax.f32 %v1374, 0.0
        %v1391 = vmax.f32 %v1375, 0.0
        %v1392 = vmax.f32 %v1376, 0.0
        %v1393 = vmax.f32 %v1377, 0.0
        %v1394 = vmax.f32 %v1378, 0.0
        %v1395 = vmax.f32 %v1379, 0.0
        %v1396 = vpack.c.bf16 %v1381, %v1380
        %v1397 = vpack.c.bf16 %v1383, %v1382
        %v1398 = vpack.c.bf16 %v1385, %v1384
        %v1399 = vpack.c.bf16 %v1387, %v1386
        %v1400 = vpack.c.bf16 %v1389, %v1388
        %v1401 = vpack.c.bf16 %v1391, %v1390
        %v1402 = vpack.c.bf16 %v1393, %v1392
        %v1403 = vpack.c.bf16 %v1395, %v1394
        %v1404 = vld [vmem:[%s7] sm:$0xff]
        %v1405 = vld [vmem:[%s7 + $0x8] sm:$0xff]
        %v1406 = vld [vmem:[%s7 + $0x10] sm:$0xff]
        %v1407 = vld [vmem:[%s7 + $0x18] sm:$0xff]
        %v1408 = vpack.c.bf16 %v1405, %v1404
        %v1409 = vpack.c.bf16 %v1407, %v1406
        %v1410 = vld [vmem:[%s8] sm:$0x1]
        %v1412 = vlaneseq
        %v1413 = vshrl.u32 %v1412, 7
        %v1414 = vsub.s32 0, %v1413
        %v1415 = vrot.slane %v1410, %v1414
        %vm1417 = vcmask 261120
        %v1419 = vsel %vm1417, %v1396, 0
        %v1422 = vsel %vm1417, %v1397, 0
        %v1425 = vsel %vm1417, %v1398, 0
        %v1428 = vsel %vm1417, %v1399, 0
        %v1431 = vsel %vm1417, %v1400, 0
        %v1434 = vsel %vm1417, %v1401, 0
        %v1437 = vsel %vm1417, %v1402, 0
        %v1440 = vsel %vm1417, %v1403, 0
        %1442 = vmatprep.subr.bf16.mxu0 0
        %1443 = vmatpush1.bf16.msra.mxu0 %v1408
        %1444 = vmatprep.subr.bf16.mxu0 0
        %1445 = vmatpush1.bf16.msra.mxu0 %v1409
        %1446 = vmatprep.subr.bf16.mxu0 0
        %1447 = vmatpush1.bf16.msra.mxu0 0
        %1448 = vmatprep.subr.bf16.mxu0 0
        %1449 = vmatpush1.bf16.msra.mxu0 0
        %1450 = vmatprep.subr.bf16.mxu0 0
        %1451 = vmatpush1.bf16.msra.mxu0 0
        %1452 = vmatprep.subr.bf16.mxu0 0
        %1453 = vmatpush1.bf16.msra.mxu0 0
        %1454 = vmatprep.subr.bf16.mxu0 0
        %1455 = vmatpush1.bf16.msra.mxu0 0
        %1456 = vmatprep.subr.bf16.mxu0 0
        %1457 = vmatpush1.bf16.msra.mxu0 0
        %1458 = vmatprep.subr.bf16.mxu0 0
        %1459 = vmatpush1.bf16.msra.mxu0 0
        %1460 = vmatprep.subr.bf16.mxu0 0
        %1461 = vmatpush1.bf16.msra.mxu0 0
        %1462 = vmatprep.subr.bf16.mxu0 0
        %1463 = vmatpush1.bf16.msra.mxu0 0
        %1464 = vmatprep.subr.bf16.mxu0 0
        %1465 = vmatpush1.bf16.msra.mxu0 0
        %1466 = vmatprep.subr.bf16.mxu0 0
        %1467 = vmatpush1.bf16.msra.mxu0 0
        %1468 = vmatprep.subr.bf16.mxu0 0
        %1469 = vmatpush1.bf16.msra.mxu0 0
        %1470 = vmatprep.subr.bf16.mxu0 0
        %1471 = vmatpush1.bf16.msra.mxu0 0
        %1472 = vmatprep.subr.bf16.mxu0 0
        %1473 = vmatpush1.bf16.msra.mxu0 0
        %1474 = vmatprep.mubr.bf16.mxu0 0
        %1475 = vmatmul.mubr.bf16.gmra.mrb[0].mxu0 %v1419
        %v1476 = vpop.f32.mrb[0].mxu0
        %v1477 = vadd.f32 %v1415, %v1476
        %v1478 = vpop.f32.mrb[0].mxu0
        %v1479 = vpop.f32.mrb[0].mxu0
        %v1480 = vadd.f32 %v1415, %v1479
        %v1481 = vpop.f32.mrb[0].mxu0
        %1482 = vmatprep.mubr.bf16.mxu0 0
        %1483 = vmatmul.mubr.bf16.gmra.mrb[0].mxu0 %v1422
        %v1484 = vpop.f32.mrb[0].mxu0
        %v1485 = vadd.f32 %v1415, %v1484
        %v1486 = vpop.f32.mrb[0].mxu0
        %v1487 = vpop.f32.mrb[0].mxu0
        %v1488 = vadd.f32 %v1415, %v1487
        %v1489 = vpop.f32.mrb[0].mxu0
        %1490 = vmatprep.mubr.bf16.mxu0 0
        %1491 = vmatmul.mubr.bf16.gmra.mrb[0].mxu0 %v1425
        %v1492 = vpop.f32.mrb[0].mxu0
        %v1493 = vadd.f32 %v1415, %v1492
        %v1494 = vpop.f32.mrb[0].mxu0
        %v1495 = vpop.f32.mrb[0].mxu0
        %v1496 = vadd.f32 %v1415, %v1495
        %v1497 = vpop.f32.mrb[0].mxu0
        %1498 = vmatprep.mubr.bf16.mxu0 0
        %1499 = vmatmul.mubr.bf16.gmra.mrb[0].mxu0 %v1428
        %v1500 = vpop.f32.mrb[0].mxu0
        %v1501 = vadd.f32 %v1415, %v1500
        %v1502 = vpop.f32.mrb[0].mxu0
        %v1503 = vpop.f32.mrb[0].mxu0
        %v1504 = vadd.f32 %v1415, %v1503
        %v1505 = vpop.f32.mrb[0].mxu0
        %1506 = vmatprep.mubr.bf16.mxu0 0
        %1507 = vmatmul.mubr.bf16.gmra.mrb[0].mxu0 %v1431
        %v1508 = vpop.f32.mrb[0].mxu0
        %v1509 = vadd.f32 %v1415, %v1508
        %v1510 = vpop.f32.mrb[0].mxu0
        %v1511 = vpop.f32.mrb[0].mxu0
        %v1512 = vadd.f32 %v1415, %v1511
        %v1513 = vpop.f32.mrb[0].mxu0
        %1514 = vmatprep.mubr.bf16.mxu0 0
        %1515 = vmatmul.mubr.bf16.gmra.mrb[0].mxu0 %v1434
        %v1516 = vpop.f32.mrb[0].mxu0
        %v1517 = vadd.f32 %v1415, %v1516
        %v1518 = vpop.f32.mrb[0].mxu0
        %v1519 = vpop.f32.mrb[0].mxu0
        %v1520 = vadd.f32 %v1415, %v1519
        %v1521 = vpop.f32.mrb[0].mxu0
        %1522 = vmatprep.mubr.bf16.mxu0 0
        %1523 = vmatmul.mubr.bf16.gmra.mrb[0].mxu0 %v1437
        %v1524 = vpop.f32.mrb[0].mxu0
        %v1525 = vadd.f32 %v1415, %v1524
        %v1526 = vpop.f32.mrb[0].mxu0
        %v1527 = vpop.f32.mrb[0].mxu0
        %v1528 = vadd.f32 %v1415, %v1527
        %v1529 = vpop.f32.mrb[0].mxu0
        %1530 = vmatprep.mubr.bf16.mxu0 0
        %1531 = vmatmul.mubr.bf16.gmra.mrb[0].mxu0 %v1440
        %v1532 = vpop.f32.mrb[0].mxu0
        %v1533 = vadd.f32 %v1415, %v1532
        %v1534 = vpop.f32.mrb[0].mxu0
        %v1535 = vpop.f32.mrb[0].mxu0
        %v1536 = vadd.f32 %v1415, %v1535
        %v1537 = vpop.f32.mrb[0].mxu0
        %1538 = vdwg.mxu0
        %v1541 = vcombine.high %v708, %v708
        %v1543 = vunpack.c.l.s4 1966171168
        %v1544 = vunpack.c.0.s8 %v1543
        %v1545 = vlaneseq
        %v1546 = vshrl.u32 %v1545, 7
        %v1547 = vsub.s32 %v1544, %v1546
        %v1548 = vrot.slane %v708, %v1547
        %v1550 = vunpack.c.l.s4 1966171168
        %v1551 = vunpack.c.0.s8 %v1550
        %v1552 = vlaneseq
        %v1553 = vshrl.u32 %v1552, 7
        %v1554 = vsub.s32 %v1551, %v1553
        %v1555 = vrot.slane %v1541, %v1554
        %v1556 = vcombine.high %v1548, %v1548
        %v1557 = vcombine.high %v1555, %v1555
        %v1559 = vunpack.c.l.s4 1966171168
        %v1560 = vunpack.c.0.s8 %v1559
        %v1561 = vlaneseq
        %v1562 = vshrl.u32 %v1561, 7
        %v1563 = vsub.s32 %v1560, %v1562
        %v1564 = vrot.slane %v1548, %v1563
        %v1566 = vunpack.c.l.s4 1966171168
        %v1567 = vunpack.c.0.s8 %v1566
        %v1568 = vlaneseq
        %v1569 = vshrl.u32 %v1568, 7
        %v1570 = vsub.s32 %v1567, %v1569
        %v1571 = vrot.slane %v1555, %v1570
        %v1573 = vunpack.c.l.s4 1966171168
        %v1574 = vunpack.c.0.s8 %v1573
        %v1575 = vlaneseq
        %v1576 = vshrl.u32 %v1575, 7
        %v1577 = vsub.s32 %v1574, %v1576
        %v1578 = vrot.slane %v1556, %v1577
        %v1580 = vunpack.c.l.s4 1966171168
        %v1581 = vunpack.c.0.s8 %v1580
        %v1582 = vlaneseq
        %v1583 = vshrl.u32 %v1582, 7
        %v1584 = vsub.s32 %v1581, %v1583
        %v1585 = vrot.slane %v1557, %v1584
        %v1586 = vcombine.high %v1564, %v1564
        %v1587 = vcombine.high %v1571, %v1571
        %v1588 = vcombine.high %v1578, %v1578
        %v1589 = vcombine.high %v1585, %v1585
        %v1590 = vcombine.high %v709, %v709
        %v1592 = vunpack.c.l.s4 1966171168
        %v1593 = vunpack.c.0.s8 %v1592
        %v1594 = vlaneseq
        %v1595 = vshrl.u32 %v1594, 7
        %v1596 = vsub.s32 %v1593, %v1595
        %v1597 = vrot.slane %v709, %v1596
        %v1599 = vunpack.c.l.s4 1966171168
        %v1600 = vunpack.c.0.s8 %v1599
        %v1601 = vlaneseq
        %v1602 = vshrl.u32 %v1601, 7
        %v1603 = vsub.s32 %v1600, %v1602
        %v1604 = vrot.slane %v1590, %v1603
        %v1605 = vcombine.high %v1597, %v1597
        %v1606 = vcombine.high %v1604, %v1604
        %v1608 = vunpack.c.l.s4 1966171168
        %v1609 = vunpack.c.0.s8 %v1608
        %v1610 = vlaneseq
        %v1611 = vshrl.u32 %v1610, 7
        %v1612 = vsub.s32 %v1609, %v1611
        %v1613 = vrot.slane %v1597, %v1612
        %v1615 = vunpack.c.l.s4 1966171168
        %v1616 = vunpack.c.0.s8 %v1615
        %v1617 = vlaneseq
        %v1618 = vshrl.u32 %v1617, 7
        %v1619 = vsub.s32 %v1616, %v1618
        %v1620 = vrot.slane %v1604, %v1619
        %v1622 = vunpack.c.l.s4 1966171168
        %v1623 = vunpack.c.0.s8 %v1622
        %v1624 = vlaneseq
        %v1625 = vshrl.u32 %v1624, 7
        %v1626 = vsub.s32 %v1623, %v1625
        %v1627 = vrot.slane %v1605, %v1626
        %v1629 = vunpack.c.l.s4 1966171168
        %v1630 = vunpack.c.0.s8 %v1629
        %v1631 = vlaneseq
        %v1632 = vshrl.u32 %v1631, 7
        %v1633 = vsub.s32 %v1630, %v1632
        %v1634 = vrot.slane %v1606, %v1633
        %v1635 = vcombine.high %v1613, %v1613
        %v1636 = vcombine.high %v1620, %v1620
        %v1637 = vcombine.high %v1627, %v1627
        %v1638 = vcombine.high %v1634, %v1634
        %v1639 = vlaneseq
        %v1640 = vshrl.u32 %v1639, 7
        %v1641 = vsub.s32 0, %v1640
        %v1642 = vrot.slane %v1564, %v1641
        %v1643 = vlaneseq
        %v1644 = vshrl.u32 %v1643, 7
        %v1645 = vsub.s32 0, %v1644
        %v1646 = vrot.slane %v1578, %v1645
        %v1647 = vlaneseq
        %v1648 = vshrl.u32 %v1647, 7
        %v1649 = vsub.s32 0, %v1648
        %v1650 = vrot.slane %v1586, %v1649
        %v1651 = vlaneseq
        %v1652 = vshrl.u32 %v1651, 7
        %v1653 = vsub.s32 0, %v1652
        %v1654 = vrot.slane %v1588, %v1653
        %v1655 = vlaneseq
        %v1656 = vshrl.u32 %v1655, 7
        %v1657 = vsub.s32 0, %v1656
        %v1658 = vrot.slane %v1571, %v1657
        %v1659 = vlaneseq
        %v1660 = vshrl.u32 %v1659, 7
        %v1661 = vsub.s32 0, %v1660
        %v1662 = vrot.slane %v1585, %v1661
        %v1663 = vlaneseq
        %v1664 = vshrl.u32 %v1663, 7
        %v1665 = vsub.s32 0, %v1664
        %v1666 = vrot.slane %v1587, %v1665
        %v1667 = vlaneseq
        %v1668 = vshrl.u32 %v1667, 7
        %v1669 = vsub.s32 0, %v1668
        %v1670 = vrot.slane %v1589, %v1669
        %v1671 = vlaneseq
        %v1672 = vshrl.u32 %v1671, 7
        %v1673 = vsub.s32 0, %v1672
        %v1674 = vrot.slane %v1613, %v1673
        %v1675 = vlaneseq
        %v1676 = vshrl.u32 %v1675, 7
        %v1677 = vsub.s32 0, %v1676
        %v1678 = vrot.slane %v1627, %v1677
        %v1679 = vlaneseq
        %v1680 = vshrl.u32 %v1679, 7
        %v1681 = vsub.s32 0, %v1680
        %v1682 = vrot.slane %v1635, %v1681
        %v1683 = vlaneseq
        %v1684 = vshrl.u32 %v1683, 7
        %v1685 = vsub.s32 0, %v1684
        %v1686 = vrot.slane %v1637, %v1685
        %v1687 = vlaneseq
        %v1688 = vshrl.u32 %v1687, 7
        %v1689 = vsub.s32 0, %v1688
        %v1690 = vrot.slane %v1620, %v1689
        %v1691 = vlaneseq
        %v1692 = vshrl.u32 %v1691, 7
        %v1693 = vsub.s32 0, %v1692
        %v1694 = vrot.slane %v1634, %v1693
        %v1695 = vlaneseq
        %v1696 = vshrl.u32 %v1695, 7
        %v1697 = vsub.s32 0, %v1696
        %v1698 = vrot.slane %v1636, %v1697
        %v1699 = vlaneseq
        %v1700 = vshrl.u32 %v1699, 7
        %v1701 = vsub.s32 0, %v1700
        %v1702 = vrot.slane %v1638, %v1701
        %v1719 = vsub.f32 %v1642, %v1035
        %v1720 = vsub.f32 %v1646, %v1038
        %v1721 = vsub.f32 %v1650, %v1043
        %v1722 = vsub.f32 %v1654, %v1046
        %v1723 = vsub.f32 %v1658, %v1051
        %v1724 = vsub.f32 %v1662, %v1054
        %v1725 = vsub.f32 %v1666, %v1059
        %v1726 = vsub.f32 %v1670, %v1062
        %v1727 = vsub.f32 %v1674, %v1067
        %v1728 = vsub.f32 %v1678, %v1070
        %v1729 = vsub.f32 %v1682, %v1075
        %v1730 = vsub.f32 %v1686, %v1078
        %v1731 = vsub.f32 %v1690, %v1083
        %v1732 = vsub.f32 %v1694, %v1086
        %v1733 = vsub.f32 %v1698, %v1091
        %v1734 = vsub.f32 %v1702, %v1094
        %v1735 = vadd.f32 %v1719, %v1477
        %v1736 = vadd.f32 %v1720, %v1480
        %v1737 = vadd.f32 %v1721, %v1485
        %v1738 = vadd.f32 %v1722, %v1488
        %v1739 = vadd.f32 %v1723, %v1493
        %v1740 = vadd.f32 %v1724, %v1496
        %v1741 = vadd.f32 %v1725, %v1501
        %v1742 = vadd.f32 %v1726, %v1504
        %v1743 = vadd.f32 %v1727, %v1509
        %v1744 = vadd.f32 %v1728, %v1512
        %v1745 = vadd.f32 %v1729, %v1517
        %v1746 = vadd.f32 %v1730, %v1520
        %v1747 = vadd.f32 %v1731, %v1525
        %v1748 = vadd.f32 %v1732, %v1528
        %v1749 = vadd.f32 %v1733, %v1533
        %v1750 = vadd.f32 %v1734, %v1536
        %v1751 = vpack.c.bf16 %v1736, %v1735
        %v1752 = vpack.c.bf16 %v1738, %v1737
        %v1753 = vpack.c.bf16 %v1740, %v1739
        %v1754 = vpack.c.bf16 %v1742, %v1741
        %v1755 = vpack.c.bf16 %v1744, %v1743
        %v1756 = vpack.c.bf16 %v1746, %v1745
        %v1757 = vpack.c.bf16 %v1748, %v1747
        %v1758 = vpack.c.bf16 %v1750, %v1749
        %v1759 = vld [vmem:[%s9] sm:$0xff]
        %v1760 = vld [vmem:[%s9 + $0x8] sm:$0xff]
        %v1761 = vld [vmem:[%s9 + $0x10] sm:$0xff]
        %v1762 = vld [vmem:[%s9 + $0x18] sm:$0xff]
        %v1763 = vpack.c.bf16 %v1760, %v1759
        %v1764 = vpack.c.bf16 %v1762, %v1761
        %v1765 = vld [vmem:[%s10] sm:$0x1]
        %v1767 = vlaneseq
        %v1768 = vshrl.u32 %v1767, 7
        %v1769 = vsub.s32 0, %v1768
        %v1770 = vrot.slane %v1765, %v1769
        %v1773 = vsel %vm1417, %v1751, 0
        %v1776 = vsel %vm1417, %v1752, 0
        %v1779 = vsel %vm1417, %v1753, 0
        %v1782 = vsel %vm1417, %v1754, 0
        %v1785 = vsel %vm1417, %v1755, 0
        %v1788 = vsel %vm1417, %v1756, 0
        %v1791 = vsel %vm1417, %v1757, 0
        %v1794 = vsel %vm1417, %v1758, 0
        %1796 = vmatprep.subr.bf16.mxu0 0
        %1797 = vmatpush1.bf16.msra.mxu0 %v1763
        %1798 = vmatprep.subr.bf16.mxu0 0
        %1799 = vmatpush1.bf16.msra.mxu0 %v1764
        %1800 = vmatprep.subr.bf16.mxu0 0
        %1801 = vmatpush1.bf16.msra.mxu0 0
        %1802 = vmatprep.subr.bf16.mxu0 0
        %1803 = vmatpush1.bf16.msra.mxu0 0
        %1804 = vmatprep.subr.bf16.mxu0 0
        %1805 = vmatpush1.bf16.msra.mxu0 0
        %1806 = vmatprep.subr.bf16.mxu0 0
        %1807 = vmatpush1.bf16.msra.mxu0 0
        %1808 = vmatprep.subr.bf16.mxu0 0
        %1809 = vmatpush1.bf16.msra.mxu0 0
        %1810 = vmatprep.subr.bf16.mxu0 0
        %1811 = vmatpush1.bf16.msra.mxu0 0
        %1812 = vmatprep.subr.bf16.mxu0 0
        %1813 = vmatpush1.bf16.msra.mxu0 0
        %1814 = vmatprep.subr.bf16.mxu0 0
        %1815 = vmatpush1.bf16.msra.mxu0 0
        %1816 = vmatprep.subr.bf16.mxu0 0
        %1817 = vmatpush1.bf16.msra.mxu0 0
        %1818 = vmatprep.subr.bf16.mxu0 0
        %1819 = vmatpush1.bf16.msra.mxu0 0
        %1820 = vmatprep.subr.bf16.mxu0 0
        %1821 = vmatpush1.bf16.msra.mxu0 0
        %1822 = vmatprep.subr.bf16.mxu0 0
        %1823 = vmatpush1.bf16.msra.mxu0 0
        %1824 = vmatprep.subr.bf16.mxu0 0
        %1825 = vmatpush1.bf16.msra.mxu0 0
        %1826 = vmatprep.subr.bf16.mxu0 0
        %1827 = vmatpush1.bf16.msra.mxu0 0
        %1828 = vmatprep.mubr.bf16.mxu0 0
        %1829 = vmatmul.mubr.bf16.gmra.mrb[0].mxu0 %v1773
        %v1830 = vpop.f32.mrb[0].mxu0
        %v1831 = vadd.f32 %v1770, %v1830
        %v1832 = vpop.f32.mrb[0].mxu0
        %v1833 = vpop.f32.mrb[0].mxu0
        %v1834 = vadd.f32 %v1770, %v1833
        %v1835 = vpop.f32.mrb[0].mxu0
        %1836 = vmatprep.mubr.bf16.mxu0 0
        %1837 = vmatmul.mubr.bf16.gmra.mrb[0].mxu0 %v1776
        %v1838 = vpop.f32.mrb[0].mxu0
        %v1839 = vadd.f32 %v1770, %v1838
        %v1840 = vpop.f32.mrb[0].mxu0
        %v1841 = vpop.f32.mrb[0].mxu0
        %v1842 = vadd.f32 %v1770, %v1841
        %v1843 = vpop.f32.mrb[0].mxu0
        %1844 = vmatprep.mubr.bf16.mxu0 0
        %1845 = vmatmul.mubr.bf16.gmra.mrb[0].mxu0 %v1779
        %v1846 = vpop.f32.mrb[0].mxu0
        %v1847 = vadd.f32 %v1770, %v1846
        %v1848 = vpop.f32.mrb[0].mxu0
        %v1849 = vpop.f32.mrb[0].mxu0
        %v1850 = vadd.f32 %v1770, %v1849
        %v1851 = vpop.f32.mrb[0].mxu0
        %1852 = vmatprep.mubr.bf16.mxu0 0
        %1853 = vmatmul.mubr.bf16.gmra.mrb[0].mxu0 %v1782
        %v1854 = vpop.f32.mrb[0].mxu0
        %v1855 = vadd.f32 %v1770, %v1854
        %v1856 = vpop.f32.mrb[0].mxu0
        %v1857 = vpop.f32.mrb[0].mxu0
        %v1858 = vadd.f32 %v1770, %v1857
        %v1859 = vpop.f32.mrb[0].mxu0
        %1860 = vmatprep.mubr.bf16.mxu0 0
        %1861 = vmatmul.mubr.bf16.gmra.mrb[0].mxu0 %v1785
        %v1862 = vpop.f32.mrb[0].mxu0
        %v1863 = vadd.f32 %v1770, %v1862
        %v1864 = vpop.f32.mrb[0].mxu0
        %v1865 = vpop.f32.mrb[0].mxu0
        %v1866 = vadd.f32 %v1770, %v1865
        %v1867 = vpop.f32.mrb[0].mxu0
        %1868 = vmatprep.mubr.bf16.mxu0 0
        %1869 = vmatmul.mubr.bf16.gmra.mrb[0].mxu0 %v1788
        %v1870 = vpop.f32.mrb[0].mxu0
        %v1871 = vadd.f32 %v1770, %v1870
        %v1872 = vpop.f32.mrb[0].mxu0
        %v1873 = vpop.f32.mrb[0].mxu0
        %v1874 = vadd.f32 %v1770, %v1873
        %v1875 = vpop.f32.mrb[0].mxu0
        %1876 = vmatprep.mubr.bf16.mxu0 0
        %1877 = vmatmul.mubr.bf16.gmra.mrb[0].mxu0 %v1791
        %v1878 = vpop.f32.mrb[0].mxu0
        %v1879 = vadd.f32 %v1770, %v1878
        %v1880 = vpop.f32.mrb[0].mxu0
        %v1881 = vpop.f32.mrb[0].mxu0
        %v1882 = vadd.f32 %v1770, %v1881
        %v1883 = vpop.f32.mrb[0].mxu0
        %1884 = vmatprep.mubr.bf16.mxu0 0
        %1885 = vmatmul.mubr.bf16.gmra.mrb[0].mxu0 %v1794
        %v1886 = vpop.f32.mrb[0].mxu0
        %v1887 = vadd.f32 %v1770, %v1886
        %v1888 = vpop.f32.mrb[0].mxu0
        %v1889 = vpop.f32.mrb[0].mxu0
        %v1890 = vadd.f32 %v1770, %v1889
        %v1891 = vpop.f32.mrb[0].mxu0
        %1892 = vdwg.mxu0
        %v1893 = vmax.f32 %v1831, 0.0
        %v1894 = vmax.f32 %v1834, 0.0
        %v1895 = vmax.f32 %v1839, 0.0
        %v1896 = vmax.f32 %v1842, 0.0
        %v1897 = vmax.f32 %v1847, 0.0
        %v1898 = vmax.f32 %v1850, 0.0
        %v1899 = vmax.f32 %v1855, 0.0
        %v1900 = vmax.f32 %v1858, 0.0
        %v1901 = vmax.f32 %v1863, 0.0
        %v1902 = vmax.f32 %v1866, 0.0
        %v1903 = vmax.f32 %v1871, 0.0
        %v1904 = vmax.f32 %v1874, 0.0
        %v1905 = vmax.f32 %v1879, 0.0
        %v1906 = vmax.f32 %v1882, 0.0
        %v1907 = vmax.f32 %v1887, 0.0
        %v1908 = vmax.f32 %v1890, 0.0
        %v1909 = vpack.c.bf16 %v1894, %v1893
        %v1910 = vpack.c.bf16 %v1896, %v1895
        %v1911 = vpack.c.bf16 %v1898, %v1897
        %v1912 = vpack.c.bf16 %v1900, %v1899
        %v1913 = vpack.c.bf16 %v1902, %v1901
        %v1914 = vpack.c.bf16 %v1904, %v1903
        %v1915 = vpack.c.bf16 %v1906, %v1905
        %v1916 = vpack.c.bf16 %v1908, %v1907
        %v1917 = vld [vmem:[%s11] sm:$0xff]
        %v1918 = vld [vmem:[%s11 + $0x8] sm:$0xff]
        %v1919 = vld [vmem:[%s11 + $0x10] sm:$0xff]
        %v1920 = vld [vmem:[%s11 + $0x18] sm:$0xff]
        %v1921 = vpack.c.bf16 %v1918, %v1917
        %v1922 = vpack.c.bf16 %v1920, %v1919
        %v1923 = vld [vmem:[%s12] sm:$0x1]
        %v1925 = vlaneseq
        %v1926 = vshrl.u32 %v1925, 7
        %v1927 = vsub.s32 0, %v1926
        %v1928 = vrot.slane %v1923, %v1927
        %v1931 = vsel %vm1417, %v1909, 0
        %v1934 = vsel %vm1417, %v1910, 0
        %v1937 = vsel %vm1417, %v1911, 0
        %v1940 = vsel %vm1417, %v1912, 0
        %v1943 = vsel %vm1417, %v1913, 0
        %v1946 = vsel %vm1417, %v1914, 0
        %v1949 = vsel %vm1417, %v1915, 0
        %v1952 = vsel %vm1417, %v1916, 0
        %1954 = vmatprep.subr.bf16.mxu0 0
        %1955 = vmatpush1.bf16.msra.mxu0 %v1921
        %1956 = vmatprep.subr.bf16.mxu0 0
        %1957 = vmatpush1.bf16.msra.mxu0 %v1922
        %1958 = vmatprep.subr.bf16.mxu0 0
        %1959 = vmatpush1.bf16.msra.mxu0 0
        %1960 = vmatprep.subr.bf16.mxu0 0
        %1961 = vmatpush1.bf16.msra.mxu0 0
        %1962 = vmatprep.subr.bf16.mxu0 0
        %1963 = vmatpush1.bf16.msra.mxu0 0
        %1964 = vmatprep.subr.bf16.mxu0 0
        %1965 = vmatpush1.bf16.msra.mxu0 0
        %1966 = vmatprep.subr.bf16.mxu0 0
        %1967 = vmatpush1.bf16.msra.mxu0 0
        %1968 = vmatprep.subr.bf16.mxu0 0
        %1969 = vmatpush1.bf16.msra.mxu0 0
        %1970 = vmatprep.subr.bf16.mxu0 0
        %1971 = vmatpush1.bf16.msra.mxu0 0
        %1972 = vmatprep.subr.bf16.mxu0 0
        %1973 = vmatpush1.bf16.msra.mxu0 0
        %1974 = vmatprep.subr.bf16.mxu0 0
        %1975 = vmatpush1.bf16.msra.mxu0 0
        %1976 = vmatprep.subr.bf16.mxu0 0
        %1977 = vmatpush1.bf16.msra.mxu0 0
        %1978 = vmatprep.subr.bf16.mxu0 0
        %1979 = vmatpush1.bf16.msra.mxu0 0
        %1980 = vmatprep.subr.bf16.mxu0 0
        %1981 = vmatpush1.bf16.msra.mxu0 0
        %1982 = vmatprep.subr.bf16.mxu0 0
        %1983 = vmatpush1.bf16.msra.mxu0 0
        %1984 = vmatprep.subr.bf16.mxu0 0
        %1985 = vmatpush1.bf16.msra.mxu0 0
        %1986 = vmatprep.mubr.bf16.mxu0 0
        %1987 = vmatmul.mubr.bf16.gmra.mrb[0].mxu0 %v1931
        %v1988 = vpop.f32.mrb[0].mxu0
        %v1989 = vadd.f32 %v1928, %v1988
        %v1990 = vpop.f32.mrb[0].mxu0
        %v1991 = vpop.f32.mrb[0].mxu0
        %v1992 = vadd.f32 %v1928, %v1991
        %v1993 = vpop.f32.mrb[0].mxu0
        %1994 = vmatprep.mubr.bf16.mxu0 0
        %1995 = vmatmul.mubr.bf16.gmra.mrb[0].mxu0 %v1934
        %v1996 = vpop.f32.mrb[0].mxu0
        %v1997 = vadd.f32 %v1928, %v1996
        %v1998 = vpop.f32.mrb[0].mxu0
        %v1999 = vpop.f32.mrb[0].mxu0
        %v2000 = vadd.f32 %v1928, %v1999
        %v2001 = vpop.f32.mrb[0].mxu0
        %2002 = vmatprep.mubr.bf16.mxu0 0
        %2003 = vmatmul.mubr.bf16.gmra.mrb[0].mxu0 %v1937
        %v2004 = vpop.f32.mrb[0].mxu0
        %v2005 = vadd.f32 %v1928, %v2004
        %v2006 = vpop.f32.mrb[0].mxu0
        %v2007 = vpop.f32.mrb[0].mxu0
        %v2008 = vadd.f32 %v1928, %v2007
        %v2009 = vpop.f32.mrb[0].mxu0
        %2010 = vmatprep.mubr.bf16.mxu0 0
        %2011 = vmatmul.mubr.bf16.gmra.mrb[0].mxu0 %v1940
        %v2012 = vpop.f32.mrb[0].mxu0
        %v2013 = vadd.f32 %v1928, %v2012
        %v2014 = vpop.f32.mrb[0].mxu0
        %v2015 = vpop.f32.mrb[0].mxu0
        %v2016 = vadd.f32 %v1928, %v2015
        %v2017 = vpop.f32.mrb[0].mxu0
        %2018 = vmatprep.mubr.bf16.mxu0 0
        %2019 = vmatmul.mubr.bf16.gmra.mrb[0].mxu0 %v1943
        %v2020 = vpop.f32.mrb[0].mxu0
        %v2021 = vadd.f32 %v1928, %v2020
        %v2022 = vpop.f32.mrb[0].mxu0
        %v2023 = vpop.f32.mrb[0].mxu0
        %v2024 = vadd.f32 %v1928, %v2023
        %v2025 = vpop.f32.mrb[0].mxu0
        %2026 = vmatprep.mubr.bf16.mxu0 0
        %2027 = vmatmul.mubr.bf16.gmra.mrb[0].mxu0 %v1946
        %v2028 = vpop.f32.mrb[0].mxu0
        %v2029 = vadd.f32 %v1928, %v2028
        %v2030 = vpop.f32.mrb[0].mxu0
        %v2031 = vpop.f32.mrb[0].mxu0
        %v2032 = vadd.f32 %v1928, %v2031
        %v2033 = vpop.f32.mrb[0].mxu0
        %2034 = vmatprep.mubr.bf16.mxu0 0
        %2035 = vmatmul.mubr.bf16.gmra.mrb[0].mxu0 %v1949
        %v2036 = vpop.f32.mrb[0].mxu0
        %v2037 = vadd.f32 %v1928, %v2036
        %v2038 = vpop.f32.mrb[0].mxu0
        %v2039 = vpop.f32.mrb[0].mxu0
        %v2040 = vadd.f32 %v1928, %v2039
        %v2041 = vpop.f32.mrb[0].mxu0
        %2042 = vmatprep.mubr.bf16.mxu0 0
        %2043 = vmatmul.mubr.bf16.gmra.mrb[0].mxu0 %v1952
        %v2044 = vpop.f32.mrb[0].mxu0
        %v2045 = vadd.f32 %v1928, %v2044
        %v2046 = vpop.f32.mrb[0].mxu0
        %v2047 = vpop.f32.mrb[0].mxu0
        %v2048 = vadd.f32 %v1928, %v2047
        %v2049 = vpop.f32.mrb[0].mxu0
        %2050 = vdwg.mxu0
        %v2051 = vsel %vm1417, %v1989, -inf
        %v2052 = vrot.slane %v2051, 4
        %v2053 = vmax.f32 %v2051, %v2052
        %v2054 = vrot.slane %v2053, 2
        %v2055 = vmax.f32 %v2053, %v2054
        %v2056 = vrot.slane %v2055, 1
        %v2057 = vmax.f32 %v2055, %v2056
        %v2058 = vsel %vm1417, %v1992, -inf
        %v2059 = vrot.slane %v2058, 4
        %v2060 = vmax.f32 %v2058, %v2059
        %v2061 = vrot.slane %v2060, 2
        %v2062 = vmax.f32 %v2060, %v2061
        %v2063 = vrot.slane %v2062, 1
        %v2064 = vmax.f32 %v2062, %v2063
        %v2065 = vsel %vm1417, %v1997, -inf
        %v2066 = vrot.slane %v2065, 4
        %v2067 = vmax.f32 %v2065, %v2066
        %v2068 = vrot.slane %v2067, 2
        %v2069 = vmax.f32 %v2067, %v2068
        %v2070 = vrot.slane %v2069, 1
        %v2071 = vmax.f32 %v2069, %v2070
        %v2072 = vsel %vm1417, %v2000, -inf
        %v2073 = vrot.slane %v2072, 4
        %v2074 = vmax.f32 %v2072, %v2073
        %v2075 = vrot.slane %v2074, 2
        %v2076 = vmax.f32 %v2074, %v2075
        %v2077 = vrot.slane %v2076, 1
        %v2078 = vmax.f32 %v2076, %v2077
        %v2079 = vsel %vm1417, %v2005, -inf
        %v2080 = vrot.slane %v2079, 4
        %v2081 = vmax.f32 %v2079, %v2080
        %v2082 = vrot.slane %v2081, 2
        %v2083 = vmax.f32 %v2081, %v2082
        %v2084 = vrot.slane %v2083, 1
        %v2085 = vmax.f32 %v2083, %v2084
        %v2086 = vsel %vm1417, %v2008, -inf
        %v2087 = vrot.slane %v2086, 4
        %v2088 = vmax.f32 %v2086, %v2087
        %v2089 = vrot.slane %v2088, 2
        %v2090 = vmax.f32 %v2088, %v2089
        %v2091 = vrot.slane %v2090, 1
        %v2092 = vmax.f32 %v2090, %v2091
        %v2093 = vsel %vm1417, %v2013, -inf
        %v2094 = vrot.slane %v2093, 4
        %v2095 = vmax.f32 %v2093, %v2094
        %v2096 = vrot.slane %v2095, 2
        %v2097 = vmax.f32 %v2095, %v2096
        %v2098 = vrot.slane %v2097, 1
        %v2099 = vmax.f32 %v2097, %v2098
        %v2100 = vsel %vm1417, %v2016, -inf
        %v2101 = vrot.slane %v2100, 4
        %v2102 = vmax.f32 %v2100, %v2101
        %v2103 = vrot.slane %v2102, 2
        %v2104 = vmax.f32 %v2102, %v2103
        %v2105 = vrot.slane %v2104, 1
        %v2106 = vmax.f32 %v2104, %v2105
        %v2107 = vsel %vm1417, %v2021, -inf
        %v2108 = vrot.slane %v2107, 4
        %v2109 = vmax.f32 %v2107, %v2108
        %v2110 = vrot.slane %v2109, 2
        %v2111 = vmax.f32 %v2109, %v2110
        %v2112 = vrot.slane %v2111, 1
        %v2113 = vmax.f32 %v2111, %v2112
        %v2114 = vsel %vm1417, %v2024, -inf
        %v2115 = vrot.slane %v2114, 4
        %v2116 = vmax.f32 %v2114, %v2115
        %v2117 = vrot.slane %v2116, 2
        %v2118 = vmax.f32 %v2116, %v2117
        %v2119 = vrot.slane %v2118, 1
        %v2120 = vmax.f32 %v2118, %v2119
        %v2121 = vsel %vm1417, %v2029, -inf
        %v2122 = vrot.slane %v2121, 4
        %v2123 = vmax.f32 %v2121, %v2122
        %v2124 = vrot.slane %v2123, 2
        %v2125 = vmax.f32 %v2123, %v2124
        %v2126 = vrot.slane %v2125, 1
        %v2127 = vmax.f32 %v2125, %v2126
        %v2128 = vsel %vm1417, %v2032, -inf
        %v2129 = vrot.slane %v2128, 4
        %v2130 = vmax.f32 %v2128, %v2129
        %v2131 = vrot.slane %v2130, 2
        %v2132 = vmax.f32 %v2130, %v2131
        %v2133 = vrot.slane %v2132, 1
        %v2134 = vmax.f32 %v2132, %v2133
        %v2135 = vsel %vm1417, %v2037, -inf
        %v2136 = vrot.slane %v2135, 4
        %v2137 = vmax.f32 %v2135, %v2136
        %v2138 = vrot.slane %v2137, 2
        %v2139 = vmax.f32 %v2137, %v2138
        %v2140 = vrot.slane %v2139, 1
        %v2141 = vmax.f32 %v2139, %v2140
        %v2142 = vsel %vm1417, %v2040, -inf
        %v2143 = vrot.slane %v2142, 4
        %v2144 = vmax.f32 %v2142, %v2143
        %v2145 = vrot.slane %v2144, 2
        %v2146 = vmax.f32 %v2144, %v2145
        %v2147 = vrot.slane %v2146, 1
        %v2148 = vmax.f32 %v2146, %v2147
        %v2149 = vsel %vm1417, %v2045, -inf
        %v2150 = vrot.slane %v2149, 4
        %v2151 = vmax.f32 %v2149, %v2150
        %v2152 = vrot.slane %v2151, 2
        %v2153 = vmax.f32 %v2151, %v2152
        %v2154 = vrot.slane %v2153, 1
        %v2155 = vmax.f32 %v2153, %v2154
        %v2156 = vsel %vm1417, %v2048, -inf
        %v2157 = vrot.slane %v2156, 4
        %v2158 = vmax.f32 %v2156, %v2157
        %v2159 = vrot.slane %v2158, 2
        %v2160 = vmax.f32 %v2158, %v2159
        %v2161 = vrot.slane %v2160, 1
        %v2162 = vmax.f32 %v2160, %v2161
        %v2163 = vsub.f32 %v1989, %v2057
        %v2164 = vsub.f32 %v1992, %v2064
        %v2165 = vsub.f32 %v1997, %v2071
        %v2166 = vsub.f32 %v2000, %v2078
        %v2167 = vsub.f32 %v2005, %v2085
        %v2168 = vsub.f32 %v2008, %v2092
        %v2169 = vsub.f32 %v2013, %v2099
        %v2170 = vsub.f32 %v2016, %v2106
        %v2171 = vsub.f32 %v2021, %v2113
        %v2172 = vsub.f32 %v2024, %v2120
        %v2173 = vsub.f32 %v2029, %v2127
        %v2174 = vsub.f32 %v2032, %v2134
        %v2175 = vsub.f32 %v2037, %v2141
        %v2176 = vsub.f32 %v2040, %v2148
        %v2177 = vsub.f32 %v2045, %v2155
        %v2178 = vsub.f32 %v2048, %v2162
        %v2179 = vmul.f32 %v2163, 1.442695
        %v2180 = vpow.pop %v2179
        %v2181 = vmul.f32 %v2164, 1.442695
        %v2182 = vpow.pop %v2181
        %v2183 = vmul.f32 %v2165, 1.442695
        %v2184 = vpow.pop %v2183
        %v2185 = vmul.f32 %v2166, 1.442695
        %v2186 = vpow.pop %v2185
        %v2187 = vmul.f32 %v2167, 1.442695
        %v2188 = vpow.pop %v2187
        %v2189 = vmul.f32 %v2168, 1.442695
        %v2190 = vpow.pop %v2189
        %v2191 = vmul.f32 %v2169, 1.442695
        %v2192 = vpow.pop %v2191
        %v2193 = vmul.f32 %v2170, 1.442695
        %v2194 = vpow.pop %v2193
        %v2195 = vmul.f32 %v2171, 1.442695
        %v2196 = vpow.pop %v2195
        %v2197 = vmul.f32 %v2172, 1.442695
        %v2198 = vpow.pop %v2197
        %v2199 = vmul.f32 %v2173, 1.442695
        %v2200 = vpow.pop %v2199
        %v2201 = vmul.f32 %v2174, 1.442695
        %v2202 = vpow.pop %v2201
        %v2203 = vmul.f32 %v2175, 1.442695
        %v2204 = vpow.pop %v2203
        %v2205 = vmul.f32 %v2176, 1.442695
        %v2206 = vpow.pop %v2205
        %v2207 = vmul.f32 %v2177, 1.442695
        %v2208 = vpow.pop %v2207
        %v2209 = vmul.f32 %v2178, 1.442695
        %v2210 = vpow.pop %v2209
        %v2211 = vsel %vm1417, %v2180, 0.0
        %v2212 = vrot.slane %v2211, 4
        %v2213 = vadd.f32 %v2211, %v2212
        %v2214 = vrot.slane %v2213, 2
        %v2215 = vadd.f32 %v2213, %v2214
        %v2216 = vrot.slane %v2215, 1
        %v2217 = vadd.f32 %v2215, %v2216
        %v2218 = vsel %vm1417, %v2182, 0.0
        %v2219 = vrot.slane %v2218, 4
        %v2220 = vadd.f32 %v2218, %v2219
        %v2221 = vrot.slane %v2220, 2
        %v2222 = vadd.f32 %v2220, %v2221
        %v2223 = vrot.slane %v2222, 1
        %v2224 = vadd.f32 %v2222, %v2223
        %v2225 = vsel %vm1417, %v2184, 0.0
        %v2226 = vrot.slane %v2225, 4
        %v2227 = vadd.f32 %v2225, %v2226
        %v2228 = vrot.slane %v2227, 2
        %v2229 = vadd.f32 %v2227, %v2228
        %v2230 = vrot.slane %v2229, 1
        %v2231 = vadd.f32 %v2229, %v2230
        %v2232 = vsel %vm1417, %v2186, 0.0
        %v2233 = vrot.slane %v2232, 4
        %v2234 = vadd.f32 %v2232, %v2233
        %v2235 = vrot.slane %v2234, 2
        %v2236 = vadd.f32 %v2234, %v2235
        %v2237 = vrot.slane %v2236, 1
        %v2238 = vadd.f32 %v2236, %v2237
        %v2239 = vsel %vm1417, %v2188, 0.0
        %v2240 = vrot.slane %v2239, 4
        %v2241 = vadd.f32 %v2239, %v2240
        %v2242 = vrot.slane %v2241, 2
        %v2243 = vadd.f32 %v2241, %v2242
        %v2244 = vrot.slane %v2243, 1
        %v2245 = vadd.f32 %v2243, %v2244
        %v2246 = vsel %vm1417, %v2190, 0.0
        %v2247 = vrot.slane %v2246, 4
        %v2248 = vadd.f32 %v2246, %v2247
        %v2249 = vrot.slane %v2248, 2
        %v2250 = vadd.f32 %v2248, %v2249
        %v2251 = vrot.slane %v2250, 1
        %v2252 = vadd.f32 %v2250, %v2251
        %v2253 = vsel %vm1417, %v2192, 0.0
        %v2254 = vrot.slane %v2253, 4
        %v2255 = vadd.f32 %v2253, %v2254
        %v2256 = vrot.slane %v2255, 2
        %v2257 = vadd.f32 %v2255, %v2256
        %v2258 = vrot.slane %v2257, 1
        %v2259 = vadd.f32 %v2257, %v2258
        %v2260 = vsel %vm1417, %v2194, 0.0
        %v2261 = vrot.slane %v2260, 4
        %v2262 = vadd.f32 %v2260, %v2261
        %v2263 = vrot.slane %v2262, 2
        %v2264 = vadd.f32 %v2262, %v2263
        %v2265 = vrot.slane %v2264, 1
        %v2266 = vadd.f32 %v2264, %v2265
        %v2267 = vsel %vm1417, %v2196, 0.0
        %v2268 = vrot.slane %v2267, 4
        %v2269 = vadd.f32 %v2267, %v2268
        %v2270 = vrot.slane %v2269, 2
        %v2271 = vadd.f32 %v2269, %v2270
        %v2272 = vrot.slane %v2271, 1
        %v2273 = vadd.f32 %v2271, %v2272
        %v2274 = vsel %vm1417, %v2198, 0.0
        %v2275 = vrot.slane %v2274, 4
        %v2276 = vadd.f32 %v2274, %v2275
        %v2277 = vrot.slane %v2276, 2
        %v2278 = vadd.f32 %v2276, %v2277
        %v2279 = vrot.slane %v2278, 1
        %v2280 = vadd.f32 %v2278, %v2279
        %v2281 = vsel %vm1417, %v2200, 0.0
        %v2282 = vrot.slane %v2281, 4
        %v2283 = vadd.f32 %v2281, %v2282
        %v2284 = vrot.slane %v2283, 2
        %v2285 = vadd.f32 %v2283, %v2284
        %v2286 = vrot.slane %v2285, 1
        %v2287 = vadd.f32 %v2285, %v2286
        %v2288 = vsel %vm1417, %v2202, 0.0
        %v2289 = vrot.slane %v2288, 4
        %v2290 = vadd.f32 %v2288, %v2289
        %v2291 = vrot.slane %v2290, 2
        %v2292 = vadd.f32 %v2290, %v2291
        %v2293 = vrot.slane %v2292, 1
        %v2294 = vadd.f32 %v2292, %v2293
        %v2295 = vsel %vm1417, %v2204, 0.0
        %v2296 = vrot.slane %v2295, 4
        %v2297 = vadd.f32 %v2295, %v2296
        %v2298 = vrot.slane %v2297, 2
        %v2299 = vadd.f32 %v2297, %v2298
        %v2300 = vrot.slane %v2299, 1
        %v2301 = vadd.f32 %v2299, %v2300
        %v2302 = vsel %vm1417, %v2206, 0.0
        %v2303 = vrot.slane %v2302, 4
        %v2304 = vadd.f32 %v2302, %v2303
        %v2305 = vrot.slane %v2304, 2
        %v2306 = vadd.f32 %v2304, %v2305
        %v2307 = vrot.slane %v2306, 1
        %v2308 = vadd.f32 %v2306, %v2307
        %v2309 = vsel %vm1417, %v2208, 0.0
        %v2310 = vrot.slane %v2309, 4
        %v2311 = vadd.f32 %v2309, %v2310
        %v2312 = vrot.slane %v2311, 2
        %v2313 = vadd.f32 %v2311, %v2312
        %v2314 = vrot.slane %v2313, 1
        %v2315 = vadd.f32 %v2313, %v2314
        %v2316 = vsel %vm1417, %v2210, 0.0
        %v2317 = vrot.slane %v2316, 4
        %v2318 = vadd.f32 %v2316, %v2317
        %v2319 = vrot.slane %v2318, 2
        %v2320 = vadd.f32 %v2318, %v2319
        %v2321 = vrot.slane %v2320, 1
        %v2322 = vadd.f32 %v2320, %v2321
        %v2323 = vrcp.pop %v2217
        %v2324 = vrcp.pop %v2224
        %v2325 = vrcp.pop %v2231
        %v2326 = vrcp.pop %v2238
        %v2327 = vrcp.pop %v2245
        %v2328 = vrcp.pop %v2252
        %v2329 = vrcp.pop %v2259
        %v2330 = vrcp.pop %v2266
        %v2331 = vrcp.pop %v2273
        %v2332 = vrcp.pop %v2280
        %v2333 = vrcp.pop %v2287
        %v2334 = vrcp.pop %v2294
        %v2335 = vrcp.pop %v2301
        %v2336 = vrcp.pop %v2308
        %v2337 = vrcp.pop %v2315
        %v2338 = vrcp.pop %v2322
        %v2339 = vmul.f32 %v2180, %v2323
        %v2340 = vmul.f32 %v2182, %v2324
        %v2341 = vmul.f32 %v2184, %v2325
        %v2342 = vmul.f32 %v2186, %v2326
        %v2343 = vmul.f32 %v2188, %v2327
        %v2344 = vmul.f32 %v2190, %v2328
        %v2345 = vmul.f32 %v2192, %v2329
        %v2346 = vmul.f32 %v2194, %v2330
        %v2347 = vmul.f32 %v2196, %v2331
        %v2348 = vmul.f32 %v2198, %v2332
        %v2349 = vmul.f32 %v2200, %v2333
        %v2350 = vmul.f32 %v2202, %v2334
        %v2351 = vmul.f32 %v2204, %v2335
        %v2352 = vmul.f32 %v2206, %v2336
        %v2353 = vmul.f32 %v2208, %v2337
        %v2354 = vmul.f32 %v2210, %v2338
        %2371 = vrot.lane.b32.xlu0 %v1477, 32
        %v2372 = vpop.permute.xlu0 %2371
        %2373 = vrot.lane.b32.xlu0 %v1480, 32
        %v2374 = vpop.permute.xlu0 %2373
        %2375 = vrot.lane.b32.xlu0 %v1485, 32
        %v2376 = vpop.permute.xlu0 %2375
        %2377 = vrot.lane.b32.xlu0 %v1488, 32
        %v2378 = vpop.permute.xlu0 %2377
        %2379 = vrot.lane.b32.xlu0 %v1493, 32
        %v2380 = vpop.permute.xlu0 %2379
        %2381 = vrot.lane.b32.xlu0 %v1496, 32
        %v2382 = vpop.permute.xlu0 %2381
        %2383 = vrot.lane.b32.xlu0 %v1501, 32
        %v2384 = vpop.permute.xlu0 %2383
        %2385 = vrot.lane.b32.xlu0 %v1504, 32
        %v2386 = vpop.permute.xlu0 %2385
        %2387 = vrot.lane.b32.xlu0 %v1509, 32
        %v2388 = vpop.permute.xlu0 %2387
        %2389 = vrot.lane.b32.xlu0 %v1512, 32
        %v2390 = vpop.permute.xlu0 %2389
        %2391 = vrot.lane.b32.xlu0 %v1517, 32
        %v2392 = vpop.permute.xlu0 %2391
        %2393 = vrot.lane.b32.xlu0 %v1520, 32
        %v2394 = vpop.permute.xlu0 %2393
        %2395 = vrot.lane.b32.xlu0 %v1525, 32
        %v2396 = vpop.permute.xlu0 %2395
        %2397 = vrot.lane.b32.xlu0 %v1528, 32
        %v2398 = vpop.permute.xlu0 %2397
        %2399 = vrot.lane.b32.xlu0 %v1533, 32
        %v2400 = vpop.permute.xlu0 %2399
        %2401 = vrot.lane.b32.xlu0 %v1536, 32
        %v2402 = vpop.permute.xlu0 %2401
        %v2419 = vadd.f32 %v1035, %v2372
        %v2420 = vadd.f32 %v1038, %v2374
        %v2421 = vadd.f32 %v1043, %v2376
        %v2422 = vadd.f32 %v1046, %v2378
        %v2423 = vadd.f32 %v1051, %v2380
        %v2424 = vadd.f32 %v1054, %v2382
        %v2425 = vadd.f32 %v1059, %v2384
        %v2426 = vadd.f32 %v1062, %v2386
        %v2427 = vadd.f32 %v1067, %v2388
        %v2428 = vadd.f32 %v1070, %v2390
        %v2429 = vadd.f32 %v1075, %v2392
        %v2430 = vadd.f32 %v1078, %v2394
        %v2431 = vadd.f32 %v1083, %v2396
        %v2432 = vadd.f32 %v1086, %v2398
        %v2433 = vadd.f32 %v1091, %v2400
        %v2434 = vadd.f32 %v1094, %v2402
        %2451 = vrot.lane.b32.xlu0 %v2419, 96
        %v2452 = vpop.permute.xlu0 %2451
        %2453 = vrot.lane.b32.xlu0 %v2420, 96
        %v2454 = vpop.permute.xlu0 %2453
        %2455 = vrot.lane.b32.xlu0 %v2421, 96
        %v2456 = vpop.permute.xlu0 %2455
        %2457 = vrot.lane.b32.xlu0 %v2422, 96
        %v2458 = vpop.permute.xlu0 %2457
        %2459 = vrot.lane.b32.xlu0 %v2423, 96
        %v2460 = vpop.permute.xlu0 %2459
        %2461 = vrot.lane.b32.xlu0 %v2424, 96
        %v2462 = vpop.permute.xlu0 %2461
        %2463 = vrot.lane.b32.xlu0 %v2425, 96
        %v2464 = vpop.permute.xlu0 %2463
        %2465 = vrot.lane.b32.xlu0 %v2426, 96
        %v2466 = vpop.permute.xlu0 %2465
        %2467 = vrot.lane.b32.xlu0 %v2427, 96
        %v2468 = vpop.permute.xlu0 %2467
        %2469 = vrot.lane.b32.xlu0 %v2428, 96
        %v2470 = vpop.permute.xlu0 %2469
        %2471 = vrot.lane.b32.xlu0 %v2429, 96
        %v2472 = vpop.permute.xlu0 %2471
        %2473 = vrot.lane.b32.xlu0 %v2430, 96
        %v2474 = vpop.permute.xlu0 %2473
        %2475 = vrot.lane.b32.xlu0 %v2431, 96
        %v2476 = vpop.permute.xlu0 %2475
        %2477 = vrot.lane.b32.xlu0 %v2432, 96
        %v2478 = vpop.permute.xlu0 %2477
        %2479 = vrot.lane.b32.xlu0 %v2433, 96
        %v2480 = vpop.permute.xlu0 %2479
        %2481 = vrot.lane.b32.xlu0 %v2434, 96
        %v2482 = vpop.permute.xlu0 %2481
        %v2499 = vmul.f32 %v2339, %v2452
        %v2500 = vmul.f32 %v2340, %v2454
        %v2501 = vmul.f32 %v2341, %v2456
        %v2502 = vmul.f32 %v2342, %v2458
        %v2503 = vmul.f32 %v2343, %v2460
        %v2504 = vmul.f32 %v2344, %v2462
        %v2505 = vmul.f32 %v2345, %v2464
        %v2506 = vmul.f32 %v2346, %v2466
        %v2507 = vmul.f32 %v2347, %v2468
        %v2508 = vmul.f32 %v2348, %v2470
        %v2509 = vmul.f32 %v2349, %v2472
        %v2510 = vmul.f32 %v2350, %v2474
        %v2511 = vmul.f32 %v2351, %v2476
        %v2512 = vmul.f32 %v2352, %v2478
        %v2513 = vmul.f32 %v2353, %v2480
        %v2514 = vmul.f32 %v2354, %v2482
        %v2515 = vsel %vm1417, %v2499, 0.0
        %v2516 = vrot.slane %v2515, 4
        %v2517 = vadd.f32 %v2515, %v2516
        %v2518 = vrot.slane %v2517, 2
        %v2519 = vadd.f32 %v2517, %v2518
        %v2520 = vrot.slane %v2519, 1
        %v2521 = vadd.f32 %v2519, %v2520
        %v2522 = vsel %vm1417, %v2500, 0.0
        %v2523 = vrot.slane %v2522, 4
        %v2524 = vadd.f32 %v2522, %v2523
        %v2525 = vrot.slane %v2524, 2
        %v2526 = vadd.f32 %v2524, %v2525
        %v2527 = vrot.slane %v2526, 1
        %v2528 = vadd.f32 %v2526, %v2527
        %v2529 = vsel %vm1417, %v2501, 0.0
        %v2530 = vrot.slane %v2529, 4
        %v2531 = vadd.f32 %v2529, %v2530
        %v2532 = vrot.slane %v2531, 2
        %v2533 = vadd.f32 %v2531, %v2532
        %v2534 = vrot.slane %v2533, 1
        %v2535 = vadd.f32 %v2533, %v2534
        %v2536 = vsel %vm1417, %v2502, 0.0
        %v2537 = vrot.slane %v2536, 4
        %v2538 = vadd.f32 %v2536, %v2537
        %v2539 = vrot.slane %v2538, 2
        %v2540 = vadd.f32 %v2538, %v2539
        %v2541 = vrot.slane %v2540, 1
        %v2542 = vadd.f32 %v2540, %v2541
        %v2543 = vsel %vm1417, %v2503, 0.0
        %v2544 = vrot.slane %v2543, 4
        %v2545 = vadd.f32 %v2543, %v2544
        %v2546 = vrot.slane %v2545, 2
        %v2547 = vadd.f32 %v2545, %v2546
        %v2548 = vrot.slane %v2547, 1
        %v2549 = vadd.f32 %v2547, %v2548
        %v2550 = vsel %vm1417, %v2504, 0.0
        %v2551 = vrot.slane %v2550, 4
        %v2552 = vadd.f32 %v2550, %v2551
        %v2553 = vrot.slane %v2552, 2
        %v2554 = vadd.f32 %v2552, %v2553
        %v2555 = vrot.slane %v2554, 1
        %v2556 = vadd.f32 %v2554, %v2555
        %v2557 = vsel %vm1417, %v2505, 0.0
        %v2558 = vrot.slane %v2557, 4
        %v2559 = vadd.f32 %v2557, %v2558
        %v2560 = vrot.slane %v2559, 2
        %v2561 = vadd.f32 %v2559, %v2560
        %v2562 = vrot.slane %v2561, 1
        %v2563 = vadd.f32 %v2561, %v2562
        %v2564 = vsel %vm1417, %v2506, 0.0
        %v2565 = vrot.slane %v2564, 4
        %v2566 = vadd.f32 %v2564, %v2565
        %v2567 = vrot.slane %v2566, 2
        %v2568 = vadd.f32 %v2566, %v2567
        %v2569 = vrot.slane %v2568, 1
        %v2570 = vadd.f32 %v2568, %v2569
        %v2571 = vsel %vm1417, %v2507, 0.0
        %v2572 = vrot.slane %v2571, 4
        %v2573 = vadd.f32 %v2571, %v2572
        %v2574 = vrot.slane %v2573, 2
        %v2575 = vadd.f32 %v2573, %v2574
        %v2576 = vrot.slane %v2575, 1
        %v2577 = vadd.f32 %v2575, %v2576
        %v2578 = vsel %vm1417, %v2508, 0.0
        %v2579 = vrot.slane %v2578, 4
        %v2580 = vadd.f32 %v2578, %v2579
        %v2581 = vrot.slane %v2580, 2
        %v2582 = vadd.f32 %v2580, %v2581
        %v2583 = vrot.slane %v2582, 1
        %v2584 = vadd.f32 %v2582, %v2583
        %v2585 = vsel %vm1417, %v2509, 0.0
        %v2586 = vrot.slane %v2585, 4
        %v2587 = vadd.f32 %v2585, %v2586
        %v2588 = vrot.slane %v2587, 2
        %v2589 = vadd.f32 %v2587, %v2588
        %v2590 = vrot.slane %v2589, 1
        %v2591 = vadd.f32 %v2589, %v2590
        %v2592 = vsel %vm1417, %v2510, 0.0
        %v2593 = vrot.slane %v2592, 4
        %v2594 = vadd.f32 %v2592, %v2593
        %v2595 = vrot.slane %v2594, 2
        %v2596 = vadd.f32 %v2594, %v2595
        %v2597 = vrot.slane %v2596, 1
        %v2598 = vadd.f32 %v2596, %v2597
        %v2599 = vsel %vm1417, %v2511, 0.0
        %v2600 = vrot.slane %v2599, 4
        %v2601 = vadd.f32 %v2599, %v2600
        %v2602 = vrot.slane %v2601, 2
        %v2603 = vadd.f32 %v2601, %v2602
        %v2604 = vrot.slane %v2603, 1
        %v2605 = vadd.f32 %v2603, %v2604
        %v2606 = vsel %vm1417, %v2512, 0.0
        %v2607 = vrot.slane %v2606, 4
        %v2608 = vadd.f32 %v2606, %v2607
        %v2609 = vrot.slane %v2608, 2
        %v2610 = vadd.f32 %v2608, %v2609
        %v2611 = vrot.slane %v2610, 1
        %v2612 = vadd.f32 %v2610, %v2611
        %v2613 = vsel %vm1417, %v2513, 0.0
        %v2614 = vrot.slane %v2613, 4
        %v2615 = vadd.f32 %v2613, %v2614
        %v2616 = vrot.slane %v2615, 2
        %v2617 = vadd.f32 %v2615, %v2616
        %v2618 = vrot.slane %v2617, 1
        %v2619 = vadd.f32 %v2617, %v2618
        %v2620 = vsel %vm1417, %v2514, 0.0
        %v2621 = vrot.slane %v2620, 4
        %v2622 = vadd.f32 %v2620, %v2621
        %v2623 = vrot.slane %v2622, 2
        %v2624 = vadd.f32 %v2622, %v2623
        %v2625 = vrot.slane %v2624, 1
        %v2626 = vadd.f32 %v2624, %v2625
        %v2627 = vpack.c.bf16 %v2521, %v2521
        %v2628 = vpack.c.bf16 %v2528, %v2528
        %v2629 = vpack.c.bf16 %v2535, %v2535
        %v2630 = vpack.c.bf16 %v2542, %v2542
        %v2631 = vpack.c.bf16 %v2549, %v2549
        %v2632 = vpack.c.bf16 %v2556, %v2556
        %v2633 = vpack.c.bf16 %v2563, %v2563
        %v2634 = vpack.c.bf16 %v2570, %v2570
        %v2635 = vpack.c.bf16 %v2577, %v2577
        %v2636 = vpack.c.bf16 %v2584, %v2584
        %v2637 = vpack.c.bf16 %v2591, %v2591
        %v2638 = vpack.c.bf16 %v2598, %v2598
        %v2639 = vpack.c.bf16 %v2605, %v2605
        %v2640 = vpack.c.bf16 %v2612, %v2612
        %v2641 = vpack.c.bf16 %v2619, %v2619
        %v2642 = vpack.c.bf16 %v2626, %v2626
        %v2643 = vld [vmem:[%s13] sm:$0xff]
        %v2644 = vld [vmem:[%s13 + $0x8] sm:$0xff]
        %v2645 = vld [vmem:[%s13 + $0x10] sm:$0xff]
        %v2646 = vld [vmem:[%s13 + $0x18] sm:$0xff]
        %v2647 = vpack.c.bf16 %v2644, %v2643
        %v2648 = vpack.c.bf16 %v2646, %v2645
        %v2649 = vld [vmem:[%s14] sm:$0x1]
        %v2651 = vlaneseq
        %v2652 = vshrl.u32 %v2651, 7
        %v2653 = vsub.s32 0, %v2652
        %v2654 = vrot.slane %v2649, %v2653
        %v2672 = vunpack.c.l.b16 %v2627
        %v2673 = vunpack.c.l.b16 %v2628
        %v2674 = vunpack.c.l.b16 %v2629
        %v2675 = vunpack.c.l.b16 %v2630
        %v2676 = vunpack.c.l.b16 %v2631
        %v2677 = vunpack.c.l.b16 %v2632
        %v2678 = vunpack.c.l.b16 %v2633
        %v2679 = vunpack.c.l.b16 %v2634
        %v2680 = vunpack.c.l.b16 %v2635
        %v2681 = vunpack.c.l.b16 %v2636
        %v2682 = vunpack.c.l.b16 %v2637
        %v2683 = vunpack.c.l.b16 %v2638
        %v2684 = vunpack.c.l.b16 %v2639
        %v2685 = vunpack.c.l.b16 %v2640
        %v2686 = vunpack.c.l.b16 %v2641
        %v2687 = vunpack.c.l.b16 %v2642
        %vm2688 = vcmask 1041409
        %v2689 = vsel %vm2688, %v2673, %v2672
        %vm2690 = vcmask 1042434
        %v2691 = vsel %vm2690, %v2674, %v2689
        %vm2692 = vcmask 1043459
        %v2693 = vsel %vm2692, %v2675, %v2691
        %vm2694 = vcmask 1044484
        %v2695 = vsel %vm2694, %v2676, %v2693
        %vm2696 = vcmask 1045509
        %v2697 = vsel %vm2696, %v2677, %v2695
        %vm2698 = vcmask 1046534
        %v2699 = vsel %vm2698, %v2678, %v2697
        %vm2700 = vcmask 1047559
        %v2701 = vsel %vm2700, %v2679, %v2699
        %v2702 = vsel %vm2688, %v2681, %v2680
        %v2703 = vsel %vm2690, %v2682, %v2702
        %v2704 = vsel %vm2692, %v2683, %v2703
        %v2705 = vsel %vm2694, %v2684, %v2704
        %v2706 = vsel %vm2696, %v2685, %v2705
        %v2707 = vsel %vm2698, %v2686, %v2706
        %v2708 = vsel %vm2700, %v2687, %v2707
        %v2709 = vpack.c.b16 %v2708, %v2701
        %v2711 = vsel %vm1417, %v2709, 0
        %2713 = vmatprep.subr.bf16.mxu0 0
        %2714 = vmatpush1.bf16.msra.mxu0 %v2647
        %2715 = vmatprep.subr.bf16.mxu0 0
        %2716 = vmatpush1.bf16.msra.mxu0 %v2648
        %2717 = vmatprep.subr.bf16.mxu0 0
        %2718 = vmatpush1.bf16.msra.mxu0 0
        %2719 = vmatprep.subr.bf16.mxu0 0
        %2720 = vmatpush1.bf16.msra.mxu0 0
        %2721 = vmatprep.subr.bf16.mxu0 0
        %2722 = vmatpush1.bf16.msra.mxu0 0
        %2723 = vmatprep.subr.bf16.mxu0 0
        %2724 = vmatpush1.bf16.msra.mxu0 0
        %2725 = vmatprep.subr.bf16.mxu0 0
        %2726 = vmatpush1.bf16.msra.mxu0 0
        %2727 = vmatprep.subr.bf16.mxu0 0
        %2728 = vmatpush1.bf16.msra.mxu0 0
        %2729 = vmatprep.subr.bf16.mxu0 0
        %2730 = vmatpush1.bf16.msra.mxu0 0
        %2731 = vmatprep.subr.bf16.mxu0 0
        %2732 = vmatpush1.bf16.msra.mxu0 0
        %2733 = vmatprep.subr.bf16.mxu0 0
        %2734 = vmatpush1.bf16.msra.mxu0 0
        %2735 = vmatprep.subr.bf16.mxu0 0
        %2736 = vmatpush1.bf16.msra.mxu0 0
        %2737 = vmatprep.subr.bf16.mxu0 0
        %2738 = vmatpush1.bf16.msra.mxu0 0
        %2739 = vmatprep.subr.bf16.mxu0 0
        %2740 = vmatpush1.bf16.msra.mxu0 0
        %2741 = vmatprep.subr.bf16.mxu0 0
        %2742 = vmatpush1.bf16.msra.mxu0 0
        %2743 = vmatprep.subr.bf16.mxu0 0
        %2744 = vmatpush1.bf16.msra.mxu0 0
        %2745 = vmatprep.mubr.bf16.mxu0 0
        %2746 = vmatmul.mubr.bf16.gmra.mrb[0].mxu0 %v2711
        %v2747 = vpop.f32.mrb[0].mxu0
        %v2748 = vadd.f32 %v2654, %v2747
        %v2749 = vpop.f32.mrb[0].mxu0
        %v2750 = vpop.f32.mrb[0].mxu0
        %v2751 = vadd.f32 %v2654, %v2750
        %v2752 = vpop.f32.mrb[0].mxu0
        %2753 = vdwg.mxu0
        %v2754 = vadd.f32 %v2748, %v714
        %v2755 = vadd.f32 %v2751, %v715
        %2756 = vst.msk [vmem:[%s635] sm:$0xff] %vm975, %v2754
        %2757 = vst.msk [vmem:[%s635 + $0x8] sm:$0xff] %vm975, %v2755
        %v2758 = vpack.c.bf16 %v2339, %v2339
        %v2759 = vpack.c.bf16 %v2340, %v2340
        %v2760 = vpack.c.bf16 %v2341, %v2341
        %v2761 = vpack.c.bf16 %v2342, %v2342
        %v2762 = vpack.c.bf16 %v2343, %v2343
        %v2763 = vpack.c.bf16 %v2344, %v2344
        %v2764 = vpack.c.bf16 %v2345, %v2345
        %v2765 = vpack.c.bf16 %v2346, %v2346
        %v2766 = vpack.c.bf16 %v2347, %v2347
        %v2767 = vpack.c.bf16 %v2348, %v2348
        %v2768 = vpack.c.bf16 %v2349, %v2349
        %v2769 = vpack.c.bf16 %v2350, %v2350
        %v2770 = vpack.c.bf16 %v2351, %v2351
        %v2771 = vpack.c.bf16 %v2352, %v2352
        %v2772 = vpack.c.bf16 %v2353, %v2353
        %v2773 = vpack.c.bf16 %v2354, %v2354
        %v2790 = vunpack.c.l.b16 %v2758
        %v2791 = vunpack.c.l.b16 %v2759
        %v2792 = vunpack.c.l.b16 %v2760
        %v2793 = vunpack.c.l.b16 %v2761
        %v2794 = vunpack.c.l.b16 %v2762
        %v2795 = vunpack.c.l.b16 %v2763
        %v2796 = vunpack.c.l.b16 %v2764
        %v2797 = vunpack.c.l.b16 %v2765
        %v2798 = vunpack.c.l.b16 %v2766
        %v2799 = vunpack.c.l.b16 %v2767
        %v2800 = vunpack.c.l.b16 %v2768
        %v2801 = vunpack.c.l.b16 %v2769
        %v2802 = vunpack.c.l.b16 %v2770
        %v2803 = vunpack.c.l.b16 %v2771
        %v2804 = vunpack.c.l.b16 %v2772
        %v2805 = vunpack.c.l.b16 %v2773
        %v2806 = vpack.c.b16 %v2790, %v2790
        %v2807 = vpack.c.b16 %v2791, %v2791
        %v2808 = vpack.c.b16 %v2792, %v2792
        %v2809 = vpack.c.b16 %v2793, %v2793
        %v2810 = vpack.c.b16 %v2794, %v2794
        %v2811 = vpack.c.b16 %v2795, %v2795
        %v2812 = vpack.c.b16 %v2796, %v2796
        %v2813 = vpack.c.b16 %v2797, %v2797
        %v2814 = vpack.c.b16 %v2798, %v2798
        %v2815 = vpack.c.b16 %v2799, %v2799
        %v2816 = vpack.c.b16 %v2800, %v2800
        %v2817 = vpack.c.b16 %v2801, %v2801
        %v2818 = vpack.c.b16 %v2802, %v2802
        %v2819 = vpack.c.b16 %v2803, %v2803
        %v2820 = vpack.c.b16 %v2804, %v2804
        %v2821 = vpack.c.b16 %v2805, %v2805
        %v2822 = vunpack.c.l.b16 %v2806
        %v2823 = vunpack.c.l.b16 %v2807
        %v2824 = vunpack.c.l.b16 %v2808
        %v2825 = vunpack.c.l.b16 %v2809
        %v2826 = vunpack.c.l.b16 %v2810
        %v2827 = vunpack.c.l.b16 %v2811
        %v2828 = vunpack.c.l.b16 %v2812
        %v2829 = vunpack.c.l.b16 %v2813
        %v2830 = vunpack.c.l.b16 %v2814
        %v2831 = vunpack.c.l.b16 %v2815
        %v2832 = vunpack.c.l.b16 %v2816
        %v2833 = vunpack.c.l.b16 %v2817
        %v2834 = vunpack.c.l.b16 %v2818
        %v2835 = vunpack.c.l.b16 %v2819
        %v2836 = vunpack.c.l.b16 %v2820
        %v2837 = vunpack.c.l.b16 %v2821
        %v2838 = vrot.slane %v2823, 7
        %v2839 = vsel %vm2688, %v2838, %v2822
        %v2840 = vrot.slane %v2824, 6
        %v2841 = vsel %vm2690, %v2840, %v2839
        %v2842 = vrot.slane %v2825, 5
        %v2843 = vsel %vm2692, %v2842, %v2841
        %v2844 = vrot.slane %v2826, 4
        %v2845 = vsel %vm2694, %v2844, %v2843
        %v2846 = vrot.slane %v2827, 3
        %v2847 = vsel %vm2696, %v2846, %v2845
        %v2848 = vrot.slane %v2828, 2
        %v2849 = vsel %vm2698, %v2848, %v2847
        %v2850 = vrot.slane %v2829, 1
        %v2851 = vsel %vm2700, %v2850, %v2849
        %v2852 = vrot.slane %v2831, 7
        %v2853 = vsel %vm2688, %v2852, %v2830
        %v2854 = vrot.slane %v2832, 6
        %v2855 = vsel %vm2690, %v2854, %v2853
        %v2856 = vrot.slane %v2833, 5
        %v2857 = vsel %vm2692, %v2856, %v2855
        %v2858 = vrot.slane %v2834, 4
        %v2859 = vsel %vm2694, %v2858, %v2857
        %v2860 = vrot.slane %v2835, 3
        %v2861 = vsel %vm2696, %v2860, %v2859
        %v2862 = vrot.slane %v2836, 2
        %v2863 = vsel %vm2698, %v2862, %v2861
        %v2864 = vrot.slane %v2837, 1
        %v2865 = vsel %vm2700, %v2864, %v2863
        %v2866 = vpack.c.b16 %v2851, %v2851
        %v2867 = vpack.c.b16 %v2865, %v2865
        %vm2870 = vcmask 257024
        %2871 = vst.msk [vmem:[%s703] sm:$0xf] %vm2870, %v2866
        %2872 = vst.msk [vmem:[%s703 + $0x8] sm:$0xf] %vm2870, %v2867
        %v2873 = vrot.slane %v2822, 1
        %v2874 = vsel %vm2688, %v2823, %v2873
        %v2875 = vrot.slane %v2824, 7
        %v2876 = vsel %vm2690, %v2875, %v2874
        %v2877 = vrot.slane %v2825, 6
        %v2878 = vsel %vm2692, %v2877, %v2876
        %v2879 = vrot.slane %v2826, 5
        %v2880 = vsel %vm2694, %v2879, %v2878
        %v2881 = vrot.slane %v2827, 4
        %v2882 = vsel %vm2696, %v2881, %v2880
        %v2883 = vrot.slane %v2828, 3
        %v2884 = vsel %vm2698, %v2883, %v2882
        %v2885 = vrot.slane %v2829, 2
        %v2886 = vsel %vm2700, %v2885, %v2884
        %v2887 = vrot.slane %v2830, 1
        %v2888 = vsel %vm2688, %v2831, %v2887
        %v2889 = vrot.slane %v2832, 7
        %v2890 = vsel %vm2690, %v2889, %v2888
        %v2891 = vrot.slane %v2833, 6
        %v2892 = vsel %vm2692, %v2891, %v2890
        %v2893 = vrot.slane %v2834, 5
        %v2894 = vsel %vm2694, %v2893, %v2892
        %v2895 = vrot.slane %v2835, 4
        %v2896 = vsel %vm2696, %v2895, %v2894
        %v2897 = vrot.slane %v2836, 3
        %v2898 = vsel %vm2698, %v2897, %v2896
        %v2899 = vrot.slane %v2837, 2
        %v2900 = vsel %vm2700, %v2899, %v2898
        %v2901 = vpack.c.b16 %v2886, %v2886
        %v2902 = vpack.c.b16 %v2900, %v2900
        %2903 = vrot.lane.b32.xlu0 %v2901, 32
        %v2904 = vpop.permute.xlu0 %2903
        %2905 = vrot.lane.b32.xlu0 %v2902, 32
        %v2906 = vpop.permute.xlu0 %2905
        %vm2909 = vcmask 519424
        %2910 = vst.msk [vmem:[%s703] sm:$0xf] %vm2909, %v2904
        %2911 = vst.msk [vmem:[%s703 + $0x8] sm:$0xf] %vm2909, %v2906
        %v2912 = vrot.slane %v2822, 2
        %v2913 = vrot.slane %v2823, 1
        %v2914 = vsel %vm2688, %v2913, %v2912
        %v2915 = vsel %vm2690, %v2824, %v2914
        %v2916 = vrot.slane %v2825, 7
        %v2917 = vsel %vm2692, %v2916, %v2915
        %v2918 = vrot.slane %v2826, 6
        %v2919 = vsel %vm2694, %v2918, %v2917
        %v2920 = vrot.slane %v2827, 5
        %v2921 = vsel %vm2696, %v2920, %v2919
        %v2922 = vrot.slane %v2828, 4
        %v2923 = vsel %vm2698, %v2922, %v2921
        %v2924 = vrot.slane %v2829, 3
        %v2925 = vsel %vm2700, %v2924, %v2923
        %v2926 = vrot.slane %v2830, 2
        %v2927 = vrot.slane %v2831, 1
        %v2928 = vsel %vm2688, %v2927, %v2926
        %v2929 = vsel %vm2690, %v2832, %v2928
        %v2930 = vrot.slane %v2833, 7
        %v2931 = vsel %vm2692, %v2930, %v2929
        %v2932 = vrot.slane %v2834, 6
        %v2933 = vsel %vm2694, %v2932, %v2931
        %v2934 = vrot.slane %v2835, 5
        %v2935 = vsel %vm2696, %v2934, %v2933
        %v2936 = vrot.slane %v2836, 4
        %v2937 = vsel %vm2698, %v2936, %v2935
        %v2938 = vrot.slane %v2837, 3
        %v2939 = vsel %vm2700, %v2938, %v2937
        %v2940 = vpack.c.b16 %v2925, %v2925
        %v2941 = vpack.c.b16 %v2939, %v2939
        %2942 = vrot.lane.b32.xlu0 %v2940, 64
        %v2943 = vpop.permute.xlu0 %2942
        %2944 = vrot.lane.b32.xlu0 %v2941, 64
        %v2945 = vpop.permute.xlu0 %2944
        %vm2948 = vcmask 781824
        %2949 = vst.msk [vmem:[%s703] sm:$0xf] %vm2948, %v2943
        %2950 = vst.msk [vmem:[%s703 + $0x8] sm:$0xf] %vm2948, %v2945
        %v2951 = vrot.slane %v2822, 3
        %v2952 = vrot.slane %v2823, 2
        %v2953 = vsel %vm2688, %v2952, %v2951
        %v2954 = vrot.slane %v2824, 1
        %v2955 = vsel %vm2690, %v2954, %v2953
        %v2956 = vsel %vm2692, %v2825, %v2955
        %v2957 = vrot.slane %v2826, 7
        %v2958 = vsel %vm2694, %v2957, %v2956
        %v2959 = vrot.slane %v2827, 6
        %v2960 = vsel %vm2696, %v2959, %v2958
        %v2961 = vrot.slane %v2828, 5
        %v2962 = vsel %vm2698, %v2961, %v2960
        %v2963 = vrot.slane %v2829, 4
        %v2964 = vsel %vm2700, %v2963, %v2962
        %v2965 = vrot.slane %v2830, 3
        %v2966 = vrot.slane %v2831, 2
        %v2967 = vsel %vm2688, %v2966, %v2965
        %v2968 = vrot.slane %v2832, 1
        %v2969 = vsel %vm2690, %v2968, %v2967
        %v2970 = vsel %vm2692, %v2833, %v2969
        %v2971 = vrot.slane %v2834, 7
        %v2972 = vsel %vm2694, %v2971, %v2970
        %v2973 = vrot.slane %v2835, 6
        %v2974 = vsel %vm2696, %v2973, %v2972
        %v2975 = vrot.slane %v2836, 5
        %v2976 = vsel %vm2698, %v2975, %v2974
        %v2977 = vrot.slane %v2837, 4
        %v2978 = vsel %vm2700, %v2977, %v2976
        %v2979 = vpack.c.b16 %v2964, %v2964
        %v2980 = vpack.c.b16 %v2978, %v2978
        %2981 = vrot.lane.b32.xlu0 %v2979, 96
        %v2982 = vpop.permute.xlu0 %2981
        %2983 = vrot.lane.b32.xlu0 %v2980, 96
        %v2984 = vpop.permute.xlu0 %2983
        %vm2987 = vcmask 1044224
        %2988 = vst.msk [vmem:[%s703] sm:$0xf] %vm2987, %v2982
        %2989 = vst.msk [vmem:[%s703 + $0x8] sm:$0xf] %vm2987, %v2984
        %v2990 = vrot.slane %v2822, 4
        %v2991 = vrot.slane %v2823, 3
        %v2992 = vsel %vm2688, %v2991, %v2990
        %v2993 = vrot.slane %v2824, 2
        %v2994 = vsel %vm2690, %v2993, %v2992
        %v2995 = vrot.slane %v2825, 1
        %v2996 = vsel %vm2692, %v2995, %v2994
        %v2997 = vsel %vm2694, %v2826, %v2996
        %v2998 = vrot.slane %v2827, 7
        %v2999 = vsel %vm2696, %v2998, %v2997
        %v3000 = vrot.slane %v2828, 6
        %v3001 = vsel %vm2698, %v3000, %v2999
        %v3002 = vrot.slane %v2829, 5
        %v3003 = vsel %vm2700, %v3002, %v3001
        %v3004 = vrot.slane %v2830, 4
        %v3005 = vrot.slane %v2831, 3
        %v3006 = vsel %vm2688, %v3005, %v3004
        %v3007 = vrot.slane %v2832, 2
        %v3008 = vsel %vm2690, %v3007, %v3006
        %v3009 = vrot.slane %v2833, 1
        %v3010 = vsel %vm2692, %v3009, %v3008
        %v3011 = vsel %vm2694, %v2834, %v3010
        %v3012 = vrot.slane %v2835, 7
        %v3013 = vsel %vm2696, %v3012, %v3011
        %v3014 = vrot.slane %v2836, 6
        %v3015 = vsel %vm2698, %v3014, %v3013
        %v3016 = vrot.slane %v2837, 5
        %v3017 = vsel %vm2700, %v3016, %v3015
        %v3018 = vpack.c.b16 %v3003, %v3003
        %v3019 = vpack.c.b16 %v3017, %v3017
        %3022 = vst.msk [vmem:[%s703 + $0x4] sm:$0xf] %vm2870, %v3018
        %3023 = vst.msk [vmem:[%s703 + $0xc] sm:$0xf] %vm2870, %v3019
        %v3024 = vrot.slane %v2822, 5
        %v3025 = vrot.slane %v2823, 4
        %v3026 = vsel %vm2688, %v3025, %v3024
        %v3027 = vrot.slane %v2824, 3
        %v3028 = vsel %vm2690, %v3027, %v3026
        %v3029 = vrot.slane %v2825, 2
        %v3030 = vsel %vm2692, %v3029, %v3028
        %v3031 = vrot.slane %v2826, 1
        %v3032 = vsel %vm2694, %v3031, %v3030
        %v3033 = vsel %vm2696, %v2827, %v3032
        %v3034 = vrot.slane %v2828, 7
        %v3035 = vsel %vm2698, %v3034, %v3033
        %v3036 = vrot.slane %v2829, 6
        %v3037 = vsel %vm2700, %v3036, %v3035
        %v3038 = vrot.slane %v2830, 5
        %v3039 = vrot.slane %v2831, 4
        %v3040 = vsel %vm2688, %v3039, %v3038
        %v3041 = vrot.slane %v2832, 3
        %v3042 = vsel %vm2690, %v3041, %v3040
        %v3043 = vrot.slane %v2833, 2
        %v3044 = vsel %vm2692, %v3043, %v3042
        %v3045 = vrot.slane %v2834, 1
        %v3046 = vsel %vm2694, %v3045, %v3044
        %v3047 = vsel %vm2696, %v2835, %v3046
        %v3048 = vrot.slane %v2836, 7
        %v3049 = vsel %vm2698, %v3048, %v3047
        %v3050 = vrot.slane %v2837, 6
        %v3051 = vsel %vm2700, %v3050, %v3049
        %v3052 = vpack.c.b16 %v3037, %v3037
        %v3053 = vpack.c.b16 %v3051, %v3051
        %3054 = vrot.lane.b32.xlu0 %v3052, 32
        %v3055 = vpop.permute.xlu0 %3054
        %3056 = vrot.lane.b32.xlu0 %v3053, 32
        %v3057 = vpop.permute.xlu0 %3056
        %3060 = vst.msk [vmem:[%s703 + $0x4] sm:$0xf] %vm2909, %v3055
        %3061 = vst.msk [vmem:[%s703 + $0xc] sm:$0xf] %vm2909, %v3057
        %v3062 = vrot.slane %v2822, 6
        %v3063 = vrot.slane %v2823, 5
        %v3064 = vsel %vm2688, %v3063, %v3062
        %v3065 = vrot.slane %v2824, 4
        %v3066 = vsel %vm2690, %v3065, %v3064
        %v3067 = vrot.slane %v2825, 3
        %v3068 = vsel %vm2692, %v3067, %v3066
        %v3069 = vrot.slane %v2826, 2
        %v3070 = vsel %vm2694, %v3069, %v3068
        %v3071 = vrot.slane %v2827, 1
        %v3072 = vsel %vm2696, %v3071, %v3070
        %v3073 = vsel %vm2698, %v2828, %v3072
        %v3074 = vrot.slane %v2829, 7
        %v3075 = vsel %vm2700, %v3074, %v3073
        %v3076 = vrot.slane %v2830, 6
        %v3077 = vrot.slane %v2831, 5
        %v3078 = vsel %vm2688, %v3077, %v3076
        %v3079 = vrot.slane %v2832, 4
        %v3080 = vsel %vm2690, %v3079, %v3078
        %v3081 = vrot.slane %v2833, 3
        %v3082 = vsel %vm2692, %v3081, %v3080
        %v3083 = vrot.slane %v2834, 2
        %v3084 = vsel %vm2694, %v3083, %v3082
        %v3085 = vrot.slane %v2835, 1
        %v3086 = vsel %vm2696, %v3085, %v3084
        %v3087 = vsel %vm2698, %v2836, %v3086
        %v3088 = vrot.slane %v2837, 7
        %v3089 = vsel %vm2700, %v3088, %v3087
        %v3090 = vpack.c.b16 %v3075, %v3075
        %v3091 = vpack.c.b16 %v3089, %v3089
        %3092 = vrot.lane.b32.xlu0 %v3090, 64
        %v3093 = vpop.permute.xlu0 %3092
        %3094 = vrot.lane.b32.xlu0 %v3091, 64
        %v3095 = vpop.permute.xlu0 %3094
        %3098 = vst.msk [vmem:[%s703 + $0x4] sm:$0xf] %vm2948, %v3093
        %3099 = vst.msk [vmem:[%s703 + $0xc] sm:$0xf] %vm2948, %v3095
        %v3100 = vrot.slane %v2822, 7
        %v3101 = vrot.slane %v2823, 6
        %v3102 = vsel %vm2688, %v3101, %v3100
        %v3103 = vrot.slane %v2824, 5
        %v3104 = vsel %vm2690, %v3103, %v3102
        %v3105 = vrot.slane %v2825, 4
        %v3106 = vsel %vm2692, %v3105, %v3104
        %v3107 = vrot.slane %v2826, 3
        %v3108 = vsel %vm2694, %v3107, %v3106
        %v3109 = vrot.slane %v2827, 2
        %v3110 = vsel %vm2696, %v3109, %v3108
        %v3111 = vrot.slane %v2828, 1
        %v3112 = vsel %vm2698, %v3111, %v3110
        %v3113 = vsel %vm2700, %v2829, %v3112
        %v3114 = vrot.slane %v2830, 7
        %v3115 = vrot.slane %v2831, 6
        %v3116 = vsel %vm2688, %v3115, %v3114
        %v3117 = vrot.slane %v2832, 5
        %v3118 = vsel %vm2690, %v3117, %v3116
        %v3119 = vrot.slane %v2833, 4
        %v3120 = vsel %vm2692, %v3119, %v3118
        %v3121 = vrot.slane %v2834, 3
        %v3122 = vsel %vm2694, %v3121, %v3120
        %v3123 = vrot.slane %v2835, 2
        %v3124 = vsel %vm2696, %v3123, %v3122
        %v3125 = vrot.slane %v2836, 1
        %v3126 = vsel %vm2698, %v3125, %v3124
        %v3127 = vsel %vm2700, %v2837, %v3126
        %v3128 = vpack.c.b16 %v3113, %v3113
        %v3129 = vpack.c.b16 %v3127, %v3127
        %3130 = vrot.lane.b32.xlu0 %v3128, 96
        %v3131 = vpop.permute.xlu0 %3130
        %3132 = vrot.lane.b32.xlu0 %v3129, 96
        %v3133 = vpop.permute.xlu0 %3132
        %3136 = vst.msk [vmem:[%s703 + $0x4] sm:$0xf] %vm2987, %v3131
        %3137 = vst.msk [vmem:[%s703 + $0xc] sm:$0xf] %vm2987, %v3133
        %s3138 = sand.u32 %s401, 1
        %s3139 = scalar_lea.sflag [#allocation3], %s3138
        %s3140 = sand.u32 %s401, 1
        %s3141 = smul.addr %s3140, 16
        %s3142 = scalar_lea.vmem [#allocation2], %s3141
        %s3143 = smul.u32 2, %s36
        %p3144 = scmp.lt.s32.totalorder %s35, 1
        %s3145 = scalar_select %p3144, %s35, 1
        %p3146 = scmp.lt.s32.totalorder %s3143, 1
        %s3147 = scalar_select %p3146, %s3143, 1
        %s3148 = smul.addr %s3147, 2
        %s3149 = smul.addr %s3145, 4
        %s3150 = sadd.s32 %s3148, %s3149
        %s3151 = smul.addr %s3150, 4
        %s3152 = scalar_lea.vmem %s16, %s3151
        // Predicated region
        $region81: #{point_transformer_block.5} parent=79 // pred_check
          %p3153 = pneg %p411
        $region82: #{point_transformer_block.5} parent=79 // pred_check_branch
          %3155 = sbr.rel (%p3153) target = $region84
        $region83: #{point_transformer_block.5} parent=79 // pred_region
          %s3156 = smul.u32 2, %s36
          %s3158 = ssub.s32 256, 256
          %3159 = vsyncadd %s3139, %s3158
          %s3160 = smul.addr %s35, 2
          %s3161 = sadd.s32 %s3156, %s3160
          %s3162 = smul.addr %s3161, 128
          %s3163 = scalar_lea.hbm %s15, %s3162
          %s3164 = sshll.u32 %s3142, 4
          %s3165 = int_to_ptr.vmem [resolvable:$true] %s3164
          %3170 = dma.vmem_to_hbm [thread:$0]  %s3165, 256, %s3163, %s3139, 128, 128, 8
        $region84: #{point_transformer_block.5} parent=79 // pred_fallthru
          _
        // Predicated region
        $region85: #{point_transformer_block.5} parent=79 // pred_check
          %p3171 = pneg %p439
        $region86: #{point_transformer_block.5} parent=79 // pred_check_branch
          %3173 = sbr.rel (%p3171) target = $region88
        $region87: #{point_transformer_block.5} parent=79 // pred_region
          %s3174 = smul.u32 2, %s36
        $region88: #{point_transformer_block.5} parent=79 // pred_fallthru
          _
      $region80: #{point_transformer_block.5} parent=5 // pred_fallthru
        _
      %p3175 = scmp.le.s32.totalorder 2, %s26
      // Predicated region
      $region89: #{point_transformer_block.5} parent=5 // pred_check
        %p3176 = pneg %p3175
      $region90: #{point_transformer_block.5} parent=5 // pred_check_branch
        %3178 = sbr.rel (%p3176) target = $region92
      $region91: #{point_transformer_block.5} parent=5 // pred_region
        %s3179 = ssub.s32 %s26, 2
        // Predicated region
        $region93: #{point_transformer_block.5} parent=91 // pred_check
          %p3180 = pneg %p417
        $region94: #{point_transformer_block.5} parent=91 // pred_check_branch
          %3182 = sbr.rel (%p3180) target = $region96
        $region95: #{point_transformer_block.5} parent=91 // pred_region
          %s3183 = sand.u32 %s402, 1
          %s3184 = scalar_lea.sflag [#allocation3], %s3183
          %s3185 = sand.u32 %s402, 1
          %s3186 = smul.addr %s3185, 16
          %s3187 = scalar_lea.vmem [#allocation2], %s3186
          %3188 = dma.done %s3184, 256
        $region96: #{point_transformer_block.5} parent=91 // pred_fallthru
          _
        // Predicated region
        $region97: #{point_transformer_block.5} parent=91 // pred_check
          %p3189 = pneg %p445
        $region98: #{point_transformer_block.5} parent=91 // pred_check_branch
          %3191 = sbr.rel (%p3189) target = $region100
        $region99: #{point_transformer_block.5} parent=91 // pred_region
          %s3192 = smul.u32 2, %s38
          %p3193 = scmp.lt.s32.totalorder %s37, 1
          %s3194 = scalar_select %p3193, %s37, 1
          %p3195 = scmp.lt.s32.totalorder %s3192, 1
          %s3196 = scalar_select %p3195, %s3192, 1
          %s3197 = smul.addr %s3196, 2
          %s3198 = smul.addr %s3194, 4
          %s3199 = sadd.s32 %s3197, %s3198
          %s3200 = smul.addr %s3199, 4
          %s3201 = scalar_lea.vmem %s16, %s3200
        $region100: #{point_transformer_block.5} parent=91 // pred_fallthru
          _
      $region92: #{point_transformer_block.5} parent=5 // pred_fallthru
        _
    $region6: #{point_transformer_block.5} parent=1 // loop_footer
      %s30 = sadd.s32 1, %s26
    $region7: #{point_transformer_block.5} parent=1 // loop_footer_branch
      %25 = sbr.rel target = $region3
    $region8: #{point_transformer_block.5} parent=1 // loop_exit
      _
    %3202 = vsyncpa [#allocation3], 1
    %s3203 = scalar_lea.sflag [#allocation3], 1
    %3204 = vsyncpa %s3203, 1

</llo_original>
